<compile_context>
chip_gen: v6e
topology: v6e:2x2x1
jax: 0.10.0
libtpu: 0.0.40
codegen_flags: <defaults>
</compile_context>

<pallas_src>
import jax
import jax.numpy as jnp
from jax.experimental import pallas as pl
from jax.experimental.pallas import tpu as pltpu

LANE = 128
WPAD = 5   # pooled-column zero halo per side (keeps conv slab widths 8-aligned)


def _round_up(x, m):
    return ((x + m - 1) // m) * m


def _pick_band_rows(Ho, Wo):
    """Pooled rows per band: ~2K output pixels per band, but always >= 2 bands."""
    if Ho <= 1:
        return 1
    th = max(1, 2048 // max(Wo, 1))
    return max(1, min(th, Ho // 2))


# ----------------------------------------------------------------------------
# Fused forward: maxpool2x2 -> conv3x3+BN+ReLU -> conv3x3+BN -> +1x1 skip -> ReLU
# ----------------------------------------------------------------------------
def down_res_forward(x_nchw, params):
    """DownRes forward: (N, Cin, H, W) -> (N, Cout, H//2, W//2)."""
    N, Cin, H, W = x_nchw.shape
    Cmid = params["w1"].shape[3]
    Cout = params["w2"].shape[3]
    Ho, Wo = H // 2, W // 2               # MaxPool2d(2) floors odd spatial dims
    H2, W2 = 2 * Ho, 2 * Wo

    TH = _pick_band_rows(Ho, Wo)          # pooled rows per band
    num_bands = pl.cdiv(Ho, TH)
    Ho_p = num_bands * TH
    Wsrc = Wo + 2 * WPAD                  # pooled cols incl. zero halo
    CW1 = Wo + 8                          # conv1 output cols (1-px halo included)
    Cin_p = _round_up(Cin, LANE // 2)     # 2*Cin_p is lane dense (128 multiple)
    Cmid_p = _round_up(Cmid, LANE)
    Cout_p = _round_up(Cout, LANE)

    # ---- input prep (one fused XLA copy): NCHW->NHWC, bf16, crop to even,
    # zero-pad rows/cols (max-pool of zeros stays zero -> conv "same" padding),
    # pad channels, fold even/odd rows into sublane halves and even/odd cols
    # into lanes (the reshape below is metadata-only, row-major).
    x = jnp.transpose(x_nchw, (0, 2, 3, 1)).astype(jnp.bfloat16)[:, :H2, :W2, :]
    x = jnp.pad(x, ((0, 0),
                    (4, 2 * (Ho_p - Ho) + 4),
                    (2 * WPAD, 2 * WPAD),
                    (0, Cin_p - Cin)))
    x = x.reshape(N, Ho_p + 4, 2 * Wsrc, 2 * Cin_p)
    # Overlapping per-band windows (2-pooled-row halo per side), duplicated once
    # in HBM so the kernel input block is a plain pipelined BlockSpec tile.
    xb = jnp.stack(
        [jax.lax.dynamic_slice_in_dim(x, b * TH, TH + 4, axis=1)
         for b in range(num_bands)], axis=1)
    xb = xb.reshape(N * num_bands, TH + 4, 2 * Wsrc, 2 * Cin_p)

    # Per-band halo mask for conv1's output: conv2's "same" padding must be
    # zeros, not conv1 evaluated outside the image.  Shape (num_bands, TH+2, CW1, 1).
    rg = jnp.arange(num_bands)[:, None] * TH - 1 + jnp.arange(TH + 2)[None, :]
    cg = jnp.arange(CW1)[None, None, :] - (WPAD - 1)
    halo = (((rg >= 0) & (rg < Ho))[:, :, None]
            & ((cg >= 0) & (cg < Wo))).astype(jnp.float32)[..., None]

    # ---- weights: HWIO, channel-padded, flattened (dx, ci) per dy, bf16 ------
    def prep_w3(w, ci_p, co_p):
        ci, co = w.shape[2], w.shape[3]
        w = jnp.pad(w, ((0, 0), (0, 0), (0, ci_p - ci), (0, co_p - co)))
        return w.reshape(3, 3 * ci_p, co_p).astype(jnp.bfloat16)

    def prep_vec(v, cp):
        return jnp.pad(v, ((0, 0), (0, cp - v.shape[1]))).astype(jnp.float32)

    w1 = prep_w3(params["w1"], Cin_p, Cmid_p)
    w2 = prep_w3(params["w2"], Cmid_p, Cout_p)
    ws = jnp.pad(params["ws"],
                 ((0, Cin_p - Cin), (0, Cout_p - Cout))).astype(jnp.bfloat16)
    s1, sh1 = prep_vec(params["s1"], Cmid_p), prep_vec(params["sh1"], Cmid_p)
    s2, sh2 = prep_vec(params["s2"], Cout_p), prep_vec(params["sh2"], Cout_p)
    bs = prep_vec(params["bs"], Cout_p)

    def kernel(x_ref, mask_ref, w1_ref, s1_ref, sh1_ref,
               w2_ref, s2_ref, sh2_ref, ws_ref, bs_ref, o_ref):
        # ---- MaxPool2d(2): bf16 VPU max, entirely in VMEM -------------------
        xt = x_ref[0]                                     # (TH+4, 2*Wsrc, 2*Cin_p)
        rmax = jnp.maximum(xt[:, :Wsrc, :], xt[:, Wsrc:, :])          # row pairs
        p_ext = jnp.maximum(rmax[:, :, :Cin_p], rmax[:, :, Cin_p:])   # col pairs
        # p_ext[k, j, :] == pooled[r0 - 2 + k, j - WPAD, :]  (zero off-image)

        def conv3x3(src, w_ref, rows_out, cols_out, c_in, c_out, col0):
            # src: (rows_out+2, >= col0+cols_out+2, c_in) bf16
            # w_ref: (3, 3*c_in, c_out) bf16, rows ordered (dx, ci) within a dy.
            # dy-accumulating bf16 MXU matmuls into one f32 accumulator; dx is
            # folded into lanes (3*c_in slab) when c_in is 128-aligned, else done
            # as per-tap matmuls (avoids zero-padding Cin up to 128).
            acc = jnp.zeros((rows_out * cols_out, c_out), jnp.float32)
            for dy in range(3):
                rows = src[dy:dy + rows_out]
                if c_in % LANE == 0:
                    slab = jnp.concatenate(
                        [rows[:, col0 + dx:col0 + dx + cols_out, :]
                         for dx in range(3)], axis=-1)
                    acc = acc + jnp.dot(
                        slab.reshape(rows_out * cols_out, 3 * c_in),
                        w_ref[dy], preferred_element_type=jnp.float32)
                else:
                    for dx in range(3):
                        slab = rows[:, col0 + dx:col0 + dx + cols_out, :]
                        acc = acc + jnp.dot(
                            slab.reshape(rows_out * cols_out, c_in),
                            w_ref[dy, dx * c_in:(dx + 1) * c_in, :],
                            preferred_element_type=jnp.float32)
            return acc

        # ---- conv1 (3x3) + folded BN + ReLU over the band + 1-px halo -------
        h1 = conv3x3(p_ext, w1_ref, TH + 2, CW1, Cin_p, Cmid_p, col0=0)
        h1 = jnp.maximum(h1 * s1_ref[...] + sh1_ref[...], 0.0)
        # Zero the halo rows/cols that fall outside the image (conv2 padding).
        h1 = (h1.reshape(TH + 2, CW1, Cmid_p) * mask_ref[0]).astype(jnp.bfloat16)

        # ---- conv2 (3x3) + folded BN ----------------------------------------
        c2 = conv3x3(h1, w2_ref, TH, Wo, Cmid_p, Cout_p, col0=WPAD - 2)
        c2 = c2 * s2_ref[...] + sh2_ref[...]

        # ---- 1x1 skip from the resident pooled tile, final ReLU -------------
        skip = jnp.dot(
            p_ext[2:TH + 2, WPAD:WPAD + Wo, :].reshape(TH * Wo, Cin_p),
            ws_ref[...], preferred_element_type=jnp.float32)
        out = jnp.maximum(c2 + skip + bs_ref[...], 0.0)
        o_ref[0] = out.reshape(TH, Wo, Cout_p).astype(o_ref.dtype)

    # ---- cost hint + explicit VMEM budget ------------------------------------
    flops = 2 * N * Ho_p * Wo * (9 * Cin_p * Cmid_p + 9 * Cmid_p * Cout_p
                                 + Cin_p * Cout_p)
    bytes_accessed = (xb.size * 2 + (w1.size + w2.size + ws.size) * 2
                      + (s1.size + sh1.size + s2.size + sh2.size + bs.size) * 4
                      + halo.size * 4 + N * num_bands * TH * Wo * Cout_p * 4)
    cost = pl.CostEstimate(flops=int(flops), transcendentals=0,
                           bytes_accessed=int(bytes_accessed))

    blk_in = (TH + 4) * 2 * Wsrc * 2 * Cin_p * 2                      # bf16
    blk_out = TH * Wo * Cout_p * 4
    wbytes = (w1.size + w2.size + ws.size) * 2 + 8 * max(Cmid_p, Cout_p) * 4
    live = ((TH + 4) * 2 * Wsrc * Cin_p * 2 * 2
            + (TH + 2) * CW1 * (3 * Cin_p * 2 + Cmid_p * 4 + Cmid_p * 2 + 4)
            + TH * Wo * (3 * Cmid_p * 2 + Cout_p * 4 * 2 + Cin_p * 2))
    vmem_limit = int(min(max(2 * (blk_in + blk_out) + wbytes + live + (8 << 20),
                             32 << 20), 100 << 20))

    out_p = pl.pallas_call(
        kernel,
        grid=(N * num_bands,),
        in_specs=[
            pl.BlockSpec((1, TH + 4, 2 * Wsrc, 2 * Cin_p),
                         lambda i: (i, 0, 0, 0)),
            pl.BlockSpec((1, TH + 2, CW1, 1),
                         lambda i: (i % num_bands, 0, 0, 0)),
            pl.BlockSpec((3, 3 * Cin_p, Cmid_p), lambda i: (0, 0, 0)),
            pl.BlockSpec((1, Cmid_p), lambda i: (0, 0)),
            pl.BlockSpec((1, Cmid_p), lambda i: (0, 0)),
            pl.BlockSpec((3, 3 * Cmid_p, Cout_p), lambda i: (0, 0, 0)),
            pl.BlockSpec((1, Cout_p), lambda i: (0, 0)),
            pl.BlockSpec((1, Cout_p), lambda i: (0, 0)),
            pl.BlockSpec((Cin_p, Cout_p), lambda i: (0, 0)),
            pl.BlockSpec((1, Cout_p), lambda i: (0, 0)),
        ],
        out_specs=pl.BlockSpec((1, TH, Wo, Cout_p), lambda i: (i, 0, 0, 0)),
        out_shape=jax.ShapeDtypeStruct((N * num_bands, TH, Wo, Cout_p),
                                       jnp.float32),
        compiler_params=pltpu.CompilerParams(
            dimension_semantics=("parallel",),
            vmem_limit_bytes=vmem_limit),
        cost_estimate=cost,
    )(xb, halo, w1, s1, sh1, w2, s2, sh2, ws, bs)

    out = out_p.reshape(N, Ho_p, Wo, Cout_p)[:, :Ho, :, :Cout]
    return jnp.transpose(out, (0, 3, 1, 2))                      # NHWC -> NCHW


# ----------------------------------------------------------------------------
# Parameter construction (deterministic; folds conv bias + eval-mode BN)
# ----------------------------------------------------------------------------
def make_params(key, in_channels, out_channels, mid_channels=None):
    if mid_channels is None:
        mid_channels = out_channels
    eps = 1e-5
    ks = jax.random.split(key, 12)

    def fold(bias, gamma, beta, rmean, rvar):
        scale = gamma / jnp.sqrt(rvar + eps)
        shift = (bias - rmean) * scale + beta
        return scale.reshape(1, -1), shift.reshape(1, -1)

    w1 = jax.random.normal(ks[0], (3, 3, in_channels, mid_channels),
                           jnp.float32) * 0.2
    b1 = jax.random.normal(ks[1], (mid_channels,), jnp.float32) * 0.1
    g1 = 1.0 + 0.1 * jax.random.normal(ks[2], (mid_channels,), jnp.float32)
    be1 = 0.1 * jax.random.normal(ks[3], (mid_channels,), jnp.float32)
    rm1 = 0.1 * jax.random.normal(ks[4], (mid_channels,), jnp.float32)
    rv1 = jax.random.uniform(ks[5], (mid_channels,), jnp.float32, 0.5, 1.5)
    s1, sh1 = fold(b1, g1, be1, rm1, rv1)

    w2 = jax.random.normal(ks[6], (3, 3, mid_channels, out_channels),
                           jnp.float32) * 0.2
    b2 = jax.random.normal(ks[7], (out_channels,), jnp.float32) * 0.1
    g2 = 1.0 + 0.1 * jax.random.normal(ks[8], (out_channels,), jnp.float32)
    be2 = 0.1 * jax.random.normal(ks[9], (out_channels,), jnp.float32)
    rm2 = 0.1 * jax.random.normal(ks[10], (out_channels,), jnp.float32)
    rv2 = jax.random.uniform(ks[11], (out_channels,), jnp.float32, 0.5, 1.5)
    s2, sh2 = fold(b2, g2, be2, rm2, rv2)

    kws, kbs = jax.random.split(jax.random.fold_in(key, 99))
    ws = jax.random.normal(kws, (in_channels, out_channels), jnp.float32) * 0.2
    bs = (jax.random.normal(kbs, (out_channels,), jnp.float32) * 0.1
          ).reshape(1, -1)

    return dict(w1=w1, s1=s1, sh1=sh1, w2=w2, s2=s2, sh2=sh2, ws=ws, bs=bs)


# ----------------------------------------------------------------------------
# Pure-JAX reference (f32) for validation
# ----------------------------------------------------------------------------
def down_res_reference(x_nchw, params):
    x = jnp.transpose(x_nchw, (0, 2, 3, 1))
    p = jax.lax.reduce_window(x, -jnp.inf, jax.lax.max,
                              (1, 2, 2, 1), (1, 2, 2, 1), "VALID")

    def conv(inp, w, pad):
        return jax.lax.conv_general_dilated(
            inp, w, window_strides=(1, 1), padding=pad,
            dimension_numbers=("NHWC", "HWIO", "NHWC"))

    h1 = conv(p, params["w1"], [(1, 1), (1, 1)]) * params["s1"] + params["sh1"]
    h1 = jnp.maximum(h1, 0.0)
    c2 = conv(h1, params["w2"], [(1, 1), (1, 1)]) * params["s2"] + params["sh2"]
    cin, cout = params["ws"].shape
    skip = conv(p, params["ws"].reshape(1, 1, cin, cout),
                [(0, 0), (0, 0)]) + params["bs"]
    out = jnp.maximum(c2 + skip, 0.0)
    return jnp.transpose(out, (0, 3, 1, 2))


# ----------------------------------------------------------------------------
if __name__ == "__main__":
    N, Cin, H, W = 2, 4, 16, 16
    Cout = 8

    key = jax.random.PRNGKey(0)
    kx, kp = jax.random.split(key)
    x = jax.random.normal(kx, (N, Cin, H, W), jnp.float32)
    params = make_params(kp, Cin, Cout)

    fwd = jax.jit(down_res_forward)
    out = jax.block_until_ready(fwd(x, params))

    ref = down_res_reference(x, params)
    assert out.shape == (N, Cout, H // 2, W // 2), out.shape
    err = float(jnp.max(jnp.abs(out - ref)))
    # bf16 MXU operands / bf16 input stream -> loosened tolerance vs f32 reference.
    assert jnp.allclose(out, ref, rtol=5e-2, atol=1e-1), err
    print("KERNEL_OK")
</pallas_src>

<mosaic_0001>
module attributes {stable_mosaic.version = 11 : i64} {
  func.func @kernel(%arg0: i32, %arg1: memref<1x8x36x128xbf16, #tpu.memory_space<vmem>>, %arg2: memref<1x6x16x1xf32, #tpu.memory_space<vmem>>, %arg3: memref<3x192x128xbf16, #tpu.memory_space<vmem>>, %arg4: memref<1x128xf32, #tpu.memory_space<vmem>>, %arg5: memref<1x128xf32, #tpu.memory_space<vmem>>, %arg6: memref<3x384x128xbf16, #tpu.memory_space<vmem>>, %arg7: memref<1x128xf32, #tpu.memory_space<vmem>>, %arg8: memref<1x128xf32, #tpu.memory_space<vmem>>, %arg9: memref<64x128xbf16, #tpu.memory_space<vmem>>, %arg10: memref<1x128xf32, #tpu.memory_space<vmem>>, %arg11: memref<1x4x8x128xf32, #tpu.memory_space<vmem>>) attributes {dimension_semantics = [#tpu.dimension_semantics<parallel>], iteration_bounds = array<i64: 4>, scalar_prefetch = 0 : i64, scratch_operands = 0 : i64, tpu.core_type = #tpu.core_type<tc>, window_params = [{transform_indices = @transform_0, window_bounds = array<i64: 1, 8, 36, 128>}, {transform_indices = @transform_1, window_bounds = array<i64: 1, 6, 16, 1>}, {pipeline_mode = #tpu.pipeline_mode<synchronous>, transform_indices = @transform_2, window_bounds = array<i64: 3, 192, 128>}, {pipeline_mode = #tpu.pipeline_mode<synchronous>, transform_indices = @transform_3, window_bounds = array<i64: 1, 128>}, {pipeline_mode = #tpu.pipeline_mode<synchronous>, transform_indices = @transform_4, window_bounds = array<i64: 1, 128>}, {pipeline_mode = #tpu.pipeline_mode<synchronous>, transform_indices = @transform_5, window_bounds = array<i64: 3, 384, 128>}, {pipeline_mode = #tpu.pipeline_mode<synchronous>, transform_indices = @transform_6, window_bounds = array<i64: 1, 128>}, {pipeline_mode = #tpu.pipeline_mode<synchronous>, transform_indices = @transform_7, window_bounds = array<i64: 1, 128>}, {pipeline_mode = #tpu.pipeline_mode<synchronous>, transform_indices = @transform_8, window_bounds = array<i64: 64, 128>}, {pipeline_mode = #tpu.pipeline_mode<synchronous>, transform_indices = @transform_9, window_bounds = array<i64: 1, 128>}, {transform_indices = @transform_10, window_bounds = array<i64: 1, 4, 8, 128>}]} {
    %c0 = arith.constant 0 : index
    %c0_0 = arith.constant 0 : index
    %c0_1 = arith.constant 0 : index
    %c0_2 = arith.constant 0 : index
    %0 = vector.load %arg1[%c0, %c0_0, %c0_1, %c0_2] : memref<1x8x36x128xbf16, #tpu.memory_space<vmem>>, vector<1x8x36x128xbf16>
    %1 = vector.shape_cast %0 : vector<1x8x36x128xbf16> to vector<8x36x128xbf16>
    %2 = vector.extract_strided_slice %1 {offsets = [0, 0, 0], sizes = [8, 18, 128], strides = [1, 1, 1]} : vector<8x36x128xbf16> to vector<8x18x128xbf16>
    %3 = vector.extract_strided_slice %1 {offsets = [0, 18, 0], sizes = [8, 18, 128], strides = [1, 1, 1]} : vector<8x36x128xbf16> to vector<8x18x128xbf16>
    %4 = arith.maximumf %2, %3 : vector<8x18x128xbf16>
    %5 = vector.extract_strided_slice %4 {offsets = [0, 0, 0], sizes = [8, 18, 64], strides = [1, 1, 1]} : vector<8x18x128xbf16> to vector<8x18x64xbf16>
    %6 = vector.extract_strided_slice %4 {offsets = [0, 0, 64], sizes = [8, 18, 64], strides = [1, 1, 1]} : vector<8x18x128xbf16> to vector<8x18x64xbf16>
    %7 = arith.maximumf %5, %6 : vector<8x18x64xbf16>
    %cst = arith.constant 0.000000e+00 : f32
    %8 = vector.broadcast %cst : f32 to vector<96x128xf32>
    %9 = vector.extract_strided_slice %7 {offsets = [0, 0, 0], sizes = [6, 18, 64], strides = [1, 1, 1]} : vector<8x18x64xbf16> to vector<6x18x64xbf16>
    %10 = vector.extract_strided_slice %9 {offsets = [0, 0, 0], sizes = [6, 16, 64], strides = [1, 1, 1]} : vector<6x18x64xbf16> to vector<6x16x64xbf16>
    %11 = vector.shape_cast %10 : vector<6x16x64xbf16> to vector<96x64xbf16>
    %c0_3 = arith.constant 0 : index
    %c0_4 = arith.constant 0 : index
    %c0_5 = arith.constant 0 : index
    %12 = vector.load %arg3[%c0_3, %c0_4, %c0_5] : memref<3x192x128xbf16, #tpu.memory_space<vmem>>, vector<1x64x128xbf16>
    %13 = vector.shape_cast %12 : vector<1x64x128xbf16> to vector<64x128xbf16>
    %cst_6 = arith.constant dense<0.000000e+00> : vector<96x128xf32>
    %14 = tpu.matmul %11, %13, %cst_6 {dimension_numbers = #tpu.dot_dimension_numbers<[1], [0], [0], [1], [0, 0, 1, 1], [], []>} : vector<96x64xbf16>, vector<64x128xbf16>, vector<96x128xf32> -> vector<96x128xf32>
    %15 = arith.addf %8, %14 : vector<96x128xf32>
    %16 = vector.extract_strided_slice %9 {offsets = [0, 1, 0], sizes = [6, 16, 64], strides = [1, 1, 1]} : vector<6x18x64xbf16> to vector<6x16x64xbf16>
    %17 = vector.shape_cast %16 : vector<6x16x64xbf16> to vector<96x64xbf16>
    %c0_7 = arith.constant 0 : index
    %c64 = arith.constant 64 : index
    %c0_8 = arith.constant 0 : index
    %18 = vector.load %arg3[%c0_7, %c64, %c0_8] : memref<3x192x128xbf16, #tpu.memory_space<vmem>>, vector<1x64x128xbf16>
    %19 = vector.shape_cast %18 : vector<1x64x128xbf16> to vector<64x128xbf16>
    %cst_9 = arith.constant dense<0.000000e+00> : vector<96x128xf32>
    %20 = tpu.matmul %17, %19, %cst_9 {dimension_numbers = #tpu.dot_dimension_numbers<[1], [0], [0], [1], [0, 0, 1, 1], [], []>} : vector<96x64xbf16>, vector<64x128xbf16>, vector<96x128xf32> -> vector<96x128xf32>
    %21 = arith.addf %15, %20 : vector<96x128xf32>
    %22 = vector.extract_strided_slice %9 {offsets = [0, 2, 0], sizes = [6, 16, 64], strides = [1, 1, 1]} : vector<6x18x64xbf16> to vector<6x16x64xbf16>
    %23 = vector.shape_cast %22 : vector<6x16x64xbf16> to vector<96x64xbf16>
    %c0_10 = arith.constant 0 : index
    %c128 = arith.constant 128 : index
    %c0_11 = arith.constant 0 : index
    %24 = vector.load %arg3[%c0_10, %c128, %c0_11] : memref<3x192x128xbf16, #tpu.memory_space<vmem>>, vector<1x64x128xbf16>
    %25 = vector.shape_cast %24 : vector<1x64x128xbf16> to vector<64x128xbf16>
    %cst_12 = arith.constant dense<0.000000e+00> : vector<96x128xf32>
    %26 = tpu.matmul %23, %25, %cst_12 {dimension_numbers = #tpu.dot_dimension_numbers<[1], [0], [0], [1], [0, 0, 1, 1], [], []>} : vector<96x64xbf16>, vector<64x128xbf16>, vector<96x128xf32> -> vector<96x128xf32>
    %27 = arith.addf %21, %26 : vector<96x128xf32>
    %28 = vector.extract_strided_slice %7 {offsets = [1, 0, 0], sizes = [6, 18, 64], strides = [1, 1, 1]} : vector<8x18x64xbf16> to vector<6x18x64xbf16>
    %29 = vector.extract_strided_slice %28 {offsets = [0, 0, 0], sizes = [6, 16, 64], strides = [1, 1, 1]} : vector<6x18x64xbf16> to vector<6x16x64xbf16>
    %30 = vector.shape_cast %29 : vector<6x16x64xbf16> to vector<96x64xbf16>
    %c1 = arith.constant 1 : index
    %c0_13 = arith.constant 0 : index
    %c0_14 = arith.constant 0 : index
    %31 = vector.load %arg3[%c1, %c0_13, %c0_14] : memref<3x192x128xbf16, #tpu.memory_space<vmem>>, vector<1x64x128xbf16>
    %32 = vector.shape_cast %31 : vector<1x64x128xbf16> to vector<64x128xbf16>
    %cst_15 = arith.constant dense<0.000000e+00> : vector<96x128xf32>
    %33 = tpu.matmul %30, %32, %cst_15 {dimension_numbers = #tpu.dot_dimension_numbers<[1], [0], [0], [1], [0, 0, 1, 1], [], []>} : vector<96x64xbf16>, vector<64x128xbf16>, vector<96x128xf32> -> vector<96x128xf32>
    %34 = arith.addf %27, %33 : vector<96x128xf32>
    %35 = vector.extract_strided_slice %28 {offsets = [0, 1, 0], sizes = [6, 16, 64], strides = [1, 1, 1]} : vector<6x18x64xbf16> to vector<6x16x64xbf16>
    %36 = vector.shape_cast %35 : vector<6x16x64xbf16> to vector<96x64xbf16>
    %c1_16 = arith.constant 1 : index
    %c64_17 = arith.constant 64 : index
    %c0_18 = arith.constant 0 : index
    %37 = vector.load %arg3[%c1_16, %c64_17, %c0_18] : memref<3x192x128xbf16, #tpu.memory_space<vmem>>, vector<1x64x128xbf16>
    %38 = vector.shape_cast %37 : vector<1x64x128xbf16> to vector<64x128xbf16>
    %cst_19 = arith.constant dense<0.000000e+00> : vector<96x128xf32>
    %39 = tpu.matmul %36, %38, %cst_19 {dimension_numbers = #tpu.dot_dimension_numbers<[1], [0], [0], [1], [0, 0, 1, 1], [], []>} : vector<96x64xbf16>, vector<64x128xbf16>, vector<96x128xf32> -> vector<96x128xf32>
    %40 = arith.addf %34, %39 : vector<96x128xf32>
    %41 = vector.extract_strided_slice %28 {offsets = [0, 2, 0], sizes = [6, 16, 64], strides = [1, 1, 1]} : vector<6x18x64xbf16> to vector<6x16x64xbf16>
    %42 = vector.shape_cast %41 : vector<6x16x64xbf16> to vector<96x64xbf16>
    %c1_20 = arith.constant 1 : index
    %c128_21 = arith.constant 128 : index
    %c0_22 = arith.constant 0 : index
    %43 = vector.load %arg3[%c1_20, %c128_21, %c0_22] : memref<3x192x128xbf16, #tpu.memory_space<vmem>>, vector<1x64x128xbf16>
    %44 = vector.shape_cast %43 : vector<1x64x128xbf16> to vector<64x128xbf16>
    %cst_23 = arith.constant dense<0.000000e+00> : vector<96x128xf32>
    %45 = tpu.matmul %42, %44, %cst_23 {dimension_numbers = #tpu.dot_dimension_numbers<[1], [0], [0], [1], [0, 0, 1, 1], [], []>} : vector<96x64xbf16>, vector<64x128xbf16>, vector<96x128xf32> -> vector<96x128xf32>
    %46 = arith.addf %40, %45 : vector<96x128xf32>
    %47 = vector.extract_strided_slice %7 {offsets = [2, 0, 0], sizes = [6, 18, 64], strides = [1, 1, 1]} : vector<8x18x64xbf16> to vector<6x18x64xbf16>
    %48 = vector.extract_strided_slice %47 {offsets = [0, 0, 0], sizes = [6, 16, 64], strides = [1, 1, 1]} : vector<6x18x64xbf16> to vector<6x16x64xbf16>
    %49 = vector.shape_cast %48 : vector<6x16x64xbf16> to vector<96x64xbf16>
    %c2 = arith.constant 2 : index
    %c0_24 = arith.constant 0 : index
    %c0_25 = arith.constant 0 : index
    %50 = vector.load %arg3[%c2, %c0_24, %c0_25] : memref<3x192x128xbf16, #tpu.memory_space<vmem>>, vector<1x64x128xbf16>
    %51 = vector.shape_cast %50 : vector<1x64x128xbf16> to vector<64x128xbf16>
    %cst_26 = arith.constant dense<0.000000e+00> : vector<96x128xf32>
    %52 = tpu.matmul %49, %51, %cst_26 {dimension_numbers = #tpu.dot_dimension_numbers<[1], [0], [0], [1], [0, 0, 1, 1], [], []>} : vector<96x64xbf16>, vector<64x128xbf16>, vector<96x128xf32> -> vector<96x128xf32>
    %53 = arith.addf %46, %52 : vector<96x128xf32>
    %54 = vector.extract_strided_slice %47 {offsets = [0, 1, 0], sizes = [6, 16, 64], strides = [1, 1, 1]} : vector<6x18x64xbf16> to vector<6x16x64xbf16>
    %55 = vector.shape_cast %54 : vector<6x16x64xbf16> to vector<96x64xbf16>
    %c2_27 = arith.constant 2 : index
    %c64_28 = arith.constant 64 : index
    %c0_29 = arith.constant 0 : index
    %56 = vector.load %arg3[%c2_27, %c64_28, %c0_29] : memref<3x192x128xbf16, #tpu.memory_space<vmem>>, vector<1x64x128xbf16>
    %57 = vector.shape_cast %56 : vector<1x64x128xbf16> to vector<64x128xbf16>
    %cst_30 = arith.constant dense<0.000000e+00> : vector<96x128xf32>
    %58 = tpu.matmul %55, %57, %cst_30 {dimension_numbers = #tpu.dot_dimension_numbers<[1], [0], [0], [1], [0, 0, 1, 1], [], []>} : vector<96x64xbf16>, vector<64x128xbf16>, vector<96x128xf32> -> vector<96x128xf32>
    %59 = arith.addf %53, %58 : vector<96x128xf32>
    %60 = vector.extract_strided_slice %47 {offsets = [0, 2, 0], sizes = [6, 16, 64], strides = [1, 1, 1]} : vector<6x18x64xbf16> to vector<6x16x64xbf16>
    %61 = vector.shape_cast %60 : vector<6x16x64xbf16> to vector<96x64xbf16>
    %c2_31 = arith.constant 2 : index
    %c128_32 = arith.constant 128 : index
    %c0_33 = arith.constant 0 : index
    %62 = vector.load %arg3[%c2_31, %c128_32, %c0_33] : memref<3x192x128xbf16, #tpu.memory_space<vmem>>, vector<1x64x128xbf16>
    %63 = vector.shape_cast %62 : vector<1x64x128xbf16> to vector<64x128xbf16>
    %cst_34 = arith.constant dense<0.000000e+00> : vector<96x128xf32>
    %64 = tpu.matmul %61, %63, %cst_34 {dimension_numbers = #tpu.dot_dimension_numbers<[1], [0], [0], [1], [0, 0, 1, 1], [], []>} : vector<96x64xbf16>, vector<64x128xbf16>, vector<96x128xf32> -> vector<96x128xf32>
    %65 = arith.addf %59, %64 : vector<96x128xf32>
    %c0_35 = arith.constant 0 : index
    %c0_36 = arith.constant 0 : index
    %66 = vector.load %arg4[%c0_35, %c0_36] : memref<1x128xf32, #tpu.memory_space<vmem>>, vector<1x128xf32>
    %67 = vector.broadcast %66 : vector<1x128xf32> to vector<96x128xf32>
    %68 = arith.mulf %65, %67 : vector<96x128xf32>
    %c0_37 = arith.constant 0 : index
    %c0_38 = arith.constant 0 : index
    %69 = vector.load %arg5[%c0_37, %c0_38] : memref<1x128xf32, #tpu.memory_space<vmem>>, vector<1x128xf32>
    %70 = vector.broadcast %69 : vector<1x128xf32> to vector<96x128xf32>
    %71 = arith.addf %68, %70 : vector<96x128xf32>
    %cst_39 = arith.constant 0.000000e+00 : f32
    %72 = vector.broadcast %cst_39 : f32 to vector<96x128xf32>
    %73 = arith.maximumf %71, %72 : vector<96x128xf32>
    %74 = vector.shape_cast %73 : vector<96x128xf32> to vector<6x16x128xf32>
    %c0_40 = arith.constant 0 : index
    %c0_41 = arith.constant 0 : index
    %c0_42 = arith.constant 0 : index
    %c0_43 = arith.constant 0 : index
    %75 = vector.load %arg2[%c0_40, %c0_41, %c0_42, %c0_43] : memref<1x6x16x1xf32, #tpu.memory_space<vmem>>, vector<1x6x16x1xf32>
    %76 = vector.shape_cast %75 : vector<1x6x16x1xf32> to vector<6x16x1xf32>
    %77 = vector.broadcast %76 : vector<6x16x1xf32> to vector<6x16x128xf32>
    %78 = arith.mulf %74, %77 : vector<6x16x128xf32>
    %79 = arith.truncf %78 : vector<6x16x128xf32> to vector<6x16x128xbf16>
    %cst_44 = arith.constant 0.000000e+00 : f32
    %80 = vector.broadcast %cst_44 : f32 to vector<32x128xf32>
    %81 = vector.extract_strided_slice %79 {offsets = [0, 0, 0], sizes = [4, 16, 128], strides = [1, 1, 1]} : vector<6x16x128xbf16> to vector<4x16x128xbf16>
    %82 = vector.extract_strided_slice %81 {offsets = [0, 3, 0], sizes = [4, 8, 128], strides = [1, 1, 1]} : vector<4x16x128xbf16> to vector<4x8x128xbf16>
    %83 = vector.extract_strided_slice %81 {offsets = [0, 4, 0], sizes = [4, 8, 128], strides = [1, 1, 1]} : vector<4x16x128xbf16> to vector<4x8x128xbf16>
    %84 = vector.extract_strided_slice %81 {offsets = [0, 5, 0], sizes = [4, 8, 128], strides = [1, 1, 1]} : vector<4x16x128xbf16> to vector<4x8x128xbf16>
    %85 = tpu.concatenate %82, %83, %84 in 2 : vector<4x8x128xbf16>, vector<4x8x128xbf16>, vector<4x8x128xbf16> -> vector<4x8x384xbf16>
    %86 = vector.shape_cast %85 : vector<4x8x384xbf16> to vector<32x384xbf16>
    %c0_45 = arith.constant 0 : index
    %c0_46 = arith.constant 0 : index
    %c0_47 = arith.constant 0 : index
    %87 = vector.load %arg6[%c0_45, %c0_46, %c0_47] : memref<3x384x128xbf16, #tpu.memory_space<vmem>>, vector<1x384x128xbf16>
    %88 = vector.shape_cast %87 : vector<1x384x128xbf16> to vector<384x128xbf16>
    %cst_48 = arith.constant dense<0.000000e+00> : vector<32x128xf32>
    %89 = tpu.matmul %86, %88, %cst_48 {dimension_numbers = #tpu.dot_dimension_numbers<[1], [0], [0], [1], [0, 0, 1, 1], [], []>} : vector<32x384xbf16>, vector<384x128xbf16>, vector<32x128xf32> -> vector<32x128xf32>
    %90 = arith.addf %80, %89 : vector<32x128xf32>
    %91 = vector.extract_strided_slice %79 {offsets = [1, 0, 0], sizes = [4, 16, 128], strides = [1, 1, 1]} : vector<6x16x128xbf16> to vector<4x16x128xbf16>
    %92 = vector.extract_strided_slice %91 {offsets = [0, 3, 0], sizes = [4, 8, 128], strides = [1, 1, 1]} : vector<4x16x128xbf16> to vector<4x8x128xbf16>
    %93 = vector.extract_strided_slice %91 {offsets = [0, 4, 0], sizes = [4, 8, 128], strides = [1, 1, 1]} : vector<4x16x128xbf16> to vector<4x8x128xbf16>
    %94 = vector.extract_strided_slice %91 {offsets = [0, 5, 0], sizes = [4, 8, 128], strides = [1, 1, 1]} : vector<4x16x128xbf16> to vector<4x8x128xbf16>
    %95 = tpu.concatenate %92, %93, %94 in 2 : vector<4x8x128xbf16>, vector<4x8x128xbf16>, vector<4x8x128xbf16> -> vector<4x8x384xbf16>
    %96 = vector.shape_cast %95 : vector<4x8x384xbf16> to vector<32x384xbf16>
    %c1_49 = arith.constant 1 : index
    %c0_50 = arith.constant 0 : index
    %c0_51 = arith.constant 0 : index
    %97 = vector.load %arg6[%c1_49, %c0_50, %c0_51] : memref<3x384x128xbf16, #tpu.memory_space<vmem>>, vector<1x384x128xbf16>
    %98 = vector.shape_cast %97 : vector<1x384x128xbf16> to vector<384x128xbf16>
    %cst_52 = arith.constant dense<0.000000e+00> : vector<32x128xf32>
    %99 = tpu.matmul %96, %98, %cst_52 {dimension_numbers = #tpu.dot_dimension_numbers<[1], [0], [0], [1], [0, 0, 1, 1], [], []>} : vector<32x384xbf16>, vector<384x128xbf16>, vector<32x128xf32> -> vector<32x128xf32>
    %100 = arith.addf %90, %99 : vector<32x128xf32>
    %101 = vector.extract_strided_slice %79 {offsets = [2, 0, 0], sizes = [4, 16, 128], strides = [1, 1, 1]} : vector<6x16x128xbf16> to vector<4x16x128xbf16>
    %102 = vector.extract_strided_slice %101 {offsets = [0, 3, 0], sizes = [4, 8, 128], strides = [1, 1, 1]} : vector<4x16x128xbf16> to vector<4x8x128xbf16>
    %103 = vector.extract_strided_slice %101 {offsets = [0, 4, 0], sizes = [4, 8, 128], strides = [1, 1, 1]} : vector<4x16x128xbf16> to vector<4x8x128xbf16>
    %104 = vector.extract_strided_slice %101 {offsets = [0, 5, 0], sizes = [4, 8, 128], strides = [1, 1, 1]} : vector<4x16x128xbf16> to vector<4x8x128xbf16>
    %105 = tpu.concatenate %102, %103, %104 in 2 : vector<4x8x128xbf16>, vector<4x8x128xbf16>, vector<4x8x128xbf16> -> vector<4x8x384xbf16>
    %106 = vector.shape_cast %105 : vector<4x8x384xbf16> to vector<32x384xbf16>
    %c2_53 = arith.constant 2 : index
    %c0_54 = arith.constant 0 : index
    %c0_55 = arith.constant 0 : index
    %107 = vector.load %arg6[%c2_53, %c0_54, %c0_55] : memref<3x384x128xbf16, #tpu.memory_space<vmem>>, vector<1x384x128xbf16>
    %108 = vector.shape_cast %107 : vector<1x384x128xbf16> to vector<384x128xbf16>
    %cst_56 = arith.constant dense<0.000000e+00> : vector<32x128xf32>
    %109 = tpu.matmul %106, %108, %cst_56 {dimension_numbers = #tpu.dot_dimension_numbers<[1], [0], [0], [1], [0, 0, 1, 1], [], []>} : vector<32x384xbf16>, vector<384x128xbf16>, vector<32x128xf32> -> vector<32x128xf32>
    %110 = arith.addf %100, %109 : vector<32x128xf32>
    %c0_57 = arith.constant 0 : index
    %c0_58 = arith.constant 0 : index
    %111 = vector.load %arg7[%c0_57, %c0_58] : memref<1x128xf32, #tpu.memory_space<vmem>>, vector<1x128xf32>
    %112 = vector.broadcast %111 : vector<1x128xf32> to vector<32x128xf32>
    %113 = arith.mulf %110, %112 : vector<32x128xf32>
    %c0_59 = arith.constant 0 : index
    %c0_60 = arith.constant 0 : index
    %114 = vector.load %arg8[%c0_59, %c0_60] : memref<1x128xf32, #tpu.memory_space<vmem>>, vector<1x128xf32>
    %115 = vector.broadcast %114 : vector<1x128xf32> to vector<32x128xf32>
    %116 = arith.addf %113, %115 : vector<32x128xf32>
    %117 = vector.extract_strided_slice %7 {offsets = [2, 5, 0], sizes = [4, 8, 64], strides = [1, 1, 1]} : vector<8x18x64xbf16> to vector<4x8x64xbf16>
    %118 = vector.shape_cast %117 : vector<4x8x64xbf16> to vector<32x64xbf16>
    %c0_61 = arith.constant 0 : index
    %c0_62 = arith.constant 0 : index
    %119 = vector.load %arg9[%c0_61, %c0_62] : memref<64x128xbf16, #tpu.memory_space<vmem>>, vector<64x128xbf16>
    %cst_63 = arith.constant dense<0.000000e+00> : vector<32x128xf32>
    %120 = tpu.matmul %118, %119, %cst_63 {dimension_numbers = #tpu.dot_dimension_numbers<[1], [0], [0], [1], [0, 0, 1, 1], [], []>} : vector<32x64xbf16>, vector<64x128xbf16>, vector<32x128xf32> -> vector<32x128xf32>
    %121 = arith.addf %116, %120 : vector<32x128xf32>
    %c0_64 = arith.constant 0 : index
    %c0_65 = arith.constant 0 : index
    %122 = vector.load %arg10[%c0_64, %c0_65] : memref<1x128xf32, #tpu.memory_space<vmem>>, vector<1x128xf32>
    %123 = vector.broadcast %122 : vector<1x128xf32> to vector<32x128xf32>
    %124 = arith.addf %121, %123 : vector<32x128xf32>
    %cst_66 = arith.constant 0.000000e+00 : f32
    %125 = vector.broadcast %cst_66 : f32 to vector<32x128xf32>
    %126 = arith.maximumf %124, %125 : vector<32x128xf32>
    %127 = vector.shape_cast %126 : vector<32x128xf32> to vector<4x8x128xf32>
    %c0_67 = arith.constant 0 : index
    %c0_68 = arith.constant 0 : index
    %c0_69 = arith.constant 0 : index
    %c0_70 = arith.constant 0 : index
    %128 = vector.load %arg11[%c0_67, %c0_68, %c0_69, %c0_70] : memref<1x4x8x128xf32, #tpu.memory_space<vmem>>, vector<1x4x8x128xf32>
    %129 = vector.shape_cast %128 : vector<1x4x8x128xf32> to vector<4x8x128xf32>
    %130 = vector.shape_cast %127 : vector<4x8x128xf32> to vector<1x4x8x128xf32>
    tpu.vector_store %arg11[%c0_67, %c0_68, %c0_69, %c0_70], %130 {strides = array<i32>} : memref<1x4x8x128xf32, #tpu.memory_space<vmem>>, vector<1x4x8x128xf32>,
    return
  }
  func.func @transform_0(%arg0: i32) -> (i32, i32, i32, i32) {
    %c0_i32 = arith.constant 0 : i32
    %c0_i32_0 = arith.constant 0 : i32
    %c0_i32_1 = arith.constant 0 : i32
    %c0_i32_2 = arith.constant 0 : i32
    return %arg0, %c0_i32, %c0_i32_0, %c0_i32_1 : i32, i32, i32, i32
  }
  func.func @transform_1(%arg0: i32) -> (i32, i32, i32, i32) {
    %c2_i32 = arith.constant 2 : i32
    %c0_i32 = arith.constant 0 : i32
    %0 = arith.cmpi eq, %c2_i32, %c0_i32 : i32
    %c1_i32 = arith.constant 1 : i32
    %1 = arith.select %0, %c1_i32, %c2_i32 : i32
    %2 = arith.remsi %arg0, %1 : i32
    %c0_i32_0 = arith.constant 0 : i32
    %3 = arith.cmpi ne, %2, %c0_i32_0 : i32
    %c0_i32_1 = arith.constant 0 : i32
    %4 = arith.cmpi slt, %2, %c0_i32_1 : i32
    %c0_i32_2 = arith.constant 0 : i32
    %5 = arith.cmpi slt, %1, %c0_i32_2 : i32
    %6 = arith.xori %4, %5 : i1
    %7 = arith.andi %6, %3 : i1
    %8 = arith.addi %2, %1 : i32
    %9 = arith.select %7, %8, %2 : i32
    %c0_i32_3 = arith.constant 0 : i32
    %c0_i32_4 = arith.constant 0 : i32
    %c0_i32_5 = arith.constant 0 : i32
    %c0_i32_6 = arith.constant 0 : i32
    return %9, %c0_i32_3, %c0_i32_4, %c0_i32_5 : i32, i32, i32, i32
  }
  func.func @transform_2(%arg0: i32) -> (i32, i32, i32) {
    %c0_i32 = arith.constant 0 : i32
    %c0_i32_0 = arith.constant 0 : i32
    %c0_i32_1 = arith.constant 0 : i32
    %c0_i32_2 = arith.constant 0 : i32
    return %c0_i32, %c0_i32_0, %c0_i32_1 : i32, i32, i32
  }
  func.func @transform_3(%arg0: i32) -> (i32, i32) {
    %c0_i32 = arith.constant 0 : i32
    %c0_i32_0 = arith.constant 0 : i32
    %c0_i32_1 = arith.constant 0 : i32
    return %c0_i32, %c0_i32_0 : i32, i32
  }
  func.func @transform_4(%arg0: i32) -> (i32, i32) {
    %c0_i32 = arith.constant 0 : i32
    %c0_i32_0 = arith.constant 0 : i32
    %c0_i32_1 = arith.constant 0 : i32
    return %c0_i32, %c0_i32_0 : i32, i32
  }
  func.func @transform_5(%arg0: i32) -> (i32, i32, i32) {
    %c0_i32 = arith.constant 0 : i32
    %c0_i32_0 = arith.constant 0 : i32
    %c0_i32_1 = arith.constant 0 : i32
    %c0_i32_2 = arith.constant 0 : i32
    return %c0_i32, %c0_i32_0, %c0_i32_1 : i32, i32, i32
  }
  func.func @transform_6(%arg0: i32) -> (i32, i32) {
    %c0_i32 = arith.constant 0 : i32
    %c0_i32_0 = arith.constant 0 : i32
    %c0_i32_1 = arith.constant 0 : i32
    return %c0_i32, %c0_i32_0 : i32, i32
  }
  func.func @transform_7(%arg0: i32) -> (i32, i32) {
    %c0_i32 = arith.constant 0 : i32
    %c0_i32_0 = arith.constant 0 : i32
    %c0_i32_1 = arith.constant 0 : i32
    return %c0_i32, %c0_i32_0 : i32, i32
  }
  func.func @transform_8(%arg0: i32) -> (i32, i32) {
    %c0_i32 = arith.constant 0 : i32
    %c0_i32_0 = arith.constant 0 : i32
    %c0_i32_1 = arith.constant 0 : i32
    return %c0_i32, %c0_i32_0 : i32, i32
  }
  func.func @transform_9(%arg0: i32) -> (i32, i32) {
    %c0_i32 = arith.constant 0 : i32
    %c0_i32_0 = arith.constant 0 : i32
    %c0_i32_1 = arith.constant 0 : i32
    return %c0_i32, %c0_i32_0 : i32, i32
  }
  func.func @transform_10(%arg0: i32) -> (i32, i32, i32, i32) {
    %c0_i32 = arith.constant 0 : i32
    %c0_i32_0 = arith.constant 0 : i32
    %c0_i32_1 = arith.constant 0 : i32
    %c0_i32_2 = arith.constant 0 : i32
    return %arg0, %c0_i32, %c0_i32_0, %c0_i32_1 : i32, i32, i32, i32
  }
}

</mosaic_0001>

<llo_original>
// kernel: down_res_forward.1
$region0: #{down_res_forward.1}
  #allocation0 [shape = 'u32[]', space=smem, size = 0x4, offset = 0x4, fixed_abs, tag = 'smem constant byte address 0x4 - core index']
  #allocation1 [shape = 'u32[144,128]{1,0:T(1,128)}', space=vmem, size = 0x12000, scoped, tag = 'internal scratch']
  %s0 = inlined_call_operand.vmem [shape: bf16[4,8,36,128], index: 0, kind: input, shape index: {}]
  %s1 = inlined_call_operand.vmem [shape: f32[2,6,16,1], index: 1, kind: input, shape index: {}]
  %s2 = inlined_call_operand.vmem [shape: bf16[3,192,128], index: 2, kind: input, shape index: {}]
  %s3 = inlined_call_operand.vmem [shape: f32[1,128], index: 3, kind: input, shape index: {}]
  %s4 = inlined_call_operand.vmem [shape: f32[1,128], index: 4, kind: input, shape index: {}]
  %s5 = inlined_call_operand.vmem [shape: bf16[3,384,128], index: 5, kind: input, shape index: {}]
  %s6 = inlined_call_operand.vmem [shape: f32[1,128], index: 6, kind: input, shape index: {}]
  %s7 = inlined_call_operand.vmem [shape: f32[1,128], index: 7, kind: input, shape index: {}]
  %s8 = inlined_call_operand.vmem [shape: bf16[64,128], index: 8, kind: input, shape index: {}]
  %s9 = inlined_call_operand.vmem [shape: f32[1,128], index: 9, kind: input, shape index: {}]
  %s10 = inlined_call_operand.vmem [shape: f32[4,4,8,128], index: 10, kind: output, shape index: {}]
  %s11 = sld [smem:[#allocation0]]
  $region73: #{down_res_forward.1} parent=0
    _
  %s13 = ssub.s32 1, %s11
  %s14 = scalar_select 0, %s13, %s11
  loop: start=0, step=1, limit=6
  $region2: #{down_res_forward.1} parent=0 // loop_pre_header
    _
  $region3: #{down_res_forward.1} parent=0 // loop_header
    %s16 = sphi 0, %s20
    %p17 = scmp.ge.s32.totalorder %s16, 6
    %s26 = sphi 0, %s28
    %s29 = sphi 0, %s26
    %s30 = sphi 0, %s29
    %s46 = sphi 0, %s30
    %s76 = sphi 0, %s78
    %s79 = sphi 0, %s76
    %s80 = sphi 0, %s79
    %s96 = sphi 0, %s80
    %s100 = sphi 0, %s100
    %s102 = sphi 0, %s100
    %s103 = sphi 0, %s102
    %s117 = sphi 0, %s103
    %s121 = sphi 0, %s121
    %s123 = sphi 0, %s121
    %s124 = sphi 0, %s123
    %s138 = sphi 0, %s124
    %s142 = sphi 0, %s142
    %s144 = sphi 0, %s142
    %s145 = sphi 0, %s144
    %s159 = sphi 0, %s145
    %s163 = sphi 0, %s163
    %s165 = sphi 0, %s163
    %s166 = sphi 0, %s165
    %s180 = sphi 0, %s166
    %s184 = sphi 0, %s184
    %s186 = sphi 0, %s184
    %s187 = sphi 0, %s186
    %s201 = sphi 0, %s187
    %s205 = sphi 0, %s205
    %s207 = sphi 0, %s205
    %s208 = sphi 0, %s207
    %s222 = sphi 0, %s208
    %s226 = sphi 0, %s226
    %s228 = sphi 0, %s226
    %s229 = sphi 0, %s228
    %s243 = sphi 0, %s229
    %s247 = sphi 0, %s247
    %s249 = sphi 0, %s247
    %s250 = sphi 0, %s249
    %s264 = sphi 0, %s250
    %s270 = sphi 0, %s272
    %s273 = sphi 0, %s270
    %s274 = sphi 0, %s273
    %s290 = sphi 0, %s274
  $region4: #{down_res_forward.1} parent=0 // loop_header_branch
    %19 = sbr.rel (%p17) target = $region8
  $region5: #{down_res_forward.1} parent=0 // loop_body
    %s21 = ssub.s32 %s16, 1
    %s22 = ssub.s32 %s16, 2
    %s23 = sadd.s32 %s16, 1
    %s24 = ssub.s32 %s16, %s23
    %p25 = scmp.eq.s32.totalorder %s24, 0
    %s27 = sadd.s32 %s26, 1
    %s28 = scalar_select %p25, %s26, %s27
    %p31 = pneg %p25
    %p32 = scmp.eq.s32.totalorder %s16, 3
    %p33 = por %p31, %p32
    %p34 = scmp.ne.s32.totalorder %s26, %s29
    %p35 = scmp.eq.s32.totalorder %s16, 0
    %p36 = por %p34, %p35
    %p37 = scmp.ne.s32.totalorder %s26, %s29
    %p38 = scmp.eq.s32.totalorder %s21, 3
    %p39 = por %p37, %p38
    %p40 = scmp.ne.s32.totalorder %s29, %s30
    %p41 = scmp.eq.s32.totalorder %s21, 0
    %p42 = por %p40, %p41
    %p43 = scmp.ne.s32.totalorder %s29, %s30
    %p44 = scmp.eq.s32.totalorder %s22, 3
    %p45 = por %p43, %p44
    %p47 = scmp.ne.s32.totalorder %s30, %s46
    %p48 = scmp.eq.s32.totalorder %s22, 0
    %p49 = por %p47, %p48
    %p50 = scmp.lt.s32.totalorder %s16, 0
    %s51 = ssub.s32 0, %s16
    %s52 = scalar_select %p50, %s51, %s16
    %s53 = sand.u32 %s52, 1
    %s54 = ssub.s32 0, %s53
    %s55 = scalar_select %p50, %s54, %s53
    %p56 = scmp.ne.s32.totalorder %s55, 0
    %p57 = scmp.lt.s32.totalorder %s55, 0
    %p58 = pnand %p57, %p56
    %p59 = pneg %p58
    %s60 = sadd.s32 %s55, 2
    %s61 = scalar_select %p59, %s60, %s55
    %p62 = scmp.lt.s32.totalorder %s23, 0
    %s63 = ssub.s32 0, %s23
    %s64 = scalar_select %p62, %s63, %s23
    %s65 = sand.u32 %s64, 1
    %s66 = ssub.s32 0, %s65
    %s67 = scalar_select %p62, %s66, %s65
    %p68 = scmp.ne.s32.totalorder %s67, 0
    %p69 = scmp.lt.s32.totalorder %s67, 0
    %p70 = pnand %p69, %p68
    %p71 = pneg %p70
    %s72 = sadd.s32 %s67, 2
    %s73 = scalar_select %p71, %s72, %s67
    %s74 = ssub.s32 %s61, %s73
    %p75 = scmp.eq.s32.totalorder %s74, 0
    %s77 = sadd.s32 %s76, 1
    %s78 = scalar_select %p75, %s76, %s77
    %p81 = pneg %p75
    %p82 = scmp.eq.s32.totalorder %s16, 3
    %p83 = por %p81, %p82
    %p84 = scmp.ne.s32.totalorder %s76, %s79
    %p85 = scmp.eq.s32.totalorder %s16, 0
    %p86 = por %p84, %p85
    %p87 = scmp.ne.s32.totalorder %s76, %s79
    %p88 = scmp.eq.s32.totalorder %s21, 3
    %p89 = por %p87, %p88
    %p90 = scmp.ne.s32.totalorder %s79, %s80
    %p91 = scmp.eq.s32.totalorder %s21, 0
    %p92 = por %p90, %p91
    %p93 = scmp.ne.s32.totalorder %s79, %s80
    %p94 = scmp.eq.s32.totalorder %s22, 3
    %p95 = por %p93, %p94
    %p97 = scmp.ne.s32.totalorder %s80, %s96
    %p98 = scmp.eq.s32.totalorder %s22, 0
    %p99 = por %p97, %p98
    %s101 = sadd.s32 %s100, 1
    %p104 = scmp.eq.s32.totalorder %s16, 3
    %p105 = scmp.ne.s32.totalorder %s100, %s102
    %p106 = scmp.eq.s32.totalorder %s16, 0
    %p107 = por %p105, %p106
    %p108 = scmp.ne.s32.totalorder %s100, %s102
    %p109 = scmp.eq.s32.totalorder %s21, 3
    %p110 = por %p108, %p109
    %p111 = scmp.ne.s32.totalorder %s102, %s103
    %p112 = scmp.eq.s32.totalorder %s21, 0
    %p113 = por %p111, %p112
    %p114 = scmp.ne.s32.totalorder %s102, %s103
    %p115 = scmp.eq.s32.totalorder %s22, 3
    %p116 = por %p114, %p115
    %p118 = scmp.ne.s32.totalorder %s103, %s117
    %p119 = scmp.eq.s32.totalorder %s22, 0
    %p120 = por %p118, %p119
    %s122 = sadd.s32 %s121, 1
    %p125 = scmp.eq.s32.totalorder %s16, 3
    %p126 = scmp.ne.s32.totalorder %s121, %s123
    %p127 = scmp.eq.s32.totalorder %s16, 0
    %p128 = por %p126, %p127
    %p129 = scmp.ne.s32.totalorder %s121, %s123
    %p130 = scmp.eq.s32.totalorder %s21, 3
    %p131 = por %p129, %p130
    %p132 = scmp.ne.s32.totalorder %s123, %s124
    %p133 = scmp.eq.s32.totalorder %s21, 0
    %p134 = por %p132, %p133
    %p135 = scmp.ne.s32.totalorder %s123, %s124
    %p136 = scmp.eq.s32.totalorder %s22, 3
    %p137 = por %p135, %p136
    %p139 = scmp.ne.s32.totalorder %s124, %s138
    %p140 = scmp.eq.s32.totalorder %s22, 0
    %p141 = por %p139, %p140
    %s143 = sadd.s32 %s142, 1
    %p146 = scmp.eq.s32.totalorder %s16, 3
    %p147 = scmp.ne.s32.totalorder %s142, %s144
    %p148 = scmp.eq.s32.totalorder %s16, 0
    %p149 = por %p147, %p148
    %p150 = scmp.ne.s32.totalorder %s142, %s144
    %p151 = scmp.eq.s32.totalorder %s21, 3
    %p152 = por %p150, %p151
    %p153 = scmp.ne.s32.totalorder %s144, %s145
    %p154 = scmp.eq.s32.totalorder %s21, 0
    %p155 = por %p153, %p154
    %p156 = scmp.ne.s32.totalorder %s144, %s145
    %p157 = scmp.eq.s32.totalorder %s22, 3
    %p158 = por %p156, %p157
    %p160 = scmp.ne.s32.totalorder %s145, %s159
    %p161 = scmp.eq.s32.totalorder %s22, 0
    %p162 = por %p160, %p161
    %s164 = sadd.s32 %s163, 1
    %p167 = scmp.eq.s32.totalorder %s16, 3
    %p168 = scmp.ne.s32.totalorder %s163, %s165
    %p169 = scmp.eq.s32.totalorder %s16, 0
    %p170 = por %p168, %p169
    %p171 = scmp.ne.s32.totalorder %s163, %s165
    %p172 = scmp.eq.s32.totalorder %s21, 3
    %p173 = por %p171, %p172
    %p174 = scmp.ne.s32.totalorder %s165, %s166
    %p175 = scmp.eq.s32.totalorder %s21, 0
    %p176 = por %p174, %p175
    %p177 = scmp.ne.s32.totalorder %s165, %s166
    %p178 = scmp.eq.s32.totalorder %s22, 3
    %p179 = por %p177, %p178
    %p181 = scmp.ne.s32.totalorder %s166, %s180
    %p182 = scmp.eq.s32.totalorder %s22, 0
    %p183 = por %p181, %p182
    %s185 = sadd.s32 %s184, 1
    %p188 = scmp.eq.s32.totalorder %s16, 3
    %p189 = scmp.ne.s32.totalorder %s184, %s186
    %p190 = scmp.eq.s32.totalorder %s16, 0
    %p191 = por %p189, %p190
    %p192 = scmp.ne.s32.totalorder %s184, %s186
    %p193 = scmp.eq.s32.totalorder %s21, 3
    %p194 = por %p192, %p193
    %p195 = scmp.ne.s32.totalorder %s186, %s187
    %p196 = scmp.eq.s32.totalorder %s21, 0
    %p197 = por %p195, %p196
    %p198 = scmp.ne.s32.totalorder %s186, %s187
    %p199 = scmp.eq.s32.totalorder %s22, 3
    %p200 = por %p198, %p199
    %p202 = scmp.ne.s32.totalorder %s187, %s201
    %p203 = scmp.eq.s32.totalorder %s22, 0
    %p204 = por %p202, %p203
    %s206 = sadd.s32 %s205, 1
    %p209 = scmp.eq.s32.totalorder %s16, 3
    %p210 = scmp.ne.s32.totalorder %s205, %s207
    %p211 = scmp.eq.s32.totalorder %s16, 0
    %p212 = por %p210, %p211
    %p213 = scmp.ne.s32.totalorder %s205, %s207
    %p214 = scmp.eq.s32.totalorder %s21, 3
    %p215 = por %p213, %p214
    %p216 = scmp.ne.s32.totalorder %s207, %s208
    %p217 = scmp.eq.s32.totalorder %s21, 0
    %p218 = por %p216, %p217
    %p219 = scmp.ne.s32.totalorder %s207, %s208
    %p220 = scmp.eq.s32.totalorder %s22, 3
    %p221 = por %p219, %p220
    %p223 = scmp.ne.s32.totalorder %s208, %s222
    %p224 = scmp.eq.s32.totalorder %s22, 0
    %p225 = por %p223, %p224
    %s227 = sadd.s32 %s226, 1
    %p230 = scmp.eq.s32.totalorder %s16, 3
    %p231 = scmp.ne.s32.totalorder %s226, %s228
    %p232 = scmp.eq.s32.totalorder %s16, 0
    %p233 = por %p231, %p232
    %p234 = scmp.ne.s32.totalorder %s226, %s228
    %p235 = scmp.eq.s32.totalorder %s21, 3
    %p236 = por %p234, %p235
    %p237 = scmp.ne.s32.totalorder %s228, %s229
    %p238 = scmp.eq.s32.totalorder %s21, 0
    %p239 = por %p237, %p238
    %p240 = scmp.ne.s32.totalorder %s228, %s229
    %p241 = scmp.eq.s32.totalorder %s22, 3
    %p242 = por %p240, %p241
    %p244 = scmp.ne.s32.totalorder %s229, %s243
    %p245 = scmp.eq.s32.totalorder %s22, 0
    %p246 = por %p244, %p245
    %s248 = sadd.s32 %s247, 1
    %p251 = scmp.eq.s32.totalorder %s16, 3
    %p252 = scmp.ne.s32.totalorder %s247, %s249
    %p253 = scmp.eq.s32.totalorder %s16, 0
    %p254 = por %p252, %p253
    %p255 = scmp.ne.s32.totalorder %s247, %s249
    %p256 = scmp.eq.s32.totalorder %s21, 3
    %p257 = por %p255, %p256
    %p258 = scmp.ne.s32.totalorder %s249, %s250
    %p259 = scmp.eq.s32.totalorder %s21, 0
    %p260 = por %p258, %p259
    %p261 = scmp.ne.s32.totalorder %s249, %s250
    %p262 = scmp.eq.s32.totalorder %s22, 3
    %p263 = por %p261, %p262
    %p265 = scmp.ne.s32.totalorder %s250, %s264
    %p266 = scmp.eq.s32.totalorder %s22, 0
    %p267 = por %p265, %p266
    %s268 = ssub.s32 %s16, %s23
    %p269 = scmp.eq.s32.totalorder %s268, 0
    %s271 = sadd.s32 %s270, 1
    %s272 = scalar_select %p269, %s270, %s271
    %p275 = pneg %p269
    %p276 = scmp.eq.s32.totalorder %s16, 3
    %p277 = por %p275, %p276
    %p278 = scmp.ne.s32.totalorder %s270, %s273
    %p279 = scmp.eq.s32.totalorder %s16, 0
    %p280 = por %p278, %p279
    %p281 = scmp.ne.s32.totalorder %s270, %s273
    %p282 = scmp.eq.s32.totalorder %s21, 3
    %p283 = por %p281, %p282
    %p284 = scmp.ne.s32.totalorder %s273, %s274
    %p285 = scmp.eq.s32.totalorder %s21, 0
    %p286 = por %p284, %p285
    %p287 = scmp.ne.s32.totalorder %s273, %s274
    %p288 = scmp.eq.s32.totalorder %s22, 3
    %p289 = por %p287, %p288
    %p291 = scmp.ne.s32.totalorder %s274, %s290
    %p292 = scmp.eq.s32.totalorder %s22, 0
    %p293 = por %p291, %p292
    %p294 = scmp.le.s32.totalorder 1, %s16
    %p295 = scmp.lt.s32.totalorder %s16, 5
    %p296 = pnand %p294, %p295
    %p297 = pneg %p296
    // Predicated region
    $region9: #{down_res_forward.1} parent=5 // pred_check
      _
    $region10: #{down_res_forward.1} parent=5 // pred_check_branch
      %299 = sbr.rel (%p296) target = $region12
    $region11: #{down_res_forward.1} parent=5 // pred_region
      %s300 = ssub.s32 %s16, 1
      // Predicated region
      $region13: #{down_res_forward.1} parent=11 // pred_check
        %p301 = pneg %p113
      $region14: #{down_res_forward.1} parent=11 // pred_check_branch
        %303 = sbr.rel (%p301) target = $region16
      $region15: #{down_res_forward.1} parent=11 // pred_region
        _
      $region16: #{down_res_forward.1} parent=11 // pred_fallthru
        _
      // Predicated region
      $region17: #{down_res_forward.1} parent=11 // pred_check
        %p304 = pneg %p134
      $region18: #{down_res_forward.1} parent=11 // pred_check_branch
        %306 = sbr.rel (%p304) target = $region20
      $region19: #{down_res_forward.1} parent=11 // pred_region
        _
      $region20: #{down_res_forward.1} parent=11 // pred_fallthru
        _
      // Predicated region
      $region21: #{down_res_forward.1} parent=11 // pred_check
        %p307 = pneg %p155
      $region22: #{down_res_forward.1} parent=11 // pred_check_branch
        %309 = sbr.rel (%p307) target = $region24
      $region23: #{down_res_forward.1} parent=11 // pred_region
        _
      $region24: #{down_res_forward.1} parent=11 // pred_fallthru
        _
      // Predicated region
      $region25: #{down_res_forward.1} parent=11 // pred_check
        %p310 = pneg %p176
      $region26: #{down_res_forward.1} parent=11 // pred_check_branch
        %312 = sbr.rel (%p310) target = $region28
      $region27: #{down_res_forward.1} parent=11 // pred_region
        _
      $region28: #{down_res_forward.1} parent=11 // pred_fallthru
        _
      // Predicated region
      $region29: #{down_res_forward.1} parent=11 // pred_check
        %p313 = pneg %p197
      $region30: #{down_res_forward.1} parent=11 // pred_check_branch
        %315 = sbr.rel (%p313) target = $region32
      $region31: #{down_res_forward.1} parent=11 // pred_region
        _
      $region32: #{down_res_forward.1} parent=11 // pred_fallthru
        _
      // Predicated region
      $region33: #{down_res_forward.1} parent=11 // pred_check
        %p316 = pneg %p218
      $region34: #{down_res_forward.1} parent=11 // pred_check_branch
        %318 = sbr.rel (%p316) target = $region36
      $region35: #{down_res_forward.1} parent=11 // pred_region
        _
      $region36: #{down_res_forward.1} parent=11 // pred_fallthru
        _
      // Predicated region
      $region37: #{down_res_forward.1} parent=11 // pred_check
        %p319 = pneg %p239
      $region38: #{down_res_forward.1} parent=11 // pred_check_branch
        %321 = sbr.rel (%p319) target = $region40
      $region39: #{down_res_forward.1} parent=11 // pred_region
        _
      $region40: #{down_res_forward.1} parent=11 // pred_fallthru
        _
      // Predicated region
      $region41: #{down_res_forward.1} parent=11 // pred_check
        %p322 = pneg %p260
      $region42: #{down_res_forward.1} parent=11 // pred_check_branch
        %324 = sbr.rel (%p322) target = $region44
      $region43: #{down_res_forward.1} parent=11 // pred_region
        _
      $region44: #{down_res_forward.1} parent=11 // pred_fallthru
        _
    $region12: #{down_res_forward.1} parent=5 // pred_fallthru
      _
    %p325 = scmp.lt.s32.totalorder %s16, 4
    // Predicated region
    $region45: #{down_res_forward.1} parent=5 // pred_check
      %p326 = pneg %p325
    $region46: #{down_res_forward.1} parent=5 // pred_check_branch
      %328 = sbr.rel (%p326) target = $region48
    $region47: #{down_res_forward.1} parent=5 // pred_region
      // Predicated region
      $region49: #{down_res_forward.1} parent=47 // pred_check
        %p329 = pneg %p36
      $region50: #{down_res_forward.1} parent=47 // pred_check_branch
        %331 = sbr.rel (%p329) target = $region52
      $region51: #{down_res_forward.1} parent=47 // pred_region
        %p332 = scmp.lt.s32.totalorder %s16, 3
        %s333 = scalar_select %p332, %s16, 3
        %s334 = smul.addr %s333, 40
        %s335 = smul.addr %s334, 4
        %s336 = scalar_lea.vmem %s0, %s335
      $region52: #{down_res_forward.1} parent=47 // pred_fallthru
        _
      // Predicated region
      $region53: #{down_res_forward.1} parent=47 // pred_check
        %p337 = pneg %p86
      $region54: #{down_res_forward.1} parent=47 // pred_check_branch
        %339 = sbr.rel (%p337) target = $region56
      $region55: #{down_res_forward.1} parent=47 // pred_region
        %p340 = scmp.lt.s32.totalorder %s16, 0
        %s341 = ssub.s32 0, %s16
        %s342 = scalar_select %p340, %s341, %s16
        %s343 = sand.u32 %s342, 1
        %s344 = ssub.s32 0, %s343
        %s345 = scalar_select %p340, %s344, %s343
        %p346 = scmp.ne.s32.totalorder %s345, 0
        %p347 = scmp.lt.s32.totalorder %s345, 0
        %p348 = pnand %p347, %p346
        %p349 = pneg %p348
        %s350 = sadd.s32 %s345, 2
        %s351 = scalar_select %p349, %s350, %s345
        %p352 = scmp.lt.s32.totalorder %s351, 1
        %s353 = scalar_select %p352, %s351, 1
        %s354 = smul.addr %s353, 12
        %s355 = smul.addr %s354, 8
        %s356 = scalar_lea.vmem %s1, %s355
        %p357 = scmp.lt.s32.totalorder %s16, 0
        %s358 = ssub.s32 0, %s16
        %s359 = scalar_select %p357, %s358, %s16
        %s360 = sand.u32 %s359, 1
        %s361 = ssub.s32 0, %s360
        %s362 = scalar_select %p357, %s361, %s360
        %p363 = scmp.ne.s32.totalorder %s362, 0
        %p364 = scmp.lt.s32.totalorder %s362, 0
        %p365 = pnand %p364, %p363
        %p366 = pneg %p365
        %s367 = sadd.s32 %s362, 2
        %s368 = scalar_select %p366, %s367, %s362
      $region56: #{down_res_forward.1} parent=47 // pred_fallthru
        _
    $region48: #{down_res_forward.1} parent=5 // pred_fallthru
      _
    %p369 = scmp.le.s32.totalorder 1, %s16
    %p370 = scmp.lt.s32.totalorder %s16, 5
    %p371 = pnand %p369, %p370
    %p372 = pneg %p371
    // Predicated region
    $region57: #{down_res_forward.1} parent=5 // pred_check
      _
    $region58: #{down_res_forward.1} parent=5 // pred_check_branch
      %374 = sbr.rel (%p371) target = $region60
    $region59: #{down_res_forward.1} parent=5 // pred_region
      %s375 = ssub.s32 %s16, 1
      %p376 = scmp.lt.s32.totalorder %s21, 3
      %s377 = scalar_select %p376, %s21, 3
      %s378 = smul.addr %s377, 40
      %s379 = smul.addr %s378, 4
      %s380 = scalar_lea.vmem %s0, %s379
      %p381 = pneg %p42
      %p382 = pneg %p39
      %p383 = scmp.lt.s32.totalorder %s21, 0
      %s384 = ssub.s32 0, %s21
      %s385 = scalar_select %p383, %s384, %s21
      %s386 = sand.u32 %s385, 1
      %s387 = ssub.s32 0, %s386
      %s388 = scalar_select %p383, %s387, %s386
      %p389 = scmp.ne.s32.totalorder %s388, 0
      %p390 = scmp.lt.s32.totalorder %s388, 0
      %p391 = pnand %p390, %p389
      %p392 = pneg %p391
      %s393 = sadd.s32 %s388, 2
      %s394 = scalar_select %p392, %s393, %s388
      %p395 = scmp.lt.s32.totalorder %s394, 1
      %s396 = scalar_select %p395, %s394, 1
      %s397 = smul.addr %s396, 12
      %s398 = smul.addr %s397, 8
      %s399 = scalar_lea.vmem %s1, %s398
      %p400 = pneg %p92
      %p401 = pneg %p89
      %p402 = pneg %p113
      %p403 = pneg %p110
      %p404 = pneg %p134
      %p405 = pneg %p131
      %p406 = pneg %p155
      %p407 = pneg %p152
      %p408 = pneg %p176
      %p409 = pneg %p173
      %p410 = pneg %p197
      %p411 = pneg %p194
      %p412 = pneg %p218
      %p413 = pneg %p215
      %p414 = pneg %p239
      %p415 = pneg %p236
      %p416 = pneg %p260
      %p417 = pneg %p257
      %p418 = pneg %p286
      %p419 = pneg %p283
      %p420 = scmp.lt.s32.totalorder %s21, 3
      %s421 = scalar_select %p420, %s21, 3
      %s422 = smul.addr %s421, 4
      %s423 = smul.addr %s422, 8
      %s424 = scalar_lea.vmem %s10, %s423
      %p425 = scmp.lt.s32.totalorder %s21, 3
      %s426 = scalar_select %p425, %s21, 3
      %s427 = smul.addr %s426, 40
      %s428 = smul.addr %s427, 4
      %s429 = scalar_lea.vmem %s0, %s428
      %p430 = scmp.lt.s32.totalorder %s21, 0
      %s431 = ssub.s32 0, %s21
      %s432 = scalar_select %p430, %s431, %s21
      %s433 = sand.u32 %s432, 1
      %s434 = ssub.s32 0, %s433
      %s435 = scalar_select %p430, %s434, %s433
      %p436 = scmp.ne.s32.totalorder %s435, 0
      %p437 = scmp.lt.s32.totalorder %s435, 0
      %p438 = pnand %p437, %p436
      %p439 = pneg %p438
      %s440 = sadd.s32 %s435, 2
      %s441 = scalar_select %p439, %s440, %s435
      %p442 = scmp.lt.s32.totalorder %s441, 1
      %s443 = scalar_select %p442, %s441, 1
      %s444 = smul.addr %s443, 12
      %s445 = smul.addr %s444, 8
      %s446 = scalar_lea.vmem %s1, %s445
      %p447 = scmp.lt.s32.totalorder %s21, 0
      %s448 = ssub.s32 0, %s21
      %s449 = scalar_select %p447, %s448, %s21
      %s450 = sand.u32 %s449, 1
      %s451 = ssub.s32 0, %s450
      %s452 = scalar_select %p447, %s451, %s450
      %p453 = scmp.ne.s32.totalorder %s452, 0
      %p454 = scmp.lt.s32.totalorder %s452, 0
      %p455 = pnand %p454, %p453
      %p456 = pneg %p455
      %s457 = sadd.s32 %s452, 2
      %s458 = scalar_select %p456, %s457, %s452
      %p459 = scmp.lt.s32.totalorder %s21, 3
      %s460 = scalar_select %p459, %s21, 3
      %s461 = smul.addr %s460, 4
      %s462 = smul.addr %s461, 8
      %s463 = scalar_lea.vmem %s10, %s462
      %v465 = vld [vmem:[%s429] sm:$0xf]
      %v466 = vld [vmem:[%s429 + $0x4] sm:$0xf]
      %v467 = vld [vmem:[%s429 + $0x8] sm:$0xf]
      %v468 = vld [vmem:[%s429 + $0xc] sm:$0xf]
      %v469 = vld [vmem:[%s429 + $0x10] sm:$0x3]
      %v470 = vld [vmem:[%s429 + $0x14] sm:$0xf]
      %v471 = vld [vmem:[%s429 + $0x18] sm:$0xf]
      %v472 = vld [vmem:[%s429 + $0x1c] sm:$0xf]
      %v473 = vld [vmem:[%s429 + $0x20] sm:$0xf]
      %v474 = vld [vmem:[%s429 + $0x24] sm:$0x3]
      %v475 = vld [vmem:[%s429 + $0x28] sm:$0xf]
      %v476 = vld [vmem:[%s429 + $0x2c] sm:$0xf]
      %v477 = vld [vmem:[%s429 + $0x30] sm:$0xf]
      %v478 = vld [vmem:[%s429 + $0x34] sm:$0xf]
      %v479 = vld [vmem:[%s429 + $0x38] sm:$0x3]
      %v480 = vld [vmem:[%s429 + $0x3c] sm:$0xf]
      %v481 = vld [vmem:[%s429 + $0x40] sm:$0xf]
      %v482 = vld [vmem:[%s429 + $0x44] sm:$0xf]
      %v483 = vld [vmem:[%s429 + $0x48] sm:$0xf]
      %v484 = vld [vmem:[%s429 + $0x4c] sm:$0x3]
      %v485 = vld [vmem:[%s429 + $0x50] sm:$0xf]
      %v486 = vld [vmem:[%s429 + $0x54] sm:$0xf]
      %v487 = vld [vmem:[%s429 + $0x58] sm:$0xf]
      %v488 = vld [vmem:[%s429 + $0x5c] sm:$0xf]
      %v489 = vld [vmem:[%s429 + $0x60] sm:$0x3]
      %v490 = vld [vmem:[%s429 + $0x64] sm:$0xf]
      %v491 = vld [vmem:[%s429 + $0x68] sm:$0xf]
      %v492 = vld [vmem:[%s429 + $0x6c] sm:$0xf]
      %v493 = vld [vmem:[%s429 + $0x70] sm:$0xf]
      %v494 = vld [vmem:[%s429 + $0x74] sm:$0x3]
      %v495 = vld [vmem:[%s429 + $0x78] sm:$0xf]
      %v496 = vld [vmem:[%s429 + $0x7c] sm:$0xf]
      %v497 = vld [vmem:[%s429 + $0x80] sm:$0xf]
      %v498 = vld [vmem:[%s429 + $0x84] sm:$0xf]
      %v499 = vld [vmem:[%s429 + $0x88] sm:$0x3]
      %v500 = vld [vmem:[%s429 + $0x8c] sm:$0xf]
      %v501 = vld [vmem:[%s429 + $0x90] sm:$0xf]
      %v502 = vld [vmem:[%s429 + $0x94] sm:$0xf]
      %v503 = vld [vmem:[%s429 + $0x98] sm:$0xf]
      %v504 = vld [vmem:[%s429 + $0x9c] sm:$0x3]
      %vm529 = vcmask 1042432
      %vm530 = vcmask 1046532
      %vm531 = vmor %vm529, %vm530
      %v532 = vrot.slane %v467, 5
      %v533 = vrot.slane %v532, 4
      %v534 = vrot.slane %v468, 5
      %v535 = vsel %vm531, %v533, %v534
      %v536 = vrot.slane %v534, 4
      %v537 = vrot.slane %v469, 5
      %v538 = vsel %vm531, %v536, %v537
      %v539 = vrot.slane %v537, 4
      %v540 = vrot.slane %v472, 5
      %v541 = vrot.slane %v540, 4
      %v542 = vrot.slane %v473, 5
      %v543 = vsel %vm531, %v541, %v542
      %v544 = vrot.slane %v542, 4
      %v545 = vrot.slane %v474, 5
      %v546 = vsel %vm531, %v544, %v545
      %v547 = vrot.slane %v545, 4
      %v548 = vrot.slane %v477, 5
      %v549 = vrot.slane %v548, 4
      %v550 = vrot.slane %v478, 5
      %v551 = vsel %vm531, %v549, %v550
      %v552 = vrot.slane %v550, 4
      %v553 = vrot.slane %v479, 5
      %v554 = vsel %vm531, %v552, %v553
      %v555 = vrot.slane %v553, 4
      %v556 = vrot.slane %v482, 5
      %v557 = vrot.slane %v556, 4
      %v558 = vrot.slane %v483, 5
      %v559 = vsel %vm531, %v557, %v558
      %v560 = vrot.slane %v558, 4
      %v561 = vrot.slane %v484, 5
      %v562 = vsel %vm531, %v560, %v561
      %v563 = vrot.slane %v561, 4
      %v564 = vrot.slane %v487, 5
      %v565 = vrot.slane %v564, 4
      %v566 = vrot.slane %v488, 5
      %v567 = vsel %vm531, %v565, %v566
      %v568 = vrot.slane %v566, 4
      %v569 = vrot.slane %v489, 5
      %v570 = vsel %vm531, %v568, %v569
      %v571 = vrot.slane %v569, 4
      %v572 = vrot.slane %v492, 5
      %v573 = vrot.slane %v572, 4
      %v574 = vrot.slane %v493, 5
      %v575 = vsel %vm531, %v573, %v574
      %v576 = vrot.slane %v574, 4
      %v577 = vrot.slane %v494, 5
      %v578 = vsel %vm531, %v576, %v577
      %v579 = vrot.slane %v577, 4
      %v580 = vrot.slane %v497, 5
      %v581 = vrot.slane %v580, 4
      %v582 = vrot.slane %v498, 5
      %v583 = vsel %vm531, %v581, %v582
      %v584 = vrot.slane %v582, 4
      %v585 = vrot.slane %v499, 5
      %v586 = vsel %vm531, %v584, %v585
      %v587 = vrot.slane %v585, 4
      %v588 = vrot.slane %v502, 5
      %v589 = vrot.slane %v588, 4
      %v590 = vrot.slane %v503, 5
      %v591 = vsel %vm531, %v589, %v590
      %v592 = vrot.slane %v590, 4
      %v593 = vrot.slane %v504, 5
      %v594 = vsel %vm531, %v592, %v593
      %v595 = vrot.slane %v593, 4
      %v620 = vmax.bf16 %v465, %v535
      %v621 = vmax.bf16 %v466, %v538
      %v622 = vmax.bf16 %v467, %v539
      %v623 = vmax.bf16 %v470, %v543
      %v624 = vmax.bf16 %v471, %v546
      %v625 = vmax.bf16 %v472, %v547
      %v626 = vmax.bf16 %v475, %v551
      %v627 = vmax.bf16 %v476, %v554
      %v628 = vmax.bf16 %v477, %v555
      %v629 = vmax.bf16 %v480, %v559
      %v630 = vmax.bf16 %v481, %v562
      %v631 = vmax.bf16 %v482, %v563
      %v632 = vmax.bf16 %v485, %v567
      %v633 = vmax.bf16 %v486, %v570
      %v634 = vmax.bf16 %v487, %v571
      %v635 = vmax.bf16 %v490, %v575
      %v636 = vmax.bf16 %v491, %v578
      %v637 = vmax.bf16 %v492, %v579
      %v638 = vmax.bf16 %v495, %v583
      %v639 = vmax.bf16 %v496, %v586
      %v640 = vmax.bf16 %v497, %v587
      %v641 = vmax.bf16 %v500, %v591
      %v642 = vmax.bf16 %v501, %v594
      %v643 = vmax.bf16 %v502, %v595
      %668 = vrot.lane.b32.xlu0 %v620, 64
      %v669 = vpop.permute.xlu0 %668
      %670 = vrot.lane.b32.xlu0 %v621, 64
      %v671 = vpop.permute.xlu0 %670
      %672 = vrot.lane.b32.xlu0 %v622, 64
      %v673 = vpop.permute.xlu0 %672
      %674 = vrot.lane.b32.xlu0 %v623, 64
      %v675 = vpop.permute.xlu0 %674
      %676 = vrot.lane.b32.xlu0 %v624, 64
      %v677 = vpop.permute.xlu0 %676
      %678 = vrot.lane.b32.xlu0 %v625, 64
      %v679 = vpop.permute.xlu0 %678
      %680 = vrot.lane.b32.xlu0 %v626, 64
      %v681 = vpop.permute.xlu0 %680
      %682 = vrot.lane.b32.xlu0 %v627, 64
      %v683 = vpop.permute.xlu0 %682
      %684 = vrot.lane.b32.xlu0 %v628, 64
      %v685 = vpop.permute.xlu0 %684
      %686 = vrot.lane.b32.xlu0 %v629, 64
      %v687 = vpop.permute.xlu0 %686
      %688 = vrot.lane.b32.xlu0 %v630, 64
      %v689 = vpop.permute.xlu0 %688
      %690 = vrot.lane.b32.xlu0 %v631, 64
      %v691 = vpop.permute.xlu0 %690
      %692 = vrot.lane.b32.xlu0 %v632, 64
      %v693 = vpop.permute.xlu0 %692
      %694 = vrot.lane.b32.xlu0 %v633, 64
      %v695 = vpop.permute.xlu0 %694
      %696 = vrot.lane.b32.xlu0 %v634, 64
      %v697 = vpop.permute.xlu0 %696
      %698 = vrot.lane.b32.xlu0 %v635, 64
      %v699 = vpop.permute.xlu0 %698
      %700 = vrot.lane.b32.xlu0 %v636, 64
      %v701 = vpop.permute.xlu0 %700
      %702 = vrot.lane.b32.xlu0 %v637, 64
      %v703 = vpop.permute.xlu0 %702
      %704 = vrot.lane.b32.xlu0 %v638, 64
      %v705 = vpop.permute.xlu0 %704
      %706 = vrot.lane.b32.xlu0 %v639, 64
      %v707 = vpop.permute.xlu0 %706
      %708 = vrot.lane.b32.xlu0 %v640, 64
      %v709 = vpop.permute.xlu0 %708
      %710 = vrot.lane.b32.xlu0 %v641, 64
      %v711 = vpop.permute.xlu0 %710
      %712 = vrot.lane.b32.xlu0 %v642, 64
      %v713 = vpop.permute.xlu0 %712
      %714 = vrot.lane.b32.xlu0 %v643, 64
      %v715 = vpop.permute.xlu0 %714
      %v740 = vmax.bf16 %v620, %v669
      %v741 = vmax.bf16 %v621, %v671
      %v742 = vmax.bf16 %v622, %v673
      %v743 = vmax.bf16 %v623, %v675
      %v744 = vmax.bf16 %v624, %v677
      %v745 = vmax.bf16 %v625, %v679
      %v746 = vmax.bf16 %v626, %v681
      %v747 = vmax.bf16 %v627, %v683
      %v748 = vmax.bf16 %v628, %v685
      %v749 = vmax.bf16 %v629, %v687
      %v750 = vmax.bf16 %v630, %v689
      %v751 = vmax.bf16 %v631, %v691
      %v752 = vmax.bf16 %v632, %v693
      %v753 = vmax.bf16 %v633, %v695
      %v754 = vmax.bf16 %v634, %v697
      %v755 = vmax.bf16 %v635, %v699
      %v756 = vmax.bf16 %v636, %v701
      %v757 = vmax.bf16 %v637, %v703
      %v758 = vmax.bf16 %v638, %v705
      %v759 = vmax.bf16 %v639, %v707
      %v760 = vmax.bf16 %v640, %v709
      %v761 = vmax.bf16 %v641, %v711
      %v762 = vmax.bf16 %v642, %v713
      %v763 = vmax.bf16 %v643, %v715
      %v764 = vld [vmem:[%s2] sm:$0xf]
      %v765 = vld [vmem:[%s2 + $0x4] sm:$0xf]
      %v766 = vld [vmem:[%s2 + $0x8] sm:$0xf]
      %v767 = vld [vmem:[%s2 + $0xc] sm:$0xf]
      %v768 = vld [vmem:[%s2 + $0x10] sm:$0xf]
      %v769 = vld [vmem:[%s2 + $0x14] sm:$0xf]
      %v770 = vld [vmem:[%s2 + $0x18] sm:$0xf]
      %v771 = vld [vmem:[%s2 + $0x1c] sm:$0xf]
      %vm772 = vsmask.f32 3328
      %vm773 = vsmask.f32 7440
      %vm774 = vmor %vm772, %vm773
      %v776 = vshrl.u32 %v740, 16
      %v778 = vrot.slane %v776, 4
      %v779 = vshll.u32 %v740, 16
      %v781 = vrot.slane %v779, 5
      %v782 = vor.u32 %v778, %v781
      %v783 = vrot.slane %v782, 4
      %v785 = vshll.u32 %v741, 16
      %v787 = vrot.slane %v785, 5
      %v788 = vsel %vm774, %v783, %v787
      %v789 = vshrl.u32 %v741, 16
      %v791 = vrot.slane %v789, 4
      %v792 = vor.u32 %v791, %v787
      %v793 = vrot.slane %v792, 4
      %v795 = vshll.u32 %v742, 16
      %v797 = vrot.slane %v795, 5
      %v798 = vsel %vm774, %v793, %v797
      %v800 = vshrl.u32 %v743, 16
      %v802 = vrot.slane %v800, 4
      %v803 = vshll.u32 %v743, 16
      %v805 = vrot.slane %v803, 5
      %v806 = vor.u32 %v802, %v805
      %v807 = vrot.slane %v806, 4
      %v809 = vshll.u32 %v744, 16
      %v811 = vrot.slane %v809, 5
      %v812 = vsel %vm774, %v807, %v811
      %v813 = vshrl.u32 %v744, 16
      %v815 = vrot.slane %v813, 4
      %v816 = vor.u32 %v815, %v811
      %v817 = vrot.slane %v816, 4
      %v819 = vshll.u32 %v745, 16
      %v821 = vrot.slane %v819, 5
      %v822 = vsel %vm774, %v817, %v821
      %v824 = vshrl.u32 %v746, 16
      %v826 = vrot.slane %v824, 4
      %v827 = vshll.u32 %v746, 16
      %v829 = vrot.slane %v827, 5
      %v830 = vor.u32 %v826, %v829
      %v831 = vrot.slane %v830, 4
      %v833 = vshll.u32 %v747, 16
      %v835 = vrot.slane %v833, 5
      %v836 = vsel %vm774, %v831, %v835
      %v837 = vshrl.u32 %v747, 16
      %v839 = vrot.slane %v837, 4
      %v840 = vor.u32 %v839, %v835
      %v841 = vrot.slane %v840, 4
      %v843 = vshll.u32 %v748, 16
      %v845 = vrot.slane %v843, 5
      %v846 = vsel %vm774, %v841, %v845
      %v848 = vshrl.u32 %v749, 16
      %v850 = vrot.slane %v848, 4
      %v851 = vshll.u32 %v749, 16
      %v853 = vrot.slane %v851, 5
      %v854 = vor.u32 %v850, %v853
      %v855 = vrot.slane %v854, 4
      %v857 = vshll.u32 %v750, 16
      %v859 = vrot.slane %v857, 5
      %v860 = vsel %vm774, %v855, %v859
      %v861 = vshrl.u32 %v750, 16
      %v863 = vrot.slane %v861, 4
      %v864 = vor.u32 %v863, %v859
      %v865 = vrot.slane %v864, 4
      %v867 = vshll.u32 %v751, 16
      %v869 = vrot.slane %v867, 5
      %v870 = vsel %vm774, %v865, %v869
      %v872 = vshrl.u32 %v752, 16
      %v874 = vrot.slane %v872, 4
      %v875 = vshll.u32 %v752, 16
      %v877 = vrot.slane %v875, 5
      %v878 = vor.u32 %v874, %v877
      %v879 = vrot.slane %v878, 4
      %v881 = vshll.u32 %v753, 16
      %v883 = vrot.slane %v881, 5
      %v884 = vsel %vm774, %v879, %v883
      %v885 = vshrl.u32 %v753, 16
      %v887 = vrot.slane %v885, 4
      %v888 = vor.u32 %v887, %v883
      %v889 = vrot.slane %v888, 4
      %v891 = vshll.u32 %v754, 16
      %v893 = vrot.slane %v891, 5
      %v894 = vsel %vm774, %v889, %v893
      %v896 = vshrl.u32 %v755, 16
      %v898 = vrot.slane %v896, 4
      %v899 = vshll.u32 %v755, 16
      %v901 = vrot.slane %v899, 5
      %v902 = vor.u32 %v898, %v901
      %v903 = vrot.slane %v902, 4
      %v905 = vshll.u32 %v756, 16
      %v907 = vrot.slane %v905, 5
      %v908 = vsel %vm774, %v903, %v907
      %v909 = vshrl.u32 %v756, 16
      %v911 = vrot.slane %v909, 4
      %v912 = vor.u32 %v911, %v907
      %v913 = vrot.slane %v912, 4
      %v915 = vshll.u32 %v757, 16
      %v917 = vrot.slane %v915, 5
      %v918 = vsel %vm774, %v913, %v917
      %v919 = vld [vmem:[%s2 + $0x20] sm:$0xf]
      %v920 = vld [vmem:[%s2 + $0x24] sm:$0xf]
      %v921 = vld [vmem:[%s2 + $0x28] sm:$0xf]
      %v922 = vld [vmem:[%s2 + $0x2c] sm:$0xf]
      %v923 = vld [vmem:[%s2 + $0x30] sm:$0xf]
      %v924 = vld [vmem:[%s2 + $0x34] sm:$0xf]
      %v925 = vld [vmem:[%s2 + $0x38] sm:$0xf]
      %v926 = vld [vmem:[%s2 + $0x3c] sm:$0xf]
      %v927 = vunpack.c.l.b16 %v788
      %v928 = vunpack.c.l.b16 %v798
      %v929 = vunpack.c.l.b16 %v812
      %v930 = vunpack.c.l.b16 %v822
      %v931 = vunpack.c.l.b16 %v836
      %v932 = vunpack.c.l.b16 %v846
      %v933 = vunpack.c.l.b16 %v860
      %v934 = vunpack.c.l.b16 %v870
      %v935 = vunpack.c.l.b16 %v884
      %v936 = vunpack.c.l.b16 %v894
      %v937 = vunpack.c.l.b16 %v908
      %v938 = vunpack.c.l.b16 %v918
      %v939 = vpack.c.b16 %v928, %v927
      %v940 = vpack.c.b16 %v930, %v929
      %v941 = vpack.c.b16 %v932, %v931
      %v942 = vpack.c.b16 %v934, %v933
      %v943 = vpack.c.b16 %v936, %v935
      %v944 = vpack.c.b16 %v938, %v937
      %v953 = vunpack.c.l.b16 %v919
      %v954 = vunpack.c.l.b16 %v920
      %v955 = vunpack.c.l.b16 %v921
      %v956 = vunpack.c.l.b16 %v922
      %v957 = vunpack.c.l.b16 %v923
      %v958 = vunpack.c.l.b16 %v924
      %v959 = vunpack.c.l.b16 %v925
      %v960 = vunpack.c.l.b16 %v926
      %v961 = vpack.c.b16 %v954, %v953
      %v962 = vpack.c.b16 %v956, %v955
      %v963 = vpack.c.b16 %v958, %v957
      %v964 = vpack.c.b16 %v960, %v959
      %vm969 = vcmask 523264
      %v971 = vsel %vm969, %v939, 0
      %v974 = vsel %vm969, %v940, 0
      %v977 = vsel %vm969, %v941, 0
      %v980 = vsel %vm969, %v942, 0
      %v983 = vsel %vm969, %v943, 0
      %v986 = vsel %vm969, %v944, 0
      %988 = vmatprep.subr.bf16.mxu0 0
      %989 = vmatpush1.bf16.msra.mxu0 0
      %990 = vmatprep.subr.bf16.mxu0 0
      %991 = vmatpush1.bf16.msra.mxu0 0
      %992 = vmatprep.subr.bf16.mxu0 0
      %993 = vmatpush1.bf16.msra.mxu0 0
      %994 = vmatprep.subr.bf16.mxu0 0
      %995 = vmatpush1.bf16.msra.mxu0 0
      %996 = vmatprep.subr.bf16.mxu0 0
      %997 = vmatpush1.bf16.msra.mxu0 %v964
      %998 = vmatprep.subr.bf16.mxu0 0
      %999 = vmatpush1.bf16.msra.mxu0 %v963
      %1000 = vmatprep.subr.bf16.mxu0 0
      %1001 = vmatpush1.bf16.msra.mxu0 %v962
      %1002 = vmatprep.subr.bf16.mxu0 0
      %1003 = vmatpush1.bf16.msra.mxu0 %v961
      %1004 = vmatprep.subr.bf16.mxu0 0
      %1005 = vmatpush2.bf16.msra.mxu0 0
      %1006 = vmatprep.subr.bf16.mxu0 0
      %1007 = vmatpush2.bf16.msra.mxu0 0
      %1008 = vmatprep.subr.bf16.mxu0 0
      %1009 = vmatpush2.bf16.msra.mxu0 0
      %1010 = vmatprep.subr.bf16.mxu0 0
      %1011 = vmatpush2.bf16.msra.mxu0 0
      %1012 = vmatprep.subr.bf16.mxu0 0
      %1013 = vmatpush2.bf16.msra.mxu0 0
      %1014 = vmatprep.subr.bf16.mxu0 0
      %1015 = vmatpush2.bf16.msra.mxu0 0
      %1016 = vmatprep.subr.bf16.mxu0 0
      %1017 = vmatpush2.bf16.msra.mxu0 0
      %1018 = vmatprep.subr.bf16.mxu0 0
      %1019 = vmatpush2.bf16.msra.mxu0 0
      %1020 = vmatprep.mubr.bf16.mxu0 0
      %1021 = vmatmul.mubr.bf16.gmra.mxu0 %v971
      %v1022 = vpop.f32.mrf.mxu0
      %v1023 = vadd.f32 0.0, %v1022
      %v1024 = vpop.f32.mrf.mxu0
      %v1025 = vpop.f32.mrf.mxu0
      %v1026 = vadd.f32 0.0, %v1025
      %v1027 = vpop.f32.mrf.mxu0
      %1028 = vmatprep.mubr.bf16.mxu0 0
      %1029 = vmatmul.mubr.bf16.gmra.mxu0 %v974
      %v1030 = vpop.f32.mrf.mxu0
      %v1031 = vadd.f32 0.0, %v1030
      %v1032 = vpop.f32.mrf.mxu0
      %v1033 = vpop.f32.mrf.mxu0
      %v1034 = vadd.f32 0.0, %v1033
      %v1035 = vpop.f32.mrf.mxu0
      %1036 = vmatprep.mubr.bf16.mxu0 0
      %1037 = vmatmul.mubr.bf16.gmra.mxu0 %v977
      %v1038 = vpop.f32.mrf.mxu0
      %v1039 = vadd.f32 0.0, %v1038
      %v1040 = vpop.f32.mrf.mxu0
      %v1041 = vpop.f32.mrf.mxu0
      %v1042 = vadd.f32 0.0, %v1041
      %v1043 = vpop.f32.mrf.mxu0
      %1044 = vmatprep.mubr.bf16.mxu0 0
      %1045 = vmatmul.mubr.bf16.gmra.mxu0 %v980
      %v1046 = vpop.f32.mrf.mxu0
      %v1047 = vadd.f32 0.0, %v1046
      %v1048 = vpop.f32.mrf.mxu0
      %v1049 = vpop.f32.mrf.mxu0
      %v1050 = vadd.f32 0.0, %v1049
      %v1051 = vpop.f32.mrf.mxu0
      %1052 = vmatprep.mubr.bf16.mxu0 0
      %1053 = vmatmul.mubr.bf16.gmra.mxu0 %v983
      %v1054 = vpop.f32.mrf.mxu0
      %v1055 = vadd.f32 0.0, %v1054
      %v1056 = vpop.f32.mrf.mxu0
      %v1057 = vpop.f32.mrf.mxu0
      %v1058 = vadd.f32 0.0, %v1057
      %v1059 = vpop.f32.mrf.mxu0
      %1060 = vmatprep.mubr.bf16.mxu0 0
      %1061 = vmatmul.mubr.bf16.gmra.mxu0 %v986
      %v1062 = vpop.f32.mrf.mxu0
      %v1063 = vadd.f32 0.0, %v1062
      %v1064 = vpop.f32.mrf.mxu0
      %v1065 = vpop.f32.mrf.mxu0
      %v1066 = vadd.f32 0.0, %v1065
      %v1067 = vpop.f32.mrf.mxu0
      %1068 = vdwg.mxu0
      %v1081 = vunpack.c.l.b16 %v740
      %v1082 = vunpack.c.l.b16 %v741
      %v1083 = vunpack.c.l.b16 %v743
      %v1084 = vunpack.c.l.b16 %v744
      %v1085 = vunpack.c.l.b16 %v746
      %v1086 = vunpack.c.l.b16 %v747
      %v1087 = vunpack.c.l.b16 %v749
      %v1088 = vunpack.c.l.b16 %v750
      %v1089 = vunpack.c.l.b16 %v752
      %v1090 = vunpack.c.l.b16 %v753
      %v1091 = vunpack.c.l.b16 %v755
      %v1092 = vunpack.c.l.b16 %v756
      %v1093 = vpack.c.b16 %v1082, %v1081
      %v1094 = vpack.c.b16 %v1084, %v1083
      %v1095 = vpack.c.b16 %v1086, %v1085
      %v1096 = vpack.c.b16 %v1088, %v1087
      %v1097 = vpack.c.b16 %v1090, %v1089
      %v1098 = vpack.c.b16 %v1092, %v1091
      %v1107 = vunpack.c.l.b16 %v764
      %v1108 = vunpack.c.l.b16 %v765
      %v1109 = vunpack.c.l.b16 %v766
      %v1110 = vunpack.c.l.b16 %v767
      %v1111 = vunpack.c.l.b16 %v768
      %v1112 = vunpack.c.l.b16 %v769
      %v1113 = vunpack.c.l.b16 %v770
      %v1114 = vunpack.c.l.b16 %v771
      %v1115 = vpack.c.b16 %v1108, %v1107
      %v1116 = vpack.c.b16 %v1110, %v1109
      %v1117 = vpack.c.b16 %v1112, %v1111
      %v1118 = vpack.c.b16 %v1114, %v1113
      %v1124 = vsel %vm969, %v1093, 0
      %v1127 = vsel %vm969, %v1094, 0
      %v1130 = vsel %vm969, %v1095, 0
      %v1133 = vsel %vm969, %v1096, 0
      %v1136 = vsel %vm969, %v1097, 0
      %v1139 = vsel %vm969, %v1098, 0
      %1141 = vmatprep.subr.bf16.mxu0 0
      %1142 = vmatpush1.bf16.msra.mxu0 0
      %1143 = vmatprep.subr.bf16.mxu0 0
      %1144 = vmatpush1.bf16.msra.mxu0 0
      %1145 = vmatprep.subr.bf16.mxu0 0
      %1146 = vmatpush1.bf16.msra.mxu0 0
      %1147 = vmatprep.subr.bf16.mxu0 0
      %1148 = vmatpush1.bf16.msra.mxu0 0
      %1149 = vmatprep.subr.bf16.mxu0 0
      %1150 = vmatpush1.bf16.msra.mxu0 %v1118
      %1151 = vmatprep.subr.bf16.mxu0 0
      %1152 = vmatpush1.bf16.msra.mxu0 %v1117
      %1153 = vmatprep.subr.bf16.mxu0 0
      %1154 = vmatpush1.bf16.msra.mxu0 %v1116
      %1155 = vmatprep.subr.bf16.mxu0 0
      %1156 = vmatpush1.bf16.msra.mxu0 %v1115
      %1157 = vmatprep.subr.bf16.mxu0 0
      %1158 = vmatpush2.bf16.msra.mxu0 0
      %1159 = vmatprep.subr.bf16.mxu0 0
      %1160 = vmatpush2.bf16.msra.mxu0 0
      %1161 = vmatprep.subr.bf16.mxu0 0
      %1162 = vmatpush2.bf16.msra.mxu0 0
      %1163 = vmatprep.subr.bf16.mxu0 0
      %1164 = vmatpush2.bf16.msra.mxu0 0
      %1165 = vmatprep.subr.bf16.mxu0 0
      %1166 = vmatpush2.bf16.msra.mxu0 0
      %1167 = vmatprep.subr.bf16.mxu0 0
      %1168 = vmatpush2.bf16.msra.mxu0 0
      %1169 = vmatprep.subr.bf16.mxu0 0
      %1170 = vmatpush2.bf16.msra.mxu0 0
      %1171 = vmatprep.subr.bf16.mxu0 0
      %1172 = vmatpush2.bf16.msra.mxu0 0
      %1173 = vmatprep.mubr.bf16.mxu0 0
      %1174 = vmatmul.mubr.bf16.gmra.mxu0 %v1124
      %v1175 = vpop.f32.mrf.mxu0
      %v1176 = vadd.f32 %v1023, %v1175
      %v1177 = vpop.f32.mrf.mxu0
      %v1178 = vpop.f32.mrf.mxu0
      %v1179 = vadd.f32 %v1026, %v1178
      %v1180 = vpop.f32.mrf.mxu0
      %1181 = vmatprep.mubr.bf16.mxu0 0
      %1182 = vmatmul.mubr.bf16.gmra.mxu0 %v1127
      %v1183 = vpop.f32.mrf.mxu0
      %v1184 = vadd.f32 %v1031, %v1183
      %v1185 = vpop.f32.mrf.mxu0
      %v1186 = vpop.f32.mrf.mxu0
      %v1187 = vadd.f32 %v1034, %v1186
      %v1188 = vpop.f32.mrf.mxu0
      %1189 = vmatprep.mubr.bf16.mxu0 0
      %1190 = vmatmul.mubr.bf16.gmra.mxu0 %v1130
      %v1191 = vpop.f32.mrf.mxu0
      %v1192 = vadd.f32 %v1039, %v1191
      %v1193 = vpop.f32.mrf.mxu0
      %v1194 = vpop.f32.mrf.mxu0
      %v1195 = vadd.f32 %v1042, %v1194
      %v1196 = vpop.f32.mrf.mxu0
      %1197 = vmatprep.mubr.bf16.mxu0 0
      %1198 = vmatmul.mubr.bf16.gmra.mxu0 %v1133
      %v1199 = vpop.f32.mrf.mxu0
      %v1200 = vadd.f32 %v1047, %v1199
      %v1201 = vpop.f32.mrf.mxu0
      %v1202 = vpop.f32.mrf.mxu0
      %v1203 = vadd.f32 %v1050, %v1202
      %v1204 = vpop.f32.mrf.mxu0
      %1205 = vmatprep.mubr.bf16.mxu0 0
      %1206 = vmatmul.mubr.bf16.gmra.mxu0 %v1136
      %v1207 = vpop.f32.mrf.mxu0
      %v1208 = vadd.f32 %v1055, %v1207
      %v1209 = vpop.f32.mrf.mxu0
      %v1210 = vpop.f32.mrf.mxu0
      %v1211 = vadd.f32 %v1058, %v1210
      %v1212 = vpop.f32.mrf.mxu0
      %1213 = vmatprep.mubr.bf16.mxu0 0
      %1214 = vmatmul.mubr.bf16.gmra.mxu0 %v1139
      %v1215 = vpop.f32.mrf.mxu0
      %v1216 = vadd.f32 %v1063, %v1215
      %v1217 = vpop.f32.mrf.mxu0
      %v1218 = vpop.f32.mrf.mxu0
      %v1219 = vadd.f32 %v1066, %v1218
      %v1220 = vpop.f32.mrf.mxu0
      %1221 = vdwg.mxu0
      %v1228 = vrot.slane %v740, 5
      %v1229 = vrot.slane %v1228, 4
      %v1230 = vrot.slane %v741, 5
      %v1231 = vsel %vm531, %v1229, %v1230
      %v1232 = vrot.slane %v1230, 4
      %v1233 = vrot.slane %v742, 5
      %v1234 = vsel %vm531, %v1232, %v1233
      %v1235 = vrot.slane %v743, 5
      %v1236 = vrot.slane %v1235, 4
      %v1237 = vrot.slane %v744, 5
      %v1238 = vsel %vm531, %v1236, %v1237
      %v1239 = vrot.slane %v1237, 4
      %v1240 = vrot.slane %v745, 5
      %v1241 = vsel %vm531, %v1239, %v1240
      %v1242 = vrot.slane %v746, 5
      %v1243 = vrot.slane %v1242, 4
      %v1244 = vrot.slane %v747, 5
      %v1245 = vsel %vm531, %v1243, %v1244
      %v1246 = vrot.slane %v1244, 4
      %v1247 = vrot.slane %v748, 5
      %v1248 = vsel %vm531, %v1246, %v1247
      %v1249 = vrot.slane %v749, 5
      %v1250 = vrot.slane %v1249, 4
      %v1251 = vrot.slane %v750, 5
      %v1252 = vsel %vm531, %v1250, %v1251
      %v1253 = vrot.slane %v1251, 4
      %v1254 = vrot.slane %v751, 5
      %v1255 = vsel %vm531, %v1253, %v1254
      %v1256 = vrot.slane %v752, 5
      %v1257 = vrot.slane %v1256, 4
      %v1258 = vrot.slane %v753, 5
      %v1259 = vsel %vm531, %v1257, %v1258
      %v1260 = vrot.slane %v1258, 4
      %v1261 = vrot.slane %v754, 5
      %v1262 = vsel %vm531, %v1260, %v1261
      %v1263 = vrot.slane %v755, 5
      %v1264 = vrot.slane %v1263, 4
      %v1265 = vrot.slane %v756, 5
      %v1266 = vsel %vm531, %v1264, %v1265
      %v1267 = vrot.slane %v1265, 4
      %v1268 = vrot.slane %v757, 5
      %v1269 = vsel %vm531, %v1267, %v1268
      %v1270 = vld [vmem:[%s2 + $0x40] sm:$0xf]
      %v1271 = vld [vmem:[%s2 + $0x44] sm:$0xf]
      %v1272 = vld [vmem:[%s2 + $0x48] sm:$0xf]
      %v1273 = vld [vmem:[%s2 + $0x4c] sm:$0xf]
      %v1274 = vld [vmem:[%s2 + $0x50] sm:$0xf]
      %v1275 = vld [vmem:[%s2 + $0x54] sm:$0xf]
      %v1276 = vld [vmem:[%s2 + $0x58] sm:$0xf]
      %v1277 = vld [vmem:[%s2 + $0x5c] sm:$0xf]
      %v1278 = vunpack.c.l.b16 %v1231
      %v1279 = vunpack.c.l.b16 %v1234
      %v1280 = vunpack.c.l.b16 %v1238
      %v1281 = vunpack.c.l.b16 %v1241
      %v1282 = vunpack.c.l.b16 %v1245
      %v1283 = vunpack.c.l.b16 %v1248
      %v1284 = vunpack.c.l.b16 %v1252
      %v1285 = vunpack.c.l.b16 %v1255
      %v1286 = vunpack.c.l.b16 %v1259
      %v1287 = vunpack.c.l.b16 %v1262
      %v1288 = vunpack.c.l.b16 %v1266
      %v1289 = vunpack.c.l.b16 %v1269
      %v1290 = vpack.c.b16 %v1279, %v1278
      %v1291 = vpack.c.b16 %v1281, %v1280
      %v1292 = vpack.c.b16 %v1283, %v1282
      %v1293 = vpack.c.b16 %v1285, %v1284
      %v1294 = vpack.c.b16 %v1287, %v1286
      %v1295 = vpack.c.b16 %v1289, %v1288
      %v1304 = vunpack.c.l.b16 %v1270
      %v1305 = vunpack.c.l.b16 %v1271
      %v1306 = vunpack.c.l.b16 %v1272
      %v1307 = vunpack.c.l.b16 %v1273
      %v1308 = vunpack.c.l.b16 %v1274
      %v1309 = vunpack.c.l.b16 %v1275
      %v1310 = vunpack.c.l.b16 %v1276
      %v1311 = vunpack.c.l.b16 %v1277
      %v1312 = vpack.c.b16 %v1305, %v1304
      %v1313 = vpack.c.b16 %v1307, %v1306
      %v1314 = vpack.c.b16 %v1309, %v1308
      %v1315 = vpack.c.b16 %v1311, %v1310
      %v1321 = vsel %vm969, %v1290, 0
      %v1324 = vsel %vm969, %v1291, 0
      %v1327 = vsel %vm969, %v1292, 0
      %v1330 = vsel %vm969, %v1293, 0
      %v1333 = vsel %vm969, %v1294, 0
      %v1336 = vsel %vm969, %v1295, 0
      %1338 = vmatprep.subr.bf16.mxu0 0
      %1339 = vmatpush1.bf16.msra.mxu0 0
      %1340 = vmatprep.subr.bf16.mxu0 0
      %1341 = vmatpush1.bf16.msra.mxu0 0
      %1342 = vmatprep.subr.bf16.mxu0 0
      %1343 = vmatpush1.bf16.msra.mxu0 0
      %1344 = vmatprep.subr.bf16.mxu0 0
      %1345 = vmatpush1.bf16.msra.mxu0 0
      %1346 = vmatprep.subr.bf16.mxu0 0
      %1347 = vmatpush1.bf16.msra.mxu0 %v1315
      %1348 = vmatprep.subr.bf16.mxu0 0
      %1349 = vmatpush1.bf16.msra.mxu0 %v1314
      %1350 = vmatprep.subr.bf16.mxu0 0
      %1351 = vmatpush1.bf16.msra.mxu0 %v1313
      %1352 = vmatprep.subr.bf16.mxu0 0
      %1353 = vmatpush1.bf16.msra.mxu0 %v1312
      %1354 = vmatprep.subr.bf16.mxu0 0
      %1355 = vmatpush2.bf16.msra.mxu0 0
      %1356 = vmatprep.subr.bf16.mxu0 0
      %1357 = vmatpush2.bf16.msra.mxu0 0
      %1358 = vmatprep.subr.bf16.mxu0 0
      %1359 = vmatpush2.bf16.msra.mxu0 0
      %1360 = vmatprep.subr.bf16.mxu0 0
      %1361 = vmatpush2.bf16.msra.mxu0 0
      %1362 = vmatprep.subr.bf16.mxu0 0
      %1363 = vmatpush2.bf16.msra.mxu0 0
      %1364 = vmatprep.subr.bf16.mxu0 0
      %1365 = vmatpush2.bf16.msra.mxu0 0
      %1366 = vmatprep.subr.bf16.mxu0 0
      %1367 = vmatpush2.bf16.msra.mxu0 0
      %1368 = vmatprep.subr.bf16.mxu0 0
      %1369 = vmatpush2.bf16.msra.mxu0 0
      %1370 = vmatprep.mubr.bf16.mxu0 0
      %1371 = vmatmul.mubr.bf16.gmra.mxu0 %v1321
      %v1372 = vpop.f32.mrf.mxu0
      %v1373 = vadd.f32 0.0, %v1372
      %v1374 = vpop.f32.mrf.mxu0
      %v1375 = vpop.f32.mrf.mxu0
      %v1376 = vadd.f32 0.0, %v1375
      %v1377 = vpop.f32.mrf.mxu0
      %1378 = vmatprep.mubr.bf16.mxu0 0
      %1379 = vmatmul.mubr.bf16.gmra.mxu0 %v1324
      %v1380 = vpop.f32.mrf.mxu0
      %v1381 = vadd.f32 0.0, %v1380
      %v1382 = vpop.f32.mrf.mxu0
      %v1383 = vpop.f32.mrf.mxu0
      %v1384 = vadd.f32 0.0, %v1383
      %v1385 = vpop.f32.mrf.mxu0
      %1386 = vmatprep.mubr.bf16.mxu0 0
      %1387 = vmatmul.mubr.bf16.gmra.mxu0 %v1327
      %v1388 = vpop.f32.mrf.mxu0
      %v1389 = vadd.f32 0.0, %v1388
      %v1390 = vpop.f32.mrf.mxu0
      %v1391 = vpop.f32.mrf.mxu0
      %v1392 = vadd.f32 0.0, %v1391
      %v1393 = vpop.f32.mrf.mxu0
      %1394 = vmatprep.mubr.bf16.mxu0 0
      %1395 = vmatmul.mubr.bf16.gmra.mxu0 %v1330
      %v1396 = vpop.f32.mrf.mxu0
      %v1397 = vadd.f32 0.0, %v1396
      %v1398 = vpop.f32.mrf.mxu0
      %v1399 = vpop.f32.mrf.mxu0
      %v1400 = vadd.f32 0.0, %v1399
      %v1401 = vpop.f32.mrf.mxu0
      %1402 = vmatprep.mubr.bf16.mxu0 0
      %1403 = vmatmul.mubr.bf16.gmra.mxu0 %v1333
      %v1404 = vpop.f32.mrf.mxu0
      %v1405 = vadd.f32 0.0, %v1404
      %v1406 = vpop.f32.mrf.mxu0
      %v1407 = vpop.f32.mrf.mxu0
      %v1408 = vadd.f32 0.0, %v1407
      %v1409 = vpop.f32.mrf.mxu0
      %1410 = vmatprep.mubr.bf16.mxu0 0
      %1411 = vmatmul.mubr.bf16.gmra.mxu0 %v1336
      %v1412 = vpop.f32.mrf.mxu0
      %v1413 = vadd.f32 0.0, %v1412
      %v1414 = vpop.f32.mrf.mxu0
      %v1415 = vpop.f32.mrf.mxu0
      %v1416 = vadd.f32 0.0, %v1415
      %v1417 = vpop.f32.mrf.mxu0
      %1418 = vdwg.mxu0
      %v1419 = vadd.f32 %v1176, %v1373
      %v1420 = vadd.f32 %v1179, %v1376
      %v1421 = vadd.f32 %v1184, %v1381
      %v1422 = vadd.f32 %v1187, %v1384
      %v1423 = vadd.f32 %v1192, %v1389
      %v1424 = vadd.f32 %v1195, %v1392
      %v1425 = vadd.f32 %v1200, %v1397
      %v1426 = vadd.f32 %v1203, %v1400
      %v1427 = vadd.f32 %v1208, %v1405
      %v1428 = vadd.f32 %v1211, %v1408
      %v1429 = vadd.f32 %v1216, %v1413
      %v1430 = vadd.f32 %v1219, %v1416
      %s1431 = scalar_lea.vmem %s2, 96
      %v1432 = vld [vmem:[%s1431] sm:$0xf]
      %v1433 = vld [vmem:[%s1431 + $0x4] sm:$0xf]
      %v1434 = vld [vmem:[%s1431 + $0x8] sm:$0xf]
      %v1435 = vld [vmem:[%s1431 + $0xc] sm:$0xf]
      %v1436 = vld [vmem:[%s1431 + $0x10] sm:$0xf]
      %v1437 = vld [vmem:[%s1431 + $0x14] sm:$0xf]
      %v1438 = vld [vmem:[%s1431 + $0x18] sm:$0xf]
      %v1439 = vld [vmem:[%s1431 + $0x1c] sm:$0xf]
      %v1442 = vunpack.c.l.b16 %v758
      %v1443 = vunpack.c.l.b16 %v759
      %v1444 = vpack.c.b16 %v1443, %v1442
      %v1453 = vunpack.c.l.b16 %v1432
      %v1454 = vunpack.c.l.b16 %v1433
      %v1455 = vunpack.c.l.b16 %v1434
      %v1456 = vunpack.c.l.b16 %v1435
      %v1457 = vunpack.c.l.b16 %v1436
      %v1458 = vunpack.c.l.b16 %v1437
      %v1459 = vunpack.c.l.b16 %v1438
      %v1460 = vunpack.c.l.b16 %v1439
      %v1461 = vpack.c.b16 %v1454, %v1453
      %v1462 = vpack.c.b16 %v1456, %v1455
      %v1463 = vpack.c.b16 %v1458, %v1457
      %v1464 = vpack.c.b16 %v1460, %v1459
      %v1470 = vsel %vm969, %v1444, 0
      %1472 = vmatprep.subr.bf16.mxu0 0
      %1473 = vmatpush1.bf16.msra.mxu0 0
      %1474 = vmatprep.subr.bf16.mxu0 0
      %1475 = vmatpush1.bf16.msra.mxu0 0
      %1476 = vmatprep.subr.bf16.mxu0 0
      %1477 = vmatpush1.bf16.msra.mxu0 0
      %1478 = vmatprep.subr.bf16.mxu0 0
      %1479 = vmatpush1.bf16.msra.mxu0 0
      %1480 = vmatprep.subr.bf16.mxu0 0
      %1481 = vmatpush1.bf16.msra.mxu0 %v1464
      %1482 = vmatprep.subr.bf16.mxu0 0
      %1483 = vmatpush1.bf16.msra.mxu0 %v1463
      %1484 = vmatprep.subr.bf16.mxu0 0
      %1485 = vmatpush1.bf16.msra.mxu0 %v1462
      %1486 = vmatprep.subr.bf16.mxu0 0
      %1487 = vmatpush1.bf16.msra.mxu0 %v1461
      %1488 = vmatprep.subr.bf16.mxu0 0
      %1489 = vmatpush2.bf16.msra.mxu0 0
      %1490 = vmatprep.subr.bf16.mxu0 0
      %1491 = vmatpush2.bf16.msra.mxu0 0
      %1492 = vmatprep.subr.bf16.mxu0 0
      %1493 = vmatpush2.bf16.msra.mxu0 0
      %1494 = vmatprep.subr.bf16.mxu0 0
      %1495 = vmatpush2.bf16.msra.mxu0 0
      %1496 = vmatprep.subr.bf16.mxu0 0
      %1497 = vmatpush2.bf16.msra.mxu0 0
      %1498 = vmatprep.subr.bf16.mxu0 0
      %1499 = vmatpush2.bf16.msra.mxu0 0
      %1500 = vmatprep.subr.bf16.mxu0 0
      %1501 = vmatpush2.bf16.msra.mxu0 0
      %1502 = vmatprep.subr.bf16.mxu0 0
      %1503 = vmatpush2.bf16.msra.mxu0 0
      %1504 = vmatprep.mubr.bf16.mxu0 0
      %1505 = vmatmul.mubr.bf16.gmra.mxu0 %v1127
      %v1506 = vpop.f32.mrf.mxu0
      %v1507 = vadd.f32 0.0, %v1506
      %v1508 = vpop.f32.mrf.mxu0
      %v1509 = vpop.f32.mrf.mxu0
      %v1510 = vadd.f32 0.0, %v1509
      %v1511 = vpop.f32.mrf.mxu0
      %1512 = vmatprep.mubr.bf16.mxu0 0
      %1513 = vmatmul.mubr.bf16.gmra.mxu0 %v1130
      %v1514 = vpop.f32.mrf.mxu0
      %v1515 = vadd.f32 0.0, %v1514
      %v1516 = vpop.f32.mrf.mxu0
      %v1517 = vpop.f32.mrf.mxu0
      %v1518 = vadd.f32 0.0, %v1517
      %v1519 = vpop.f32.mrf.mxu0
      %1520 = vmatprep.mubr.bf16.mxu0 0
      %1521 = vmatmul.mubr.bf16.gmra.mxu0 %v1133
      %v1522 = vpop.f32.mrf.mxu0
      %v1523 = vadd.f32 0.0, %v1522
      %v1524 = vpop.f32.mrf.mxu0
      %v1525 = vpop.f32.mrf.mxu0
      %v1526 = vadd.f32 0.0, %v1525
      %v1527 = vpop.f32.mrf.mxu0
      %1528 = vmatprep.mubr.bf16.mxu0 0
      %1529 = vmatmul.mubr.bf16.gmra.mxu0 %v1136
      %v1530 = vpop.f32.mrf.mxu0
      %v1531 = vadd.f32 0.0, %v1530
      %v1532 = vpop.f32.mrf.mxu0
      %v1533 = vpop.f32.mrf.mxu0
      %v1534 = vadd.f32 0.0, %v1533
      %v1535 = vpop.f32.mrf.mxu0
      %1536 = vmatprep.mubr.bf16.mxu0 0
      %1537 = vmatmul.mubr.bf16.gmra.mxu0 %v1139
      %v1538 = vpop.f32.mrf.mxu0
      %v1539 = vadd.f32 0.0, %v1538
      %v1540 = vpop.f32.mrf.mxu0
      %v1541 = vpop.f32.mrf.mxu0
      %v1542 = vadd.f32 0.0, %v1541
      %v1543 = vpop.f32.mrf.mxu0
      %1544 = vmatprep.mubr.bf16.mxu0 0
      %1545 = vmatmul.mubr.bf16.gmra.mxu0 %v1470
      %v1546 = vpop.f32.mrf.mxu0
      %v1547 = vadd.f32 0.0, %v1546
      %v1548 = vpop.f32.mrf.mxu0
      %v1549 = vpop.f32.mrf.mxu0
      %v1550 = vadd.f32 0.0, %v1549
      %v1551 = vpop.f32.mrf.mxu0
      %1552 = vdwg.mxu0
      %v1553 = vadd.f32 %v1419, %v1507
      %v1554 = vadd.f32 %v1420, %v1510
      %v1555 = vadd.f32 %v1421, %v1515
      %v1556 = vadd.f32 %v1422, %v1518
      %v1557 = vadd.f32 %v1423, %v1523
      %v1558 = vadd.f32 %v1424, %v1526
      %v1559 = vadd.f32 %v1425, %v1531
      %v1560 = vadd.f32 %v1426, %v1534
      %v1561 = vadd.f32 %v1427, %v1539
      %v1562 = vadd.f32 %v1428, %v1542
      %v1563 = vadd.f32 %v1429, %v1547
      %v1564 = vadd.f32 %v1430, %v1550
      %v1566 = vshrl.u32 %v758, 16
      %v1568 = vrot.slane %v1566, 4
      %v1569 = vshll.u32 %v758, 16
      %v1571 = vrot.slane %v1569, 5
      %v1572 = vor.u32 %v1568, %v1571
      %v1573 = vrot.slane %v1572, 4
      %v1575 = vshll.u32 %v759, 16
      %v1577 = vrot.slane %v1575, 5
      %v1578 = vsel %vm774, %v1573, %v1577
      %v1579 = vshrl.u32 %v759, 16
      %v1581 = vrot.slane %v1579, 4
      %v1582 = vor.u32 %v1581, %v1577
      %v1583 = vrot.slane %v1582, 4
      %v1585 = vshll.u32 %v760, 16
      %v1587 = vrot.slane %v1585, 5
      %v1588 = vsel %vm774, %v1583, %v1587
      %v1589 = vld [vmem:[%s1431 + $0x20] sm:$0xf]
      %v1590 = vld [vmem:[%s1431 + $0x24] sm:$0xf]
      %v1591 = vld [vmem:[%s1431 + $0x28] sm:$0xf]
      %v1592 = vld [vmem:[%s1431 + $0x2c] sm:$0xf]
      %v1593 = vld [vmem:[%s1431 + $0x30] sm:$0xf]
      %v1594 = vld [vmem:[%s1431 + $0x34] sm:$0xf]
      %v1595 = vld [vmem:[%s1431 + $0x38] sm:$0xf]
      %v1596 = vld [vmem:[%s1431 + $0x3c] sm:$0xf]
      %v1597 = vunpack.c.l.b16 %v1578
      %v1598 = vunpack.c.l.b16 %v1588
      %v1599 = vpack.c.b16 %v1598, %v1597
      %v1608 = vunpack.c.l.b16 %v1589
      %v1609 = vunpack.c.l.b16 %v1590
      %v1610 = vunpack.c.l.b16 %v1591
      %v1611 = vunpack.c.l.b16 %v1592
      %v1612 = vunpack.c.l.b16 %v1593
      %v1613 = vunpack.c.l.b16 %v1594
      %v1614 = vunpack.c.l.b16 %v1595
      %v1615 = vunpack.c.l.b16 %v1596
      %v1616 = vpack.c.b16 %v1609, %v1608
      %v1617 = vpack.c.b16 %v1611, %v1610
      %v1618 = vpack.c.b16 %v1613, %v1612
      %v1619 = vpack.c.b16 %v1615, %v1614
      %v1625 = vsel %vm969, %v1599, 0
      %1627 = vmatprep.subr.bf16.mxu0 0
      %1628 = vmatpush1.bf16.msra.mxu0 0
      %1629 = vmatprep.subr.bf16.mxu0 0
      %1630 = vmatpush1.bf16.msra.mxu0 0
      %1631 = vmatprep.subr.bf16.mxu0 0
      %1632 = vmatpush1.bf16.msra.mxu0 0
      %1633 = vmatprep.subr.bf16.mxu0 0
      %1634 = vmatpush1.bf16.msra.mxu0 0
      %1635 = vmatprep.subr.bf16.mxu0 0
      %1636 = vmatpush1.bf16.msra.mxu0 %v1619
      %1637 = vmatprep.subr.bf16.mxu0 0
      %1638 = vmatpush1.bf16.msra.mxu0 %v1618
      %1639 = vmatprep.subr.bf16.mxu0 0
      %1640 = vmatpush1.bf16.msra.mxu0 %v1617
      %1641 = vmatprep.subr.bf16.mxu0 0
      %1642 = vmatpush1.bf16.msra.mxu0 %v1616
      %1643 = vmatprep.subr.bf16.mxu0 0
      %1644 = vmatpush2.bf16.msra.mxu0 0
      %1645 = vmatprep.subr.bf16.mxu0 0
      %1646 = vmatpush2.bf16.msra.mxu0 0
      %1647 = vmatprep.subr.bf16.mxu0 0
      %1648 = vmatpush2.bf16.msra.mxu0 0
      %1649 = vmatprep.subr.bf16.mxu0 0
      %1650 = vmatpush2.bf16.msra.mxu0 0
      %1651 = vmatprep.subr.bf16.mxu0 0
      %1652 = vmatpush2.bf16.msra.mxu0 0
      %1653 = vmatprep.subr.bf16.mxu0 0
      %1654 = vmatpush2.bf16.msra.mxu0 0
      %1655 = vmatprep.subr.bf16.mxu0 0
      %1656 = vmatpush2.bf16.msra.mxu0 0
      %1657 = vmatprep.subr.bf16.mxu0 0
      %1658 = vmatpush2.bf16.msra.mxu0 0
      %1659 = vmatprep.mubr.bf16.mxu0 0
      %1660 = vmatmul.mubr.bf16.gmra.mxu0 %v974
      %v1661 = vpop.f32.mrf.mxu0
      %v1662 = vadd.f32 0.0, %v1661
      %v1663 = vpop.f32.mrf.mxu0
      %v1664 = vpop.f32.mrf.mxu0
      %v1665 = vadd.f32 0.0, %v1664
      %v1666 = vpop.f32.mrf.mxu0
      %1667 = vmatprep.mubr.bf16.mxu0 0
      %1668 = vmatmul.mubr.bf16.gmra.mxu0 %v977
      %v1669 = vpop.f32.mrf.mxu0
      %v1670 = vadd.f32 0.0, %v1669
      %v1671 = vpop.f32.mrf.mxu0
      %v1672 = vpop.f32.mrf.mxu0
      %v1673 = vadd.f32 0.0, %v1672
      %v1674 = vpop.f32.mrf.mxu0
      %1675 = vmatprep.mubr.bf16.mxu0 0
      %1676 = vmatmul.mubr.bf16.gmra.mxu0 %v980
      %v1677 = vpop.f32.mrf.mxu0
      %v1678 = vadd.f32 0.0, %v1677
      %v1679 = vpop.f32.mrf.mxu0
      %v1680 = vpop.f32.mrf.mxu0
      %v1681 = vadd.f32 0.0, %v1680
      %v1682 = vpop.f32.mrf.mxu0
      %1683 = vmatprep.mubr.bf16.mxu0 0
      %1684 = vmatmul.mubr.bf16.gmra.mxu0 %v983
      %v1685 = vpop.f32.mrf.mxu0
      %v1686 = vadd.f32 0.0, %v1685
      %v1687 = vpop.f32.mrf.mxu0
      %v1688 = vpop.f32.mrf.mxu0
      %v1689 = vadd.f32 0.0, %v1688
      %v1690 = vpop.f32.mrf.mxu0
      %1691 = vmatprep.mubr.bf16.mxu0 0
      %1692 = vmatmul.mubr.bf16.gmra.mxu0 %v986
      %v1693 = vpop.f32.mrf.mxu0
      %v1694 = vadd.f32 0.0, %v1693
      %v1695 = vpop.f32.mrf.mxu0
      %v1696 = vpop.f32.mrf.mxu0
      %v1697 = vadd.f32 0.0, %v1696
      %v1698 = vpop.f32.mrf.mxu0
      %1699 = vmatprep.mubr.bf16.mxu0 0
      %1700 = vmatmul.mubr.bf16.gmra.mxu0 %v1625
      %v1701 = vpop.f32.mrf.mxu0
      %v1702 = vadd.f32 0.0, %v1701
      %v1703 = vpop.f32.mrf.mxu0
      %v1704 = vpop.f32.mrf.mxu0
      %v1705 = vadd.f32 0.0, %v1704
      %v1706 = vpop.f32.mrf.mxu0
      %1707 = vdwg.mxu0
      %v1708 = vadd.f32 %v1553, %v1662
      %v1709 = vadd.f32 %v1554, %v1665
      %v1710 = vadd.f32 %v1555, %v1670
      %v1711 = vadd.f32 %v1556, %v1673
      %v1712 = vadd.f32 %v1557, %v1678
      %v1713 = vadd.f32 %v1558, %v1681
      %v1714 = vadd.f32 %v1559, %v1686
      %v1715 = vadd.f32 %v1560, %v1689
      %v1716 = vadd.f32 %v1561, %v1694
      %v1717 = vadd.f32 %v1562, %v1697
      %v1718 = vadd.f32 %v1563, %v1702
      %v1719 = vadd.f32 %v1564, %v1705
      %v1721 = vrot.slane %v758, 5
      %v1722 = vrot.slane %v1721, 4
      %v1723 = vrot.slane %v759, 5
      %v1724 = vsel %vm531, %v1722, %v1723
      %v1725 = vrot.slane %v1723, 4
      %v1726 = vrot.slane %v760, 5
      %v1727 = vsel %vm531, %v1725, %v1726
      %v1728 = vld [vmem:[%s1431 + $0x40] sm:$0xf]
      %v1729 = vld [vmem:[%s1431 + $0x44] sm:$0xf]
      %v1730 = vld [vmem:[%s1431 + $0x48] sm:$0xf]
      %v1731 = vld [vmem:[%s1431 + $0x4c] sm:$0xf]
      %v1732 = vld [vmem:[%s1431 + $0x50] sm:$0xf]
      %v1733 = vld [vmem:[%s1431 + $0x54] sm:$0xf]
      %v1734 = vld [vmem:[%s1431 + $0x58] sm:$0xf]
      %v1735 = vld [vmem:[%s1431 + $0x5c] sm:$0xf]
      %v1736 = vunpack.c.l.b16 %v1724
      %v1737 = vunpack.c.l.b16 %v1727
      %v1738 = vpack.c.b16 %v1737, %v1736
      %v1747 = vunpack.c.l.b16 %v1728
      %v1748 = vunpack.c.l.b16 %v1729
      %v1749 = vunpack.c.l.b16 %v1730
      %v1750 = vunpack.c.l.b16 %v1731
      %v1751 = vunpack.c.l.b16 %v1732
      %v1752 = vunpack.c.l.b16 %v1733
      %v1753 = vunpack.c.l.b16 %v1734
      %v1754 = vunpack.c.l.b16 %v1735
      %v1755 = vpack.c.b16 %v1748, %v1747
      %v1756 = vpack.c.b16 %v1750, %v1749
      %v1757 = vpack.c.b16 %v1752, %v1751
      %v1758 = vpack.c.b16 %v1754, %v1753
      %v1764 = vsel %vm969, %v1738, 0
      %1766 = vmatprep.subr.bf16.mxu0 0
      %1767 = vmatpush1.bf16.msra.mxu0 0
      %1768 = vmatprep.subr.bf16.mxu0 0
      %1769 = vmatpush1.bf16.msra.mxu0 0
      %1770 = vmatprep.subr.bf16.mxu0 0
      %1771 = vmatpush1.bf16.msra.mxu0 0
      %1772 = vmatprep.subr.bf16.mxu0 0
      %1773 = vmatpush1.bf16.msra.mxu0 0
      %1774 = vmatprep.subr.bf16.mxu0 0
      %1775 = vmatpush1.bf16.msra.mxu0 %v1758
      %1776 = vmatprep.subr.bf16.mxu0 0
      %1777 = vmatpush1.bf16.msra.mxu0 %v1757
      %1778 = vmatprep.subr.bf16.mxu0 0
      %1779 = vmatpush1.bf16.msra.mxu0 %v1756
      %1780 = vmatprep.subr.bf16.mxu0 0
      %1781 = vmatpush1.bf16.msra.mxu0 %v1755
      %1782 = vmatprep.subr.bf16.mxu0 0
      %1783 = vmatpush2.bf16.msra.mxu0 0
      %1784 = vmatprep.subr.bf16.mxu0 0
      %1785 = vmatpush2.bf16.msra.mxu0 0
      %1786 = vmatprep.subr.bf16.mxu0 0
      %1787 = vmatpush2.bf16.msra.mxu0 0
      %1788 = vmatprep.subr.bf16.mxu0 0
      %1789 = vmatpush2.bf16.msra.mxu0 0
      %1790 = vmatprep.subr.bf16.mxu0 0
      %1791 = vmatpush2.bf16.msra.mxu0 0
      %1792 = vmatprep.subr.bf16.mxu0 0
      %1793 = vmatpush2.bf16.msra.mxu0 0
      %1794 = vmatprep.subr.bf16.mxu0 0
      %1795 = vmatpush2.bf16.msra.mxu0 0
      %1796 = vmatprep.subr.bf16.mxu0 0
      %1797 = vmatpush2.bf16.msra.mxu0 0
      %1798 = vmatprep.mubr.bf16.mxu0 0
      %1799 = vmatmul.mubr.bf16.gmra.mxu0 %v1324
      %v1800 = vpop.f32.mrf.mxu0
      %v1801 = vadd.f32 0.0, %v1800
      %v1802 = vpop.f32.mrf.mxu0
      %v1803 = vpop.f32.mrf.mxu0
      %v1804 = vadd.f32 0.0, %v1803
      %v1805 = vpop.f32.mrf.mxu0
      %1806 = vmatprep.mubr.bf16.mxu0 0
      %1807 = vmatmul.mubr.bf16.gmra.mxu0 %v1327
      %v1808 = vpop.f32.mrf.mxu0
      %v1809 = vadd.f32 0.0, %v1808
      %v1810 = vpop.f32.mrf.mxu0
      %v1811 = vpop.f32.mrf.mxu0
      %v1812 = vadd.f32 0.0, %v1811
      %v1813 = vpop.f32.mrf.mxu0
      %1814 = vmatprep.mubr.bf16.mxu0 0
      %1815 = vmatmul.mubr.bf16.gmra.mxu0 %v1330
      %v1816 = vpop.f32.mrf.mxu0
      %v1817 = vadd.f32 0.0, %v1816
      %v1818 = vpop.f32.mrf.mxu0
      %v1819 = vpop.f32.mrf.mxu0
      %v1820 = vadd.f32 0.0, %v1819
      %v1821 = vpop.f32.mrf.mxu0
      %1822 = vmatprep.mubr.bf16.mxu0 0
      %1823 = vmatmul.mubr.bf16.gmra.mxu0 %v1333
      %v1824 = vpop.f32.mrf.mxu0
      %v1825 = vadd.f32 0.0, %v1824
      %v1826 = vpop.f32.mrf.mxu0
      %v1827 = vpop.f32.mrf.mxu0
      %v1828 = vadd.f32 0.0, %v1827
      %v1829 = vpop.f32.mrf.mxu0
      %1830 = vmatprep.mubr.bf16.mxu0 0
      %1831 = vmatmul.mubr.bf16.gmra.mxu0 %v1336
      %v1832 = vpop.f32.mrf.mxu0
      %v1833 = vadd.f32 0.0, %v1832
      %v1834 = vpop.f32.mrf.mxu0
      %v1835 = vpop.f32.mrf.mxu0
      %v1836 = vadd.f32 0.0, %v1835
      %v1837 = vpop.f32.mrf.mxu0
      %1838 = vmatprep.mubr.bf16.mxu0 0
      %1839 = vmatmul.mubr.bf16.gmra.mxu0 %v1764
      %v1840 = vpop.f32.mrf.mxu0
      %v1841 = vadd.f32 0.0, %v1840
      %v1842 = vpop.f32.mrf.mxu0
      %v1843 = vpop.f32.mrf.mxu0
      %v1844 = vadd.f32 0.0, %v1843
      %v1845 = vpop.f32.mrf.mxu0
      %1846 = vdwg.mxu0
      %v1847 = vadd.f32 %v1708, %v1801
      %v1848 = vadd.f32 %v1709, %v1804
      %v1849 = vadd.f32 %v1710, %v1809
      %v1850 = vadd.f32 %v1711, %v1812
      %v1851 = vadd.f32 %v1712, %v1817
      %v1852 = vadd.f32 %v1713, %v1820
      %v1853 = vadd.f32 %v1714, %v1825
      %v1854 = vadd.f32 %v1715, %v1828
      %v1855 = vadd.f32 %v1716, %v1833
      %v1856 = vadd.f32 %v1717, %v1836
      %v1857 = vadd.f32 %v1718, %v1841
      %v1858 = vadd.f32 %v1719, %v1844
      %s1859 = scalar_lea.vmem %s2, 192
      %v1860 = vld [vmem:[%s1859] sm:$0xf]
      %v1861 = vld [vmem:[%s1859 + $0x4] sm:$0xf]
      %v1862 = vld [vmem:[%s1859 + $0x8] sm:$0xf]
      %v1863 = vld [vmem:[%s1859 + $0xc] sm:$0xf]
      %v1864 = vld [vmem:[%s1859 + $0x10] sm:$0xf]
      %v1865 = vld [vmem:[%s1859 + $0x14] sm:$0xf]
      %v1866 = vld [vmem:[%s1859 + $0x18] sm:$0xf]
      %v1867 = vld [vmem:[%s1859 + $0x1c] sm:$0xf]
      %v1870 = vunpack.c.l.b16 %v761
      %v1871 = vunpack.c.l.b16 %v762
      %v1872 = vpack.c.b16 %v1871, %v1870
      %v1881 = vunpack.c.l.b16 %v1860
      %v1882 = vunpack.c.l.b16 %v1861
      %v1883 = vunpack.c.l.b16 %v1862
      %v1884 = vunpack.c.l.b16 %v1863
      %v1885 = vunpack.c.l.b16 %v1864
      %v1886 = vunpack.c.l.b16 %v1865
      %v1887 = vunpack.c.l.b16 %v1866
      %v1888 = vunpack.c.l.b16 %v1867
      %v1889 = vpack.c.b16 %v1882, %v1881
      %v1890 = vpack.c.b16 %v1884, %v1883
      %v1891 = vpack.c.b16 %v1886, %v1885
      %v1892 = vpack.c.b16 %v1888, %v1887
      %v1898 = vsel %vm969, %v1872, 0
      %1900 = vmatprep.subr.bf16.mxu0 0
      %1901 = vmatpush1.bf16.msra.mxu0 0
      %1902 = vmatprep.subr.bf16.mxu0 0
      %1903 = vmatpush1.bf16.msra.mxu0 0
      %1904 = vmatprep.subr.bf16.mxu0 0
      %1905 = vmatpush1.bf16.msra.mxu0 0
      %1906 = vmatprep.subr.bf16.mxu0 0
      %1907 = vmatpush1.bf16.msra.mxu0 0
      %1908 = vmatprep.subr.bf16.mxu0 0
      %1909 = vmatpush1.bf16.msra.mxu0 %v1892
      %1910 = vmatprep.subr.bf16.mxu0 0
      %1911 = vmatpush1.bf16.msra.mxu0 %v1891
      %1912 = vmatprep.subr.bf16.mxu0 0
      %1913 = vmatpush1.bf16.msra.mxu0 %v1890
      %1914 = vmatprep.subr.bf16.mxu0 0
      %1915 = vmatpush1.bf16.msra.mxu0 %v1889
      %1916 = vmatprep.subr.bf16.mxu0 0
      %1917 = vmatpush2.bf16.msra.mxu0 0
      %1918 = vmatprep.subr.bf16.mxu0 0
      %1919 = vmatpush2.bf16.msra.mxu0 0
      %1920 = vmatprep.subr.bf16.mxu0 0
      %1921 = vmatpush2.bf16.msra.mxu0 0
      %1922 = vmatprep.subr.bf16.mxu0 0
      %1923 = vmatpush2.bf16.msra.mxu0 0
      %1924 = vmatprep.subr.bf16.mxu0 0
      %1925 = vmatpush2.bf16.msra.mxu0 0
      %1926 = vmatprep.subr.bf16.mxu0 0
      %1927 = vmatpush2.bf16.msra.mxu0 0
      %1928 = vmatprep.subr.bf16.mxu0 0
      %1929 = vmatpush2.bf16.msra.mxu0 0
      %1930 = vmatprep.subr.bf16.mxu0 0
      %1931 = vmatpush2.bf16.msra.mxu0 0
      %1932 = vmatprep.mubr.bf16.mxu0 0
      %1933 = vmatmul.mubr.bf16.gmra.mxu0 %v1130
      %v1934 = vpop.f32.mrf.mxu0
      %v1935 = vadd.f32 0.0, %v1934
      %v1936 = vpop.f32.mrf.mxu0
      %v1937 = vpop.f32.mrf.mxu0
      %v1938 = vadd.f32 0.0, %v1937
      %v1939 = vpop.f32.mrf.mxu0
      %1940 = vmatprep.mubr.bf16.mxu0 0
      %1941 = vmatmul.mubr.bf16.gmra.mxu0 %v1133
      %v1942 = vpop.f32.mrf.mxu0
      %v1943 = vadd.f32 0.0, %v1942
      %v1944 = vpop.f32.mrf.mxu0
      %v1945 = vpop.f32.mrf.mxu0
      %v1946 = vadd.f32 0.0, %v1945
      %v1947 = vpop.f32.mrf.mxu0
      %1948 = vmatprep.mubr.bf16.mxu0 0
      %1949 = vmatmul.mubr.bf16.gmra.mxu0 %v1136
      %v1950 = vpop.f32.mrf.mxu0
      %v1951 = vadd.f32 0.0, %v1950
      %v1952 = vpop.f32.mrf.mxu0
      %v1953 = vpop.f32.mrf.mxu0
      %v1954 = vadd.f32 0.0, %v1953
      %v1955 = vpop.f32.mrf.mxu0
      %1956 = vmatprep.mubr.bf16.mxu0 0
      %1957 = vmatmul.mubr.bf16.gmra.mxu0 %v1139
      %v1958 = vpop.f32.mrf.mxu0
      %v1959 = vadd.f32 0.0, %v1958
      %v1960 = vpop.f32.mrf.mxu0
      %v1961 = vpop.f32.mrf.mxu0
      %v1962 = vadd.f32 0.0, %v1961
      %v1963 = vpop.f32.mrf.mxu0
      %1964 = vmatprep.mubr.bf16.mxu0 0
      %1965 = vmatmul.mubr.bf16.gmra.mxu0 %v1470
      %v1966 = vpop.f32.mrf.mxu0
      %v1967 = vadd.f32 0.0, %v1966
      %v1968 = vpop.f32.mrf.mxu0
      %v1969 = vpop.f32.mrf.mxu0
      %v1970 = vadd.f32 0.0, %v1969
      %v1971 = vpop.f32.mrf.mxu0
      %1972 = vmatprep.mubr.bf16.mxu0 0
      %1973 = vmatmul.mubr.bf16.gmra.mxu0 %v1898
      %v1974 = vpop.f32.mrf.mxu0
      %v1975 = vadd.f32 0.0, %v1974
      %v1976 = vpop.f32.mrf.mxu0
      %v1977 = vpop.f32.mrf.mxu0
      %v1978 = vadd.f32 0.0, %v1977
      %v1979 = vpop.f32.mrf.mxu0
      %1980 = vdwg.mxu0
      %v1981 = vadd.f32 %v1847, %v1935
      %v1982 = vadd.f32 %v1848, %v1938
      %v1983 = vadd.f32 %v1849, %v1943
      %v1984 = vadd.f32 %v1850, %v1946
      %v1985 = vadd.f32 %v1851, %v1951
      %v1986 = vadd.f32 %v1852, %v1954
      %v1987 = vadd.f32 %v1853, %v1959
      %v1988 = vadd.f32 %v1854, %v1962
      %v1989 = vadd.f32 %v1855, %v1967
      %v1990 = vadd.f32 %v1856, %v1970
      %v1991 = vadd.f32 %v1857, %v1975
      %v1992 = vadd.f32 %v1858, %v1978
      %v1994 = vshrl.u32 %v761, 16
      %v1996 = vrot.slane %v1994, 4
      %v1997 = vshll.u32 %v761, 16
      %v1999 = vrot.slane %v1997, 5
      %v2000 = vor.u32 %v1996, %v1999
      %v2001 = vrot.slane %v2000, 4
      %v2003 = vshll.u32 %v762, 16
      %v2005 = vrot.slane %v2003, 5
      %v2006 = vsel %vm774, %v2001, %v2005
      %v2007 = vshrl.u32 %v762, 16
      %v2009 = vrot.slane %v2007, 4
      %v2010 = vor.u32 %v2009, %v2005
      %v2011 = vrot.slane %v2010, 4
      %v2013 = vshll.u32 %v763, 16
      %v2015 = vrot.slane %v2013, 5
      %v2016 = vsel %vm774, %v2011, %v2015
      %v2017 = vld [vmem:[%s1859 + $0x20] sm:$0xf]
      %v2018 = vld [vmem:[%s1859 + $0x24] sm:$0xf]
      %v2019 = vld [vmem:[%s1859 + $0x28] sm:$0xf]
      %v2020 = vld [vmem:[%s1859 + $0x2c] sm:$0xf]
      %v2021 = vld [vmem:[%s1859 + $0x30] sm:$0xf]
      %v2022 = vld [vmem:[%s1859 + $0x34] sm:$0xf]
      %v2023 = vld [vmem:[%s1859 + $0x38] sm:$0xf]
      %v2024 = vld [vmem:[%s1859 + $0x3c] sm:$0xf]
      %v2025 = vunpack.c.l.b16 %v2006
      %v2026 = vunpack.c.l.b16 %v2016
      %v2027 = vpack.c.b16 %v2026, %v2025
      %v2036 = vunpack.c.l.b16 %v2017
      %v2037 = vunpack.c.l.b16 %v2018
      %v2038 = vunpack.c.l.b16 %v2019
      %v2039 = vunpack.c.l.b16 %v2020
      %v2040 = vunpack.c.l.b16 %v2021
      %v2041 = vunpack.c.l.b16 %v2022
      %v2042 = vunpack.c.l.b16 %v2023
      %v2043 = vunpack.c.l.b16 %v2024
      %v2044 = vpack.c.b16 %v2037, %v2036
      %v2045 = vpack.c.b16 %v2039, %v2038
      %v2046 = vpack.c.b16 %v2041, %v2040
      %v2047 = vpack.c.b16 %v2043, %v2042
      %v2053 = vsel %vm969, %v2027, 0
      %2055 = vmatprep.subr.bf16.mxu0 0
      %2056 = vmatpush1.bf16.msra.mxu0 0
      %2057 = vmatprep.subr.bf16.mxu0 0
      %2058 = vmatpush1.bf16.msra.mxu0 0
      %2059 = vmatprep.subr.bf16.mxu0 0
      %2060 = vmatpush1.bf16.msra.mxu0 0
      %2061 = vmatprep.subr.bf16.mxu0 0
      %2062 = vmatpush1.bf16.msra.mxu0 0
      %2063 = vmatprep.subr.bf16.mxu0 0
      %2064 = vmatpush1.bf16.msra.mxu0 %v2047
      %2065 = vmatprep.subr.bf16.mxu0 0
      %2066 = vmatpush1.bf16.msra.mxu0 %v2046
      %2067 = vmatprep.subr.bf16.mxu0 0
      %2068 = vmatpush1.bf16.msra.mxu0 %v2045
      %2069 = vmatprep.subr.bf16.mxu0 0
      %2070 = vmatpush1.bf16.msra.mxu0 %v2044
      %2071 = vmatprep.subr.bf16.mxu0 0
      %2072 = vmatpush2.bf16.msra.mxu0 0
      %2073 = vmatprep.subr.bf16.mxu0 0
      %2074 = vmatpush2.bf16.msra.mxu0 0
      %2075 = vmatprep.subr.bf16.mxu0 0
      %2076 = vmatpush2.bf16.msra.mxu0 0
      %2077 = vmatprep.subr.bf16.mxu0 0
      %2078 = vmatpush2.bf16.msra.mxu0 0
      %2079 = vmatprep.subr.bf16.mxu0 0
      %2080 = vmatpush2.bf16.msra.mxu0 0
      %2081 = vmatprep.subr.bf16.mxu0 0
      %2082 = vmatpush2.bf16.msra.mxu0 0
      %2083 = vmatprep.subr.bf16.mxu0 0
      %2084 = vmatpush2.bf16.msra.mxu0 0
      %2085 = vmatprep.subr.bf16.mxu0 0
      %2086 = vmatpush2.bf16.msra.mxu0 0
      %2087 = vmatprep.mubr.bf16.mxu0 0
      %2088 = vmatmul.mubr.bf16.gmra.mxu0 %v977
      %v2089 = vpop.f32.mrf.mxu0
      %v2090 = vadd.f32 0.0, %v2089
      %v2091 = vpop.f32.mrf.mxu0
      %v2092 = vpop.f32.mrf.mxu0
      %v2093 = vadd.f32 0.0, %v2092
      %v2094 = vpop.f32.mrf.mxu0
      %2095 = vmatprep.mubr.bf16.mxu0 0
      %2096 = vmatmul.mubr.bf16.gmra.mxu0 %v980
      %v2097 = vpop.f32.mrf.mxu0
      %v2098 = vadd.f32 0.0, %v2097
      %v2099 = vpop.f32.mrf.mxu0
      %v2100 = vpop.f32.mrf.mxu0
      %v2101 = vadd.f32 0.0, %v2100
      %v2102 = vpop.f32.mrf.mxu0
      %2103 = vmatprep.mubr.bf16.mxu0 0
      %2104 = vmatmul.mubr.bf16.gmra.mxu0 %v983
      %v2105 = vpop.f32.mrf.mxu0
      %v2106 = vadd.f32 0.0, %v2105
      %v2107 = vpop.f32.mrf.mxu0
      %v2108 = vpop.f32.mrf.mxu0
      %v2109 = vadd.f32 0.0, %v2108
      %v2110 = vpop.f32.mrf.mxu0
      %2111 = vmatprep.mubr.bf16.mxu0 0
      %2112 = vmatmul.mubr.bf16.gmra.mxu0 %v986
      %v2113 = vpop.f32.mrf.mxu0
      %v2114 = vadd.f32 0.0, %v2113
      %v2115 = vpop.f32.mrf.mxu0
      %v2116 = vpop.f32.mrf.mxu0
      %v2117 = vadd.f32 0.0, %v2116
      %v2118 = vpop.f32.mrf.mxu0
      %2119 = vmatprep.mubr.bf16.mxu0 0
      %2120 = vmatmul.mubr.bf16.gmra.mxu0 %v1625
      %v2121 = vpop.f32.mrf.mxu0
      %v2122 = vadd.f32 0.0, %v2121
      %v2123 = vpop.f32.mrf.mxu0
      %v2124 = vpop.f32.mrf.mxu0
      %v2125 = vadd.f32 0.0, %v2124
      %v2126 = vpop.f32.mrf.mxu0
      %2127 = vmatprep.mubr.bf16.mxu0 0
      %2128 = vmatmul.mubr.bf16.gmra.mxu0 %v2053
      %v2129 = vpop.f32.mrf.mxu0
      %v2130 = vadd.f32 0.0, %v2129
      %v2131 = vpop.f32.mrf.mxu0
      %v2132 = vpop.f32.mrf.mxu0
      %v2133 = vadd.f32 0.0, %v2132
      %v2134 = vpop.f32.mrf.mxu0
      %2135 = vdwg.mxu0
      %v2136 = vadd.f32 %v1981, %v2090
      %v2137 = vadd.f32 %v1982, %v2093
      %v2138 = vadd.f32 %v1983, %v2098
      %v2139 = vadd.f32 %v1984, %v2101
      %v2140 = vadd.f32 %v1985, %v2106
      %v2141 = vadd.f32 %v1986, %v2109
      %v2142 = vadd.f32 %v1987, %v2114
      %v2143 = vadd.f32 %v1988, %v2117
      %v2144 = vadd.f32 %v1989, %v2122
      %v2145 = vadd.f32 %v1990, %v2125
      %v2146 = vadd.f32 %v1991, %v2130
      %v2147 = vadd.f32 %v1992, %v2133
      %v2149 = vrot.slane %v761, 5
      %v2150 = vrot.slane %v2149, 4
      %v2151 = vrot.slane %v762, 5
      %v2152 = vsel %vm531, %v2150, %v2151
      %v2153 = vrot.slane %v2151, 4
      %v2154 = vrot.slane %v763, 5
      %v2155 = vsel %vm531, %v2153, %v2154
      %v2156 = vld [vmem:[%s1859 + $0x40] sm:$0xf]
      %v2157 = vld [vmem:[%s1859 + $0x44] sm:$0xf]
      %v2158 = vld [vmem:[%s1859 + $0x48] sm:$0xf]
      %v2159 = vld [vmem:[%s1859 + $0x4c] sm:$0xf]
      %v2160 = vld [vmem:[%s1859 + $0x50] sm:$0xf]
      %v2161 = vld [vmem:[%s1859 + $0x54] sm:$0xf]
      %v2162 = vld [vmem:[%s1859 + $0x58] sm:$0xf]
      %v2163 = vld [vmem:[%s1859 + $0x5c] sm:$0xf]
      %v2164 = vunpack.c.l.b16 %v2152
      %v2165 = vunpack.c.l.b16 %v2155
      %v2166 = vpack.c.b16 %v2165, %v2164
      %v2175 = vunpack.c.l.b16 %v2156
      %v2176 = vunpack.c.l.b16 %v2157
      %v2177 = vunpack.c.l.b16 %v2158
      %v2178 = vunpack.c.l.b16 %v2159
      %v2179 = vunpack.c.l.b16 %v2160
      %v2180 = vunpack.c.l.b16 %v2161
      %v2181 = vunpack.c.l.b16 %v2162
      %v2182 = vunpack.c.l.b16 %v2163
      %v2183 = vpack.c.b16 %v2176, %v2175
      %v2184 = vpack.c.b16 %v2178, %v2177
      %v2185 = vpack.c.b16 %v2180, %v2179
      %v2186 = vpack.c.b16 %v2182, %v2181
      %v2192 = vsel %vm969, %v2166, 0
      %2194 = vmatprep.subr.bf16.mxu0 0
      %2195 = vmatpush1.bf16.msra.mxu0 0
      %2196 = vmatprep.subr.bf16.mxu0 0
      %2197 = vmatpush1.bf16.msra.mxu0 0
      %2198 = vmatprep.subr.bf16.mxu0 0
      %2199 = vmatpush1.bf16.msra.mxu0 0
      %2200 = vmatprep.subr.bf16.mxu0 0
      %2201 = vmatpush1.bf16.msra.mxu0 0
      %2202 = vmatprep.subr.bf16.mxu0 0
      %2203 = vmatpush1.bf16.msra.mxu0 %v2186
      %2204 = vmatprep.subr.bf16.mxu0 0
      %2205 = vmatpush1.bf16.msra.mxu0 %v2185
      %2206 = vmatprep.subr.bf16.mxu0 0
      %2207 = vmatpush1.bf16.msra.mxu0 %v2184
      %2208 = vmatprep.subr.bf16.mxu0 0
      %2209 = vmatpush1.bf16.msra.mxu0 %v2183
      %2210 = vmatprep.subr.bf16.mxu0 0
      %2211 = vmatpush2.bf16.msra.mxu0 0
      %2212 = vmatprep.subr.bf16.mxu0 0
      %2213 = vmatpush2.bf16.msra.mxu0 0
      %2214 = vmatprep.subr.bf16.mxu0 0
      %2215 = vmatpush2.bf16.msra.mxu0 0
      %2216 = vmatprep.subr.bf16.mxu0 0
      %2217 = vmatpush2.bf16.msra.mxu0 0
      %2218 = vmatprep.subr.bf16.mxu0 0
      %2219 = vmatpush2.bf16.msra.mxu0 0
      %2220 = vmatprep.subr.bf16.mxu0 0
      %2221 = vmatpush2.bf16.msra.mxu0 0
      %2222 = vmatprep.subr.bf16.mxu0 0
      %2223 = vmatpush2.bf16.msra.mxu0 0
      %2224 = vmatprep.subr.bf16.mxu0 0
      %2225 = vmatpush2.bf16.msra.mxu0 0
      %2226 = vmatprep.mubr.bf16.mxu0 0
      %2227 = vmatmul.mubr.bf16.gmra.mxu0 %v1327
      %v2228 = vpop.f32.mrf.mxu0
      %v2229 = vadd.f32 0.0, %v2228
      %v2230 = vpop.f32.mrf.mxu0
      %v2231 = vpop.f32.mrf.mxu0
      %v2232 = vadd.f32 0.0, %v2231
      %v2233 = vpop.f32.mrf.mxu0
      %2234 = vmatprep.mubr.bf16.mxu0 0
      %2235 = vmatmul.mubr.bf16.gmra.mxu0 %v1330
      %v2236 = vpop.f32.mrf.mxu0
      %v2237 = vadd.f32 0.0, %v2236
      %v2238 = vpop.f32.mrf.mxu0
      %v2239 = vpop.f32.mrf.mxu0
      %v2240 = vadd.f32 0.0, %v2239
      %v2241 = vpop.f32.mrf.mxu0
      %2242 = vmatprep.mubr.bf16.mxu0 0
      %2243 = vmatmul.mubr.bf16.gmra.mxu0 %v1333
      %v2244 = vpop.f32.mrf.mxu0
      %v2245 = vadd.f32 0.0, %v2244
      %v2246 = vpop.f32.mrf.mxu0
      %v2247 = vpop.f32.mrf.mxu0
      %v2248 = vadd.f32 0.0, %v2247
      %v2249 = vpop.f32.mrf.mxu0
      %2250 = vmatprep.mubr.bf16.mxu0 0
      %2251 = vmatmul.mubr.bf16.gmra.mxu0 %v1336
      %v2252 = vpop.f32.mrf.mxu0
      %v2253 = vadd.f32 0.0, %v2252
      %v2254 = vpop.f32.mrf.mxu0
      %v2255 = vpop.f32.mrf.mxu0
      %v2256 = vadd.f32 0.0, %v2255
      %v2257 = vpop.f32.mrf.mxu0
      %2258 = vmatprep.mubr.bf16.mxu0 0
      %2259 = vmatmul.mubr.bf16.gmra.mxu0 %v1764
      %v2260 = vpop.f32.mrf.mxu0
      %v2261 = vadd.f32 0.0, %v2260
      %v2262 = vpop.f32.mrf.mxu0
      %v2263 = vpop.f32.mrf.mxu0
      %v2264 = vadd.f32 0.0, %v2263
      %v2265 = vpop.f32.mrf.mxu0
      %2266 = vmatprep.mubr.bf16.mxu0 0
      %2267 = vmatmul.mubr.bf16.gmra.mxu0 %v2192
      %v2268 = vpop.f32.mrf.mxu0
      %v2269 = vadd.f32 0.0, %v2268
      %v2270 = vpop.f32.mrf.mxu0
      %v2271 = vpop.f32.mrf.mxu0
      %v2272 = vadd.f32 0.0, %v2271
      %v2273 = vpop.f32.mrf.mxu0
      %2274 = vdwg.mxu0
      %v2275 = vadd.f32 %v2136, %v2229
      %v2276 = vadd.f32 %v2137, %v2232
      %v2277 = vadd.f32 %v2138, %v2237
      %v2278 = vadd.f32 %v2139, %v2240
      %v2279 = vadd.f32 %v2140, %v2245
      %v2280 = vadd.f32 %v2141, %v2248
      %v2281 = vadd.f32 %v2142, %v2253
      %v2282 = vadd.f32 %v2143, %v2256
      %v2283 = vadd.f32 %v2144, %v2261
      %v2284 = vadd.f32 %v2145, %v2264
      %v2285 = vadd.f32 %v2146, %v2269
      %v2286 = vadd.f32 %v2147, %v2272
      %v2287 = vld [vmem:[%s3] sm:$0x1]
      %v2289 = vlaneseq
      %v2290 = vshrl.u32 %v2289, 7
      %v2291 = vsub.s32 0, %v2290
      %v2292 = vrot.slane %v2287, %v2291
      %v2294 = vmul.f32 %v2275, %v2292
      %v2295 = vmul.f32 %v2276, %v2292
      %v2296 = vmul.f32 %v2277, %v2292
      %v2297 = vmul.f32 %v2278, %v2292
      %v2298 = vmul.f32 %v2279, %v2292
      %v2299 = vmul.f32 %v2280, %v2292
      %v2300 = vmul.f32 %v2281, %v2292
      %v2301 = vmul.f32 %v2282, %v2292
      %v2302 = vmul.f32 %v2283, %v2292
      %v2303 = vmul.f32 %v2284, %v2292
      %v2304 = vmul.f32 %v2285, %v2292
      %v2305 = vmul.f32 %v2286, %v2292
      %v2306 = vld [vmem:[%s4] sm:$0x1]
      %v2308 = vlaneseq
      %v2309 = vshrl.u32 %v2308, 7
      %v2310 = vsub.s32 0, %v2309
      %v2311 = vrot.slane %v2306, %v2310
      %v2313 = vadd.f32 %v2294, %v2311
      %v2314 = vadd.f32 %v2295, %v2311
      %v2315 = vadd.f32 %v2296, %v2311
      %v2316 = vadd.f32 %v2297, %v2311
      %v2317 = vadd.f32 %v2298, %v2311
      %v2318 = vadd.f32 %v2299, %v2311
      %v2319 = vadd.f32 %v2300, %v2311
      %v2320 = vadd.f32 %v2301, %v2311
      %v2321 = vadd.f32 %v2302, %v2311
      %v2322 = vadd.f32 %v2303, %v2311
      %v2323 = vadd.f32 %v2304, %v2311
      %v2324 = vadd.f32 %v2305, %v2311
      %v2325 = vmax.f32 %v2313, 0.0
      %v2326 = vmax.f32 %v2314, 0.0
      %v2327 = vmax.f32 %v2315, 0.0
      %v2328 = vmax.f32 %v2316, 0.0
      %v2329 = vmax.f32 %v2317, 0.0
      %v2330 = vmax.f32 %v2318, 0.0
      %v2331 = vmax.f32 %v2319, 0.0
      %v2332 = vmax.f32 %v2320, 0.0
      %v2333 = vmax.f32 %v2321, 0.0
      %v2334 = vmax.f32 %v2322, 0.0
      %v2335 = vmax.f32 %v2323, 0.0
      %v2336 = vmax.f32 %v2324, 0.0
      %v2337 = vld [vmem:[%s446] sm:$0xff]
      %v2338 = vld [vmem:[%s446 + $0x8] sm:$0xff]
      %v2339 = vld [vmem:[%s446 + $0x10] sm:$0xff]
      %v2340 = vld [vmem:[%s446 + $0x18] sm:$0xff]
      %v2341 = vld [vmem:[%s446 + $0x20] sm:$0xff]
      %v2342 = vld [vmem:[%s446 + $0x28] sm:$0xff]
      %v2343 = vld [vmem:[%s446 + $0x30] sm:$0xff]
      %v2344 = vld [vmem:[%s446 + $0x38] sm:$0xff]
      %v2345 = vld [vmem:[%s446 + $0x40] sm:$0xff]
      %v2346 = vld [vmem:[%s446 + $0x48] sm:$0xff]
      %v2347 = vld [vmem:[%s446 + $0x50] sm:$0xff]
      %v2348 = vld [vmem:[%s446 + $0x58] sm:$0xff]
      %2350 = vset.pattern.permute.xlu0 0
      %2351 = vperm.xlu0 %2350, %v2337
      %v2352 = vpop.permute.xlu0 %2351
      %2355 = vset.pattern.permute.xlu0 0
      %2356 = vperm.xlu0 %2355, %v2338
      %v2357 = vpop.permute.xlu0 %2356
      %2360 = vset.pattern.permute.xlu0 0
      %2361 = vperm.xlu0 %2360, %v2339
      %v2362 = vpop.permute.xlu0 %2361
      %2365 = vset.pattern.permute.xlu0 0
      %2366 = vperm.xlu0 %2365, %v2340
      %v2367 = vpop.permute.xlu0 %2366
      %2370 = vset.pattern.permute.xlu0 0
      %2371 = vperm.xlu0 %2370, %v2341
      %v2372 = vpop.permute.xlu0 %2371
      %2375 = vset.pattern.permute.xlu0 0
      %2376 = vperm.xlu0 %2375, %v2342
      %v2377 = vpop.permute.xlu0 %2376
      %2380 = vset.pattern.permute.xlu0 0
      %2381 = vperm.xlu0 %2380, %v2343
      %v2382 = vpop.permute.xlu0 %2381
      %2385 = vset.pattern.permute.xlu0 0
      %2386 = vperm.xlu0 %2385, %v2344
      %v2387 = vpop.permute.xlu0 %2386
      %2390 = vset.pattern.permute.xlu0 0
      %2391 = vperm.xlu0 %2390, %v2345
      %v2392 = vpop.permute.xlu0 %2391
      %2395 = vset.pattern.permute.xlu0 0
      %2396 = vperm.xlu0 %2395, %v2346
      %v2397 = vpop.permute.xlu0 %2396
      %2400 = vset.pattern.permute.xlu0 0
      %2401 = vperm.xlu0 %2400, %v2347
      %v2402 = vpop.permute.xlu0 %2401
      %2405 = vset.pattern.permute.xlu0 0
      %2406 = vperm.xlu0 %2405, %v2348
      %v2407 = vpop.permute.xlu0 %2406
      %v2409 = vmul.f32 %v2325, %v2352
      %v2410 = vmul.f32 %v2326, %v2357
      %v2411 = vmul.f32 %v2327, %v2362
      %v2412 = vmul.f32 %v2328, %v2367
      %v2413 = vmul.f32 %v2329, %v2372
      %v2414 = vmul.f32 %v2330, %v2377
      %v2415 = vmul.f32 %v2331, %v2382
      %v2416 = vmul.f32 %v2332, %v2387
      %v2417 = vmul.f32 %v2333, %v2392
      %v2418 = vmul.f32 %v2334, %v2397
      %v2419 = vmul.f32 %v2335, %v2402
      %v2420 = vmul.f32 %v2336, %v2407
      %v2421 = vpack.c.bf16 %v2410, %v2409
      %v2422 = vpack.c.bf16 %v2412, %v2411
      %v2423 = vpack.c.bf16 %v2414, %v2413
      %v2424 = vpack.c.bf16 %v2416, %v2415
      %v2425 = vpack.c.bf16 %v2418, %v2417
      %v2426 = vpack.c.bf16 %v2420, %v2419
      %v2428 = vshrl.u32 %v2421, 16
      %v2430 = vshll.u32 %v2421, 16
      %v2432 = vrot.slane %v2430, 1
      %v2433 = vor.u32 %v2428, %v2432
      %v2435 = vshrl.u32 %v2422, 16
      %v2437 = vshll.u32 %v2422, 16
      %v2439 = vrot.slane %v2437, 1
      %v2440 = vor.u32 %v2435, %v2439
      %v2442 = vshrl.u32 %v2423, 16
      %v2444 = vshll.u32 %v2423, 16
      %v2446 = vrot.slane %v2444, 1
      %v2447 = vor.u32 %v2442, %v2446
      %v2449 = vshrl.u32 %v2424, 16
      %v2451 = vshll.u32 %v2424, 16
      %v2453 = vrot.slane %v2451, 1
      %v2454 = vor.u32 %v2449, %v2453
      %v2459 = vrot.slane %v2421, 1
      %v2460 = vrot.slane %v2422, 1
      %v2461 = vrot.slane %v2423, 1
      %v2462 = vrot.slane %v2424, 1
      %v2463 = vunpack.c.l.b16 %v2421
      %v2464 = vunpack.c.l.b16 %v2433
      %v2465 = vunpack.c.l.b16 %v2459
      %v2466 = vunpack.c.h.b16 %v2421
      %v2467 = vunpack.c.h.b16 %v2433
      %v2468 = vunpack.c.h.b16 %v2459
      %v2469 = vunpack.c.l.b16 %v2422
      %v2470 = vunpack.c.l.b16 %v2440
      %v2471 = vunpack.c.l.b16 %v2460
      %v2472 = vunpack.c.h.b16 %v2422
      %v2473 = vunpack.c.h.b16 %v2440
      %v2474 = vunpack.c.h.b16 %v2460
      %v2475 = vunpack.c.l.b16 %v2423
      %v2476 = vunpack.c.l.b16 %v2447
      %v2477 = vunpack.c.l.b16 %v2461
      %v2478 = vunpack.c.h.b16 %v2423
      %v2479 = vunpack.c.h.b16 %v2447
      %v2480 = vunpack.c.h.b16 %v2461
      %v2481 = vunpack.c.l.b16 %v2424
      %v2482 = vunpack.c.l.b16 %v2454
      %v2483 = vunpack.c.l.b16 %v2462
      %v2484 = vunpack.c.h.b16 %v2424
      %v2485 = vunpack.c.h.b16 %v2454
      %v2486 = vunpack.c.h.b16 %v2462
      %v2487 = vpack.c.b16 %v2464, %v2463
      %v2488 = vpack.c.b16 %v2465, %v2465
      %v2489 = vpack.c.b16 %v2467, %v2466
      %v2490 = vpack.c.b16 %v2468, %v2468
      %v2491 = vpack.c.b16 %v2470, %v2469
      %v2492 = vpack.c.b16 %v2471, %v2471
      %v2493 = vpack.c.b16 %v2473, %v2472
      %v2494 = vpack.c.b16 %v2474, %v2474
      %v2495 = vpack.c.b16 %v2476, %v2475
      %v2496 = vpack.c.b16 %v2477, %v2477
      %v2497 = vpack.c.b16 %v2479, %v2478
      %v2498 = vpack.c.b16 %v2480, %v2480
      %v2499 = vpack.c.b16 %v2482, %v2481
      %v2500 = vpack.c.b16 %v2483, %v2483
      %v2501 = vpack.c.b16 %v2485, %v2484
      %v2502 = vpack.c.b16 %v2486, %v2486
      %vm2503 = vsmask.f32 2304
      %vm2504 = vsmask.f32 6416
      %vm2505 = vmor %vm2503, %vm2504
      %v2507 = vshrl.u32 %v2487, 16
      %v2509 = vrot.slane %v2507, 5
      %v2510 = vshll.u32 %v2487, 16
      %v2512 = vrot.slane %v2510, 6
      %v2513 = vor.u32 %v2509, %v2512
      %v2514 = vrot.slane %v2513, 4
      %v2516 = vshrl.u32 %v2489, 16
      %v2518 = vrot.slane %v2516, 5
      %v2519 = vshll.u32 %v2489, 16
      %v2521 = vrot.slane %v2519, 6
      %v2522 = vor.u32 %v2518, %v2521
      %v2523 = vsel %vm2505, %v2514, %v2522
      %v2525 = vshrl.u32 %v2488, 16
      %v2527 = vrot.slane %v2525, 5
      %v2528 = vshll.u32 %v2488, 16
      %v2530 = vrot.slane %v2528, 6
      %v2531 = vor.u32 %v2527, %v2530
      %v2532 = vrot.slane %v2531, 4
      %v2534 = vshrl.u32 %v2490, 16
      %v2536 = vrot.slane %v2534, 5
      %v2537 = vshll.u32 %v2490, 16
      %v2539 = vrot.slane %v2537, 6
      %v2540 = vor.u32 %v2536, %v2539
      %v2541 = vsel %vm2505, %v2532, %v2540
      %v2543 = vshrl.u32 %v2491, 16
      %v2545 = vrot.slane %v2543, 5
      %v2546 = vshll.u32 %v2491, 16
      %v2548 = vrot.slane %v2546, 6
      %v2549 = vor.u32 %v2545, %v2548
      %v2550 = vrot.slane %v2549, 4
      %v2552 = vshrl.u32 %v2493, 16
      %v2554 = vrot.slane %v2552, 5
      %v2555 = vshll.u32 %v2493, 16
      %v2557 = vrot.slane %v2555, 6
      %v2558 = vor.u32 %v2554, %v2557
      %v2559 = vsel %vm2505, %v2550, %v2558
      %v2561 = vshrl.u32 %v2492, 16
      %v2563 = vrot.slane %v2561, 5
      %v2564 = vshll.u32 %v2492, 16
      %v2566 = vrot.slane %v2564, 6
      %v2567 = vor.u32 %v2563, %v2566
      %v2568 = vrot.slane %v2567, 4
      %v2570 = vshrl.u32 %v2494, 16
      %v2572 = vrot.slane %v2570, 5
      %v2573 = vshll.u32 %v2494, 16
      %v2575 = vrot.slane %v2573, 6
      %v2576 = vor.u32 %v2572, %v2575
      %v2577 = vsel %vm2505, %v2568, %v2576
      %v2579 = vshrl.u32 %v2495, 16
      %v2581 = vrot.slane %v2579, 5
      %v2582 = vshll.u32 %v2495, 16
      %v2584 = vrot.slane %v2582, 6
      %v2585 = vor.u32 %v2581, %v2584
      %v2586 = vrot.slane %v2585, 4
      %v2588 = vshrl.u32 %v2497, 16
      %v2590 = vrot.slane %v2588, 5
      %v2591 = vshll.u32 %v2497, 16
      %v2593 = vrot.slane %v2591, 6
      %v2594 = vor.u32 %v2590, %v2593
      %v2595 = vsel %vm2505, %v2586, %v2594
      %v2597 = vshrl.u32 %v2496, 16
      %v2599 = vrot.slane %v2597, 5
      %v2600 = vshll.u32 %v2496, 16
      %v2602 = vrot.slane %v2600, 6
      %v2603 = vor.u32 %v2599, %v2602
      %v2604 = vrot.slane %v2603, 4
      %v2606 = vshrl.u32 %v2498, 16
      %v2608 = vrot.slane %v2606, 5
      %v2609 = vshll.u32 %v2498, 16
      %v2611 = vrot.slane %v2609, 6
      %v2612 = vor.u32 %v2608, %v2611
      %v2613 = vsel %vm2505, %v2604, %v2612
      %v2615 = vshrl.u32 %v2499, 16
      %v2617 = vrot.slane %v2615, 5
      %v2618 = vshll.u32 %v2499, 16
      %v2620 = vrot.slane %v2618, 6
      %v2621 = vor.u32 %v2617, %v2620
      %v2622 = vrot.slane %v2621, 4
      %v2624 = vshrl.u32 %v2501, 16
      %v2626 = vrot.slane %v2624, 5
      %v2627 = vshll.u32 %v2501, 16
      %v2629 = vrot.slane %v2627, 6
      %v2630 = vor.u32 %v2626, %v2629
      %v2631 = vsel %vm2505, %v2622, %v2630
      %v2633 = vshrl.u32 %v2500, 16
      %v2635 = vrot.slane %v2633, 5
      %v2636 = vshll.u32 %v2500, 16
      %v2638 = vrot.slane %v2636, 6
      %v2639 = vor.u32 %v2635, %v2638
      %v2640 = vrot.slane %v2639, 4
      %v2642 = vshrl.u32 %v2502, 16
      %v2644 = vrot.slane %v2642, 5
      %v2645 = vshll.u32 %v2502, 16
      %v2647 = vrot.slane %v2645, 6
      %v2648 = vor.u32 %v2644, %v2647
      %v2649 = vsel %vm2505, %v2640, %v2648
      %v2650 = vld [vmem:[%s5] sm:$0xf]
      %v2651 = vld [vmem:[%s5 + $0x4] sm:$0xf]
      %v2652 = vld [vmem:[%s5 + $0x8] sm:$0xf]
      %v2653 = vld [vmem:[%s5 + $0xc] sm:$0xf]
      %v2654 = vld [vmem:[%s5 + $0x10] sm:$0xf]
      %v2655 = vld [vmem:[%s5 + $0x14] sm:$0xf]
      %v2656 = vld [vmem:[%s5 + $0x18] sm:$0xf]
      %v2657 = vld [vmem:[%s5 + $0x1c] sm:$0xf]
      %v2658 = vld [vmem:[%s5 + $0x20] sm:$0xf]
      %v2659 = vld [vmem:[%s5 + $0x24] sm:$0xf]
      %v2660 = vld [vmem:[%s5 + $0x28] sm:$0xf]
      %v2661 = vld [vmem:[%s5 + $0x2c] sm:$0xf]
      %v2662 = vld [vmem:[%s5 + $0x30] sm:$0xf]
      %v2663 = vld [vmem:[%s5 + $0x34] sm:$0xf]
      %v2664 = vld [vmem:[%s5 + $0x38] sm:$0xf]
      %v2665 = vld [vmem:[%s5 + $0x3c] sm:$0xf]
      %v2666 = vld [vmem:[%s5 + $0x40] sm:$0xf]
      %v2667 = vld [vmem:[%s5 + $0x44] sm:$0xf]
      %v2668 = vld [vmem:[%s5 + $0x48] sm:$0xf]
      %v2669 = vld [vmem:[%s5 + $0x4c] sm:$0xf]
      %v2670 = vld [vmem:[%s5 + $0x50] sm:$0xf]
      %v2671 = vld [vmem:[%s5 + $0x54] sm:$0xf]
      %v2672 = vld [vmem:[%s5 + $0x58] sm:$0xf]
      %v2673 = vld [vmem:[%s5 + $0x5c] sm:$0xf]
      %v2674 = vld [vmem:[%s5 + $0x60] sm:$0xf]
      %v2675 = vld [vmem:[%s5 + $0x64] sm:$0xf]
      %v2676 = vld [vmem:[%s5 + $0x68] sm:$0xf]
      %v2677 = vld [vmem:[%s5 + $0x6c] sm:$0xf]
      %v2678 = vld [vmem:[%s5 + $0x70] sm:$0xf]
      %v2679 = vld [vmem:[%s5 + $0x74] sm:$0xf]
      %v2680 = vld [vmem:[%s5 + $0x78] sm:$0xf]
      %v2681 = vld [vmem:[%s5 + $0x7c] sm:$0xf]
      %v2682 = vld [vmem:[%s5 + $0x80] sm:$0xf]
      %v2683 = vld [vmem:[%s5 + $0x84] sm:$0xf]
      %v2684 = vld [vmem:[%s5 + $0x88] sm:$0xf]
      %v2685 = vld [vmem:[%s5 + $0x8c] sm:$0xf]
      %v2686 = vld [vmem:[%s5 + $0x90] sm:$0xf]
      %v2687 = vld [vmem:[%s5 + $0x94] sm:$0xf]
      %v2688 = vld [vmem:[%s5 + $0x98] sm:$0xf]
      %v2689 = vld [vmem:[%s5 + $0x9c] sm:$0xf]
      %v2690 = vld [vmem:[%s5 + $0xa0] sm:$0xf]
      %v2691 = vld [vmem:[%s5 + $0xa4] sm:$0xf]
      %v2692 = vld [vmem:[%s5 + $0xa8] sm:$0xf]
      %v2693 = vld [vmem:[%s5 + $0xac] sm:$0xf]
      %v2694 = vld [vmem:[%s5 + $0xb0] sm:$0xf]
      %v2695 = vld [vmem:[%s5 + $0xb4] sm:$0xf]
      %v2696 = vld [vmem:[%s5 + $0xb8] sm:$0xf]
      %v2697 = vld [vmem:[%s5 + $0xbc] sm:$0xf]
      %v2699 = vshrl.u32 %v2425, 16
      %v2701 = vshll.u32 %v2425, 16
      %v2703 = vrot.slane %v2701, 1
      %v2704 = vor.u32 %v2699, %v2703
      %v2706 = vrot.slane %v2425, 1
      %v2707 = vunpack.c.l.b16 %v2425
      %v2708 = vunpack.c.l.b16 %v2704
      %v2709 = vunpack.c.l.b16 %v2706
      %v2710 = vunpack.c.h.b16 %v2425
      %v2711 = vunpack.c.h.b16 %v2704
      %v2712 = vunpack.c.h.b16 %v2706
      %v2713 = vpack.c.b16 %v2708, %v2707
      %v2714 = vpack.c.b16 %v2709, %v2709
      %v2715 = vpack.c.b16 %v2711, %v2710
      %v2716 = vpack.c.b16 %v2712, %v2712
      %v2718 = vshrl.u32 %v2713, 16
      %v2720 = vrot.slane %v2718, 5
      %v2721 = vshll.u32 %v2713, 16
      %v2723 = vrot.slane %v2721, 6
      %v2724 = vor.u32 %v2720, %v2723
      %v2725 = vrot.slane %v2724, 4
      %v2727 = vshrl.u32 %v2715, 16
      %v2729 = vrot.slane %v2727, 5
      %v2730 = vshll.u32 %v2715, 16
      %v2732 = vrot.slane %v2730, 6
      %v2733 = vor.u32 %v2729, %v2732
      %v2734 = vsel %vm2505, %v2725, %v2733
      %v2736 = vshrl.u32 %v2714, 16
      %v2738 = vrot.slane %v2736, 5
      %v2739 = vshll.u32 %v2714, 16
      %v2741 = vrot.slane %v2739, 6
      %v2742 = vor.u32 %v2738, %v2741
      %v2743 = vrot.slane %v2742, 4
      %v2745 = vshrl.u32 %v2716, 16
      %v2747 = vrot.slane %v2745, 5
      %v2748 = vshll.u32 %v2716, 16
      %v2750 = vrot.slane %v2748, 6
      %v2751 = vor.u32 %v2747, %v2750
      %v2752 = vsel %vm2505, %v2743, %v2751
      %s2753 = scalar_lea.vmem %s5, 192
      %v2754 = vld [vmem:[%s2753] sm:$0xf]
      %v2755 = vld [vmem:[%s2753 + $0x4] sm:$0xf]
      %v2756 = vld [vmem:[%s2753 + $0x8] sm:$0xf]
      %v2757 = vld [vmem:[%s2753 + $0xc] sm:$0xf]
      %v2758 = vld [vmem:[%s2753 + $0x10] sm:$0xf]
      %v2759 = vld [vmem:[%s2753 + $0x14] sm:$0xf]
      %v2760 = vld [vmem:[%s2753 + $0x18] sm:$0xf]
      %v2761 = vld [vmem:[%s2753 + $0x1c] sm:$0xf]
      %v2762 = vld [vmem:[%s2753 + $0x20] sm:$0xf]
      %v2763 = vld [vmem:[%s2753 + $0x24] sm:$0xf]
      %v2764 = vld [vmem:[%s2753 + $0x28] sm:$0xf]
      %v2765 = vld [vmem:[%s2753 + $0x2c] sm:$0xf]
      %v2766 = vld [vmem:[%s2753 + $0x30] sm:$0xf]
      %v2767 = vld [vmem:[%s2753 + $0x34] sm:$0xf]
      %v2768 = vld [vmem:[%s2753 + $0x38] sm:$0xf]
      %v2769 = vld [vmem:[%s2753 + $0x3c] sm:$0xf]
      %v2770 = vld [vmem:[%s2753 + $0x40] sm:$0xf]
      %v2771 = vld [vmem:[%s2753 + $0x44] sm:$0xf]
      %v2772 = vld [vmem:[%s2753 + $0x48] sm:$0xf]
      %v2773 = vld [vmem:[%s2753 + $0x4c] sm:$0xf]
      %v2774 = vld [vmem:[%s2753 + $0x50] sm:$0xf]
      %v2775 = vld [vmem:[%s2753 + $0x54] sm:$0xf]
      %v2776 = vld [vmem:[%s2753 + $0x58] sm:$0xf]
      %v2777 = vld [vmem:[%s2753 + $0x5c] sm:$0xf]
      %v2778 = vld [vmem:[%s2753 + $0x60] sm:$0xf]
      %v2779 = vld [vmem:[%s2753 + $0x64] sm:$0xf]
      %v2780 = vld [vmem:[%s2753 + $0x68] sm:$0xf]
      %v2781 = vld [vmem:[%s2753 + $0x6c] sm:$0xf]
      %v2782 = vld [vmem:[%s2753 + $0x70] sm:$0xf]
      %v2783 = vld [vmem:[%s2753 + $0x74] sm:$0xf]
      %v2784 = vld [vmem:[%s2753 + $0x78] sm:$0xf]
      %v2785 = vld [vmem:[%s2753 + $0x7c] sm:$0xf]
      %v2786 = vld [vmem:[%s2753 + $0x80] sm:$0xf]
      %v2787 = vld [vmem:[%s2753 + $0x84] sm:$0xf]
      %v2788 = vld [vmem:[%s2753 + $0x88] sm:$0xf]
      %v2789 = vld [vmem:[%s2753 + $0x8c] sm:$0xf]
      %v2790 = vld [vmem:[%s2753 + $0x90] sm:$0xf]
      %v2791 = vld [vmem:[%s2753 + $0x94] sm:$0xf]
      %v2792 = vld [vmem:[%s2753 + $0x98] sm:$0xf]
      %v2793 = vld [vmem:[%s2753 + $0x9c] sm:$0xf]
      %v2794 = vld [vmem:[%s2753 + $0xa0] sm:$0xf]
      %v2795 = vld [vmem:[%s2753 + $0xa4] sm:$0xf]
      %v2796 = vld [vmem:[%s2753 + $0xa8] sm:$0xf]
      %v2797 = vld [vmem:[%s2753 + $0xac] sm:$0xf]
      %v2798 = vld [vmem:[%s2753 + $0xb0] sm:$0xf]
      %v2799 = vld [vmem:[%s2753 + $0xb4] sm:$0xf]
      %v2800 = vld [vmem:[%s2753 + $0xb8] sm:$0xf]
      %v2801 = vld [vmem:[%s2753 + $0xbc] sm:$0xf]
      %v2802 = vunpack.c.l.b16 %v2559
      %v2803 = vunpack.c.h.b16 %v2559
      %v2804 = vunpack.c.l.b16 %v2577
      %v2805 = vunpack.c.l.b16 %v2595
      %v2806 = vunpack.c.h.b16 %v2595
      %v2807 = vunpack.c.l.b16 %v2613
      %v2808 = vunpack.c.l.b16 %v2631
      %v2809 = vunpack.c.h.b16 %v2631
      %v2810 = vunpack.c.l.b16 %v2649
      %v2811 = vunpack.c.l.b16 %v2734
      %v2812 = vunpack.c.h.b16 %v2734
      %v2813 = vunpack.c.l.b16 %v2752
      %v2814 = vpack.c.b16 %v2805, %v2802
      %v2815 = vpack.c.b16 %v2806, %v2803
      %v2816 = vpack.c.b16 %v2807, %v2804
      %v2817 = vpack.c.b16 %v2811, %v2808
      %v2818 = vpack.c.b16 %v2812, %v2809
      %v2819 = vpack.c.b16 %v2813, %v2810
      %v2874 = vunpack.c.l.b16 %v2754
      %v2875 = vunpack.c.l.b16 %v2755
      %v2876 = vunpack.c.l.b16 %v2756
      %v2877 = vunpack.c.l.b16 %v2757
      %v2878 = vunpack.c.l.b16 %v2758
      %v2879 = vunpack.c.l.b16 %v2759
      %v2880 = vunpack.c.l.b16 %v2760
      %v2881 = vunpack.c.l.b16 %v2761
      %v2882 = vunpack.c.l.b16 %v2762
      %v2883 = vunpack.c.l.b16 %v2763
      %v2884 = vunpack.c.l.b16 %v2764
      %v2885 = vunpack.c.l.b16 %v2765
      %v2886 = vunpack.c.l.b16 %v2766
      %v2887 = vunpack.c.l.b16 %v2767
      %v2888 = vunpack.c.l.b16 %v2768
      %v2889 = vunpack.c.l.b16 %v2769
      %v2890 = vunpack.c.l.b16 %v2770
      %v2891 = vunpack.c.l.b16 %v2771
      %v2892 = vunpack.c.l.b16 %v2772
      %v2893 = vunpack.c.l.b16 %v2773
      %v2894 = vunpack.c.l.b16 %v2774
      %v2895 = vunpack.c.l.b16 %v2775
      %v2896 = vunpack.c.l.b16 %v2776
      %v2897 = vunpack.c.l.b16 %v2777
      %v2898 = vunpack.c.l.b16 %v2778
      %v2899 = vunpack.c.l.b16 %v2779
      %v2900 = vunpack.c.l.b16 %v2780
      %v2901 = vunpack.c.l.b16 %v2781
      %v2902 = vunpack.c.l.b16 %v2782
      %v2903 = vunpack.c.l.b16 %v2783
      %v2904 = vunpack.c.l.b16 %v2784
      %v2905 = vunpack.c.l.b16 %v2785
      %v2906 = vunpack.c.l.b16 %v2786
      %v2907 = vunpack.c.l.b16 %v2787
      %v2908 = vunpack.c.l.b16 %v2788
      %v2909 = vunpack.c.l.b16 %v2789
      %v2910 = vunpack.c.l.b16 %v2790
      %v2911 = vunpack.c.l.b16 %v2791
      %v2912 = vunpack.c.l.b16 %v2792
      %v2913 = vunpack.c.l.b16 %v2793
      %v2914 = vunpack.c.l.b16 %v2794
      %v2915 = vunpack.c.l.b16 %v2795
      %v2916 = vunpack.c.l.b16 %v2796
      %v2917 = vunpack.c.l.b16 %v2797
      %v2918 = vunpack.c.l.b16 %v2798
      %v2919 = vunpack.c.l.b16 %v2799
      %v2920 = vunpack.c.l.b16 %v2800
      %v2921 = vunpack.c.l.b16 %v2801
      %v2922 = vpack.c.b16 %v2875, %v2874
      %v2923 = vpack.c.b16 %v2877, %v2876
      %v2924 = vpack.c.b16 %v2879, %v2878
      %v2925 = vpack.c.b16 %v2881, %v2880
      %v2926 = vpack.c.b16 %v2883, %v2882
      %v2927 = vpack.c.b16 %v2885, %v2884
      %v2928 = vpack.c.b16 %v2887, %v2886
      %v2929 = vpack.c.b16 %v2889, %v2888
      %v2930 = vpack.c.b16 %v2891, %v2890
      %v2931 = vpack.c.b16 %v2893, %v2892
      %v2932 = vpack.c.b16 %v2895, %v2894
      %v2933 = vpack.c.b16 %v2897, %v2896
      %v2934 = vpack.c.b16 %v2899, %v2898
      %v2935 = vpack.c.b16 %v2901, %v2900
      %v2936 = vpack.c.b16 %v2903, %v2902
      %v2937 = vpack.c.b16 %v2905, %v2904
      %v2938 = vpack.c.b16 %v2907, %v2906
      %v2939 = vpack.c.b16 %v2909, %v2908
      %v2940 = vpack.c.b16 %v2911, %v2910
      %v2941 = vpack.c.b16 %v2913, %v2912
      %v2942 = vpack.c.b16 %v2915, %v2914
      %v2943 = vpack.c.b16 %v2917, %v2916
      %v2944 = vpack.c.b16 %v2919, %v2918
      %v2945 = vpack.c.b16 %v2921, %v2920
      %2970 = vmatprep.subr.bf16.mxu0 0
      %2971 = vmatpush1.bf16.msra.mxu0 %v2929
      %2972 = vmatprep.subr.bf16.mxu0 0
      %2973 = vmatpush1.bf16.msra.mxu0 %v2928
      %2974 = vmatprep.subr.bf16.mxu0 0
      %2975 = vmatpush1.bf16.msra.mxu0 %v2927
      %2976 = vmatprep.subr.bf16.mxu0 0
      %2977 = vmatpush1.bf16.msra.mxu0 %v2926
      %2978 = vmatprep.subr.bf16.mxu0 0
      %2979 = vmatpush1.bf16.msra.mxu0 %v2925
      %2980 = vmatprep.subr.bf16.mxu0 0
      %2981 = vmatpush1.bf16.msra.mxu0 %v2924
      %2982 = vmatprep.subr.bf16.mxu0 0
      %2983 = vmatpush1.bf16.msra.mxu0 %v2923
      %2984 = vmatprep.subr.bf16.mxu0 0
      %2985 = vmatpush1.bf16.msra.mxu0 %v2922
      %2986 = vmatprep.subr.bf16.mxu0 0
      %2987 = vmatpush2.bf16.msra.mxu0 %v2937
      %2988 = vmatprep.subr.bf16.mxu0 0
      %2989 = vmatpush2.bf16.msra.mxu0 %v2936
      %2990 = vmatprep.subr.bf16.mxu0 0
      %2991 = vmatpush2.bf16.msra.mxu0 %v2935
      %2992 = vmatprep.subr.bf16.mxu0 0
      %2993 = vmatpush2.bf16.msra.mxu0 %v2934
      %2994 = vmatprep.subr.bf16.mxu0 0
      %2995 = vmatpush2.bf16.msra.mxu0 %v2933
      %2996 = vmatprep.subr.bf16.mxu0 0
      %2997 = vmatpush2.bf16.msra.mxu0 %v2932
      %2998 = vmatprep.subr.bf16.mxu0 0
      %2999 = vmatpush2.bf16.msra.mxu0 %v2931
      %3000 = vmatprep.subr.bf16.mxu0 0
      %3001 = vmatpush2.bf16.msra.mxu0 %v2930
      %3002 = vmatprep.mubr.bf16.mxu0 %v2815
      %3003 = vmatmul.mubr.bf16.gmra.mxu0 %v2814
      %v3004 = vpop.f32.mrf.mxu0
      %v3005 = vadd.f32 0.0, %v3004
      %v3006 = vpop.f32.mrf.mxu0
      %v3007 = vpop.f32.mrf.mxu0
      %v3008 = vadd.f32 0.0, %v3007
      %v3009 = vpop.f32.mrf.mxu0
      %3010 = vmatprep.mubr.bf16.mxu0 %v2818
      %3011 = vmatmul.mubr.bf16.gmra.mxu0 %v2817
      %v3012 = vpop.f32.mrf.mxu0
      %v3013 = vadd.f32 0.0, %v3012
      %v3014 = vpop.f32.mrf.mxu0
      %v3015 = vpop.f32.mrf.mxu0
      %v3016 = vadd.f32 0.0, %v3015
      %v3017 = vpop.f32.mrf.mxu0
      %3018 = vdwg.mxu0
      %3019 = vmatprep.subr.bf16.mxu0 0
      %3020 = vmatpush1.bf16.msra.mxu0 %v2945
      %3021 = vmatprep.subr.bf16.mxu0 0
      %3022 = vmatpush1.bf16.msra.mxu0 %v2944
      %3023 = vmatprep.subr.bf16.mxu0 0
      %3024 = vmatpush1.bf16.msra.mxu0 %v2943
      %3025 = vmatprep.subr.bf16.mxu0 0
      %3026 = vmatpush1.bf16.msra.mxu0 %v2942
      %3027 = vmatprep.subr.bf16.mxu0 0
      %3028 = vmatpush1.bf16.msra.mxu0 %v2941
      %3029 = vmatprep.subr.bf16.mxu0 0
      %3030 = vmatpush1.bf16.msra.mxu0 %v2940
      %3031 = vmatprep.subr.bf16.mxu0 0
      %3032 = vmatpush1.bf16.msra.mxu0 %v2939
      %3033 = vmatprep.subr.bf16.mxu0 0
      %3034 = vmatpush1.bf16.msra.mxu0 %v2938
      %3035 = vmatprep.subr.bf16.mxu0 0
      %3036 = vmatpush2.bf16.msra.mxu0 0
      %3037 = vmatprep.subr.bf16.mxu0 0
      %3038 = vmatpush2.bf16.msra.mxu0 0
      %3039 = vmatprep.subr.bf16.mxu0 0
      %3040 = vmatpush2.bf16.msra.mxu0 0
      %3041 = vmatprep.subr.bf16.mxu0 0
      %3042 = vmatpush2.bf16.msra.mxu0 0
      %3043 = vmatprep.subr.bf16.mxu0 0
      %3044 = vmatpush2.bf16.msra.mxu0 0
      %3045 = vmatprep.subr.bf16.mxu0 0
      %3046 = vmatpush2.bf16.msra.mxu0 0
      %3047 = vmatprep.subr.bf16.mxu0 0
      %3048 = vmatpush2.bf16.msra.mxu0 0
      %3049 = vmatprep.subr.bf16.mxu0 0
      %3050 = vmatpush2.bf16.msra.mxu0 0
      %3051 = vmatprep.mubr.bf16.mxu0 0
      %3052 = vmatmul.mubr.bf16.gmra.mxu0 %v2816
      %v3053 = vpop.f32.mrf.mxu0
      %v3054 = vadd.f32 %v3005, %v3053
      %v3055 = vpop.f32.mrf.mxu0
      %v3056 = vpop.f32.mrf.mxu0
      %v3057 = vadd.f32 %v3008, %v3056
      %v3058 = vpop.f32.mrf.mxu0
      %3059 = vmatprep.mubr.bf16.mxu0 0
      %3060 = vmatmul.mubr.bf16.gmra.mxu0 %v2819
      %v3061 = vpop.f32.mrf.mxu0
      %v3062 = vadd.f32 %v3013, %v3061
      %v3063 = vpop.f32.mrf.mxu0
      %v3064 = vpop.f32.mrf.mxu0
      %v3065 = vadd.f32 %v3016, %v3064
      %v3066 = vpop.f32.mrf.mxu0
      %3067 = vdwg.mxu0
      %v3068 = vunpack.c.l.b16 %v2523
      %v3069 = vunpack.c.h.b16 %v2523
      %v3070 = vunpack.c.l.b16 %v2541
      %v3071 = vpack.c.b16 %v2802, %v3068
      %v3072 = vpack.c.b16 %v2803, %v3069
      %v3073 = vpack.c.b16 %v2804, %v3070
      %v3074 = vpack.c.b16 %v2808, %v2805
      %v3075 = vpack.c.b16 %v2809, %v2806
      %v3076 = vpack.c.b16 %v2810, %v2807
      %v3131 = vunpack.c.l.b16 %v2650
      %v3132 = vunpack.c.l.b16 %v2651
      %v3133 = vunpack.c.l.b16 %v2652
      %v3134 = vunpack.c.l.b16 %v2653
      %v3135 = vunpack.c.l.b16 %v2654
      %v3136 = vunpack.c.l.b16 %v2655
      %v3137 = vunpack.c.l.b16 %v2656
      %v3138 = vunpack.c.l.b16 %v2657
      %v3139 = vunpack.c.l.b16 %v2658
      %v3140 = vunpack.c.l.b16 %v2659
      %v3141 = vunpack.c.l.b16 %v2660
      %v3142 = vunpack.c.l.b16 %v2661
      %v3143 = vunpack.c.l.b16 %v2662
      %v3144 = vunpack.c.l.b16 %v2663
      %v3145 = vunpack.c.l.b16 %v2664
      %v3146 = vunpack.c.l.b16 %v2665
      %v3147 = vunpack.c.l.b16 %v2666
      %v3148 = vunpack.c.l.b16 %v2667
      %v3149 = vunpack.c.l.b16 %v2668
      %v3150 = vunpack.c.l.b16 %v2669
      %v3151 = vunpack.c.l.b16 %v2670
      %v3152 = vunpack.c.l.b16 %v2671
      %v3153 = vunpack.c.l.b16 %v2672
      %v3154 = vunpack.c.l.b16 %v2673
      %v3155 = vunpack.c.l.b16 %v2674
      %v3156 = vunpack.c.l.b16 %v2675
      %v3157 = vunpack.c.l.b16 %v2676
      %v3158 = vunpack.c.l.b16 %v2677
      %v3159 = vunpack.c.l.b16 %v2678
      %v3160 = vunpack.c.l.b16 %v2679
      %v3161 = vunpack.c.l.b16 %v2680
      %v3162 = vunpack.c.l.b16 %v2681
      %v3163 = vunpack.c.l.b16 %v2682
      %v3164 = vunpack.c.l.b16 %v2683
      %v3165 = vunpack.c.l.b16 %v2684
      %v3166 = vunpack.c.l.b16 %v2685
      %v3167 = vunpack.c.l.b16 %v2686
      %v3168 = vunpack.c.l.b16 %v2687
      %v3169 = vunpack.c.l.b16 %v2688
      %v3170 = vunpack.c.l.b16 %v2689
      %v3171 = vunpack.c.l.b16 %v2690
      %v3172 = vunpack.c.l.b16 %v2691
      %v3173 = vunpack.c.l.b16 %v2692
      %v3174 = vunpack.c.l.b16 %v2693
      %v3175 = vunpack.c.l.b16 %v2694
      %v3176 = vunpack.c.l.b16 %v2695
      %v3177 = vunpack.c.l.b16 %v2696
      %v3178 = vunpack.c.l.b16 %v2697
      %v3179 = vpack.c.b16 %v3132, %v3131
      %v3180 = vpack.c.b16 %v3134, %v3133
      %v3181 = vpack.c.b16 %v3136, %v3135
      %v3182 = vpack.c.b16 %v3138, %v3137
      %v3183 = vpack.c.b16 %v3140, %v3139
      %v3184 = vpack.c.b16 %v3142, %v3141
      %v3185 = vpack.c.b16 %v3144, %v3143
      %v3186 = vpack.c.b16 %v3146, %v3145
      %v3187 = vpack.c.b16 %v3148, %v3147
      %v3188 = vpack.c.b16 %v3150, %v3149
      %v3189 = vpack.c.b16 %v3152, %v3151
      %v3190 = vpack.c.b16 %v3154, %v3153
      %v3191 = vpack.c.b16 %v3156, %v3155
      %v3192 = vpack.c.b16 %v3158, %v3157
      %v3193 = vpack.c.b16 %v3160, %v3159
      %v3194 = vpack.c.b16 %v3162, %v3161
      %v3195 = vpack.c.b16 %v3164, %v3163
      %v3196 = vpack.c.b16 %v3166, %v3165
      %v3197 = vpack.c.b16 %v3168, %v3167
      %v3198 = vpack.c.b16 %v3170, %v3169
      %v3199 = vpack.c.b16 %v3172, %v3171
      %v3200 = vpack.c.b16 %v3174, %v3173
      %v3201 = vpack.c.b16 %v3176, %v3175
      %v3202 = vpack.c.b16 %v3178, %v3177
      %3227 = vmatprep.subr.bf16.mxu0 0
      %3228 = vmatpush1.bf16.msra.mxu0 %v3186
      %3229 = vmatprep.subr.bf16.mxu0 0
      %3230 = vmatpush1.bf16.msra.mxu0 %v3185
      %3231 = vmatprep.subr.bf16.mxu0 0
      %3232 = vmatpush1.bf16.msra.mxu0 %v3184
      %3233 = vmatprep.subr.bf16.mxu0 0
      %3234 = vmatpush1.bf16.msra.mxu0 %v3183
      %3235 = vmatprep.subr.bf16.mxu0 0
      %3236 = vmatpush1.bf16.msra.mxu0 %v3182
      %3237 = vmatprep.subr.bf16.mxu0 0
      %3238 = vmatpush1.bf16.msra.mxu0 %v3181
      %3239 = vmatprep.subr.bf16.mxu0 0
      %3240 = vmatpush1.bf16.msra.mxu0 %v3180
      %3241 = vmatprep.subr.bf16.mxu0 0
      %3242 = vmatpush1.bf16.msra.mxu0 %v3179
      %3243 = vmatprep.subr.bf16.mxu0 0
      %3244 = vmatpush2.bf16.msra.mxu0 %v3194
      %3245 = vmatprep.subr.bf16.mxu0 0
      %3246 = vmatpush2.bf16.msra.mxu0 %v3193
      %3247 = vmatprep.subr.bf16.mxu0 0
      %3248 = vmatpush2.bf16.msra.mxu0 %v3192
      %3249 = vmatprep.subr.bf16.mxu0 0
      %3250 = vmatpush2.bf16.msra.mxu0 %v3191
      %3251 = vmatprep.subr.bf16.mxu0 0
      %3252 = vmatpush2.bf16.msra.mxu0 %v3190
      %3253 = vmatprep.subr.bf16.mxu0 0
      %3254 = vmatpush2.bf16.msra.mxu0 %v3189
      %3255 = vmatprep.subr.bf16.mxu0 0
      %3256 = vmatpush2.bf16.msra.mxu0 %v3188
      %3257 = vmatprep.subr.bf16.mxu0 0
      %3258 = vmatpush2.bf16.msra.mxu0 %v3187
      %3259 = vmatprep.mubr.bf16.mxu0 %v3072
      %3260 = vmatmul.mubr.bf16.gmra.mxu0 %v3071
      %v3261 = vpop.f32.mrf.mxu0
      %v3262 = vadd.f32 %v3054, %v3261
      %v3263 = vpop.f32.mrf.mxu0
      %v3264 = vpop.f32.mrf.mxu0
      %v3265 = vadd.f32 %v3057, %v3264
      %v3266 = vpop.f32.mrf.mxu0
      %3267 = vmatprep.mubr.bf16.mxu0 %v3075
      %3268 = vmatmul.mubr.bf16.gmra.mxu0 %v3074
      %v3269 = vpop.f32.mrf.mxu0
      %v3270 = vadd.f32 %v3062, %v3269
      %v3271 = vpop.f32.mrf.mxu0
      %v3272 = vpop.f32.mrf.mxu0
      %v3273 = vadd.f32 %v3065, %v3272
      %v3274 = vpop.f32.mrf.mxu0
      %3275 = vdwg.mxu0
      %3276 = vmatprep.subr.bf16.mxu0 0
      %3277 = vmatpush1.bf16.msra.mxu0 %v3202
      %3278 = vmatprep.subr.bf16.mxu0 0
      %3279 = vmatpush1.bf16.msra.mxu0 %v3201
      %3280 = vmatprep.subr.bf16.mxu0 0
      %3281 = vmatpush1.bf16.msra.mxu0 %v3200
      %3282 = vmatprep.subr.bf16.mxu0 0
      %3283 = vmatpush1.bf16.msra.mxu0 %v3199
      %3284 = vmatprep.subr.bf16.mxu0 0
      %3285 = vmatpush1.bf16.msra.mxu0 %v3198
      %3286 = vmatprep.subr.bf16.mxu0 0
      %3287 = vmatpush1.bf16.msra.mxu0 %v3197
      %3288 = vmatprep.subr.bf16.mxu0 0
      %3289 = vmatpush1.bf16.msra.mxu0 %v3196
      %3290 = vmatprep.subr.bf16.mxu0 0
      %3291 = vmatpush1.bf16.msra.mxu0 %v3195
      %3292 = vmatprep.subr.bf16.mxu0 0
      %3293 = vmatpush2.bf16.msra.mxu0 0
      %3294 = vmatprep.subr.bf16.mxu0 0
      %3295 = vmatpush2.bf16.msra.mxu0 0
      %3296 = vmatprep.subr.bf16.mxu0 0
      %3297 = vmatpush2.bf16.msra.mxu0 0
      %3298 = vmatprep.subr.bf16.mxu0 0
      %3299 = vmatpush2.bf16.msra.mxu0 0
      %3300 = vmatprep.subr.bf16.mxu0 0
      %3301 = vmatpush2.bf16.msra.mxu0 0
      %3302 = vmatprep.subr.bf16.mxu0 0
      %3303 = vmatpush2.bf16.msra.mxu0 0
      %3304 = vmatprep.subr.bf16.mxu0 0
      %3305 = vmatpush2.bf16.msra.mxu0 0
      %3306 = vmatprep.subr.bf16.mxu0 0
      %3307 = vmatpush2.bf16.msra.mxu0 0
      %3308 = vmatprep.mubr.bf16.mxu0 0
      %3309 = vmatmul.mubr.bf16.gmra.mxu0 %v3073
      %v3310 = vpop.f32.mrf.mxu0
      %v3311 = vadd.f32 %v3262, %v3310
      %v3312 = vpop.f32.mrf.mxu0
      %v3313 = vpop.f32.mrf.mxu0
      %v3314 = vadd.f32 %v3265, %v3313
      %v3315 = vpop.f32.mrf.mxu0
      %3316 = vmatprep.mubr.bf16.mxu0 0
      %3317 = vmatmul.mubr.bf16.gmra.mxu0 %v3076
      %v3318 = vpop.f32.mrf.mxu0
      %v3319 = vadd.f32 %v3270, %v3318
      %v3320 = vpop.f32.mrf.mxu0
      %v3321 = vpop.f32.mrf.mxu0
      %v3322 = vadd.f32 %v3273, %v3321
      %v3323 = vpop.f32.mrf.mxu0
      %3324 = vdwg.mxu0
      %v3326 = vshrl.u32 %v2426, 16
      %v3328 = vshll.u32 %v2426, 16
      %v3330 = vrot.slane %v3328, 1
      %v3331 = vor.u32 %v3326, %v3330
      %v3333 = vrot.slane %v2426, 1
      %v3334 = vunpack.c.l.b16 %v2426
      %v3335 = vunpack.c.l.b16 %v3331
      %v3336 = vunpack.c.l.b16 %v3333
      %v3337 = vunpack.c.h.b16 %v2426
      %v3338 = vunpack.c.h.b16 %v3331
      %v3339 = vunpack.c.h.b16 %v3333
      %v3340 = vpack.c.b16 %v3335, %v3334
      %v3341 = vpack.c.b16 %v3336, %v3336
      %v3342 = vpack.c.b16 %v3338, %v3337
      %v3343 = vpack.c.b16 %v3339, %v3339
      %v3345 = vshrl.u32 %v3340, 16
      %v3347 = vrot.slane %v3345, 5
      %v3348 = vshll.u32 %v3340, 16
      %v3350 = vrot.slane %v3348, 6
      %v3351 = vor.u32 %v3347, %v3350
      %v3352 = vrot.slane %v3351, 4
      %v3354 = vshrl.u32 %v3342, 16
      %v3356 = vrot.slane %v3354, 5
      %v3357 = vshll.u32 %v3342, 16
      %v3359 = vrot.slane %v3357, 6
      %v3360 = vor.u32 %v3356, %v3359
      %v3361 = vsel %vm2505, %v3352, %v3360
      %v3363 = vshrl.u32 %v3341, 16
      %v3365 = vrot.slane %v3363, 5
      %v3366 = vshll.u32 %v3341, 16
      %v3368 = vrot.slane %v3366, 6
      %v3369 = vor.u32 %v3365, %v3368
      %v3370 = vrot.slane %v3369, 4
      %v3372 = vshrl.u32 %v3343, 16
      %v3374 = vrot.slane %v3372, 5
      %v3375 = vshll.u32 %v3343, 16
      %v3377 = vrot.slane %v3375, 6
      %v3378 = vor.u32 %v3374, %v3377
      %v3379 = vsel %vm2505, %v3370, %v3378
      %s3380 = scalar_lea.vmem %s5, 384
      %v3381 = vld [vmem:[%s3380] sm:$0xf]
      %v3382 = vld [vmem:[%s3380 + $0x4] sm:$0xf]
      %v3383 = vld [vmem:[%s3380 + $0x8] sm:$0xf]
      %v3384 = vld [vmem:[%s3380 + $0xc] sm:$0xf]
      %v3385 = vld [vmem:[%s3380 + $0x10] sm:$0xf]
      %v3386 = vld [vmem:[%s3380 + $0x14] sm:$0xf]
      %v3387 = vld [vmem:[%s3380 + $0x18] sm:$0xf]
      %v3388 = vld [vmem:[%s3380 + $0x1c] sm:$0xf]
      %v3389 = vld [vmem:[%s3380 + $0x20] sm:$0xf]
      %v3390 = vld [vmem:[%s3380 + $0x24] sm:$0xf]
      %v3391 = vld [vmem:[%s3380 + $0x28] sm:$0xf]
      %v3392 = vld [vmem:[%s3380 + $0x2c] sm:$0xf]
      %v3393 = vld [vmem:[%s3380 + $0x30] sm:$0xf]
      %v3394 = vld [vmem:[%s3380 + $0x34] sm:$0xf]
      %v3395 = vld [vmem:[%s3380 + $0x38] sm:$0xf]
      %v3396 = vld [vmem:[%s3380 + $0x3c] sm:$0xf]
      %v3397 = vld [vmem:[%s3380 + $0x40] sm:$0xf]
      %v3398 = vld [vmem:[%s3380 + $0x44] sm:$0xf]
      %v3399 = vld [vmem:[%s3380 + $0x48] sm:$0xf]
      %v3400 = vld [vmem:[%s3380 + $0x4c] sm:$0xf]
      %v3401 = vld [vmem:[%s3380 + $0x50] sm:$0xf]
      %v3402 = vld [vmem:[%s3380 + $0x54] sm:$0xf]
      %v3403 = vld [vmem:[%s3380 + $0x58] sm:$0xf]
      %v3404 = vld [vmem:[%s3380 + $0x5c] sm:$0xf]
      %v3405 = vld [vmem:[%s3380 + $0x60] sm:$0xf]
      %v3406 = vld [vmem:[%s3380 + $0x64] sm:$0xf]
      %v3407 = vld [vmem:[%s3380 + $0x68] sm:$0xf]
      %v3408 = vld [vmem:[%s3380 + $0x6c] sm:$0xf]
      %v3409 = vld [vmem:[%s3380 + $0x70] sm:$0xf]
      %v3410 = vld [vmem:[%s3380 + $0x74] sm:$0xf]
      %v3411 = vld [vmem:[%s3380 + $0x78] sm:$0xf]
      %v3412 = vld [vmem:[%s3380 + $0x7c] sm:$0xf]
      %v3413 = vld [vmem:[%s3380 + $0x80] sm:$0xf]
      %v3414 = vld [vmem:[%s3380 + $0x84] sm:$0xf]
      %v3415 = vld [vmem:[%s3380 + $0x88] sm:$0xf]
      %v3416 = vld [vmem:[%s3380 + $0x8c] sm:$0xf]
      %v3417 = vld [vmem:[%s3380 + $0x90] sm:$0xf]
      %v3418 = vld [vmem:[%s3380 + $0x94] sm:$0xf]
      %v3419 = vld [vmem:[%s3380 + $0x98] sm:$0xf]
      %v3420 = vld [vmem:[%s3380 + $0x9c] sm:$0xf]
      %v3421 = vld [vmem:[%s3380 + $0xa0] sm:$0xf]
      %v3422 = vld [vmem:[%s3380 + $0xa4] sm:$0xf]
      %v3423 = vld [vmem:[%s3380 + $0xa8] sm:$0xf]
      %v3424 = vld [vmem:[%s3380 + $0xac] sm:$0xf]
      %v3425 = vld [vmem:[%s3380 + $0xb0] sm:$0xf]
      %v3426 = vld [vmem:[%s3380 + $0xb4] sm:$0xf]
      %v3427 = vld [vmem:[%s3380 + $0xb8] sm:$0xf]
      %v3428 = vld [vmem:[%s3380 + $0xbc] sm:$0xf]
      %v3429 = vunpack.c.l.b16 %v3361
      %v3430 = vunpack.c.h.b16 %v3361
      %v3431 = vunpack.c.l.b16 %v3379
      %v3432 = vpack.c.b16 %v3429, %v2811
      %v3433 = vpack.c.b16 %v3430, %v2812
      %v3434 = vpack.c.b16 %v3431, %v2813
      %v3486 = vunpack.c.l.b16 %v3381
      %v3487 = vunpack.c.l.b16 %v3382
      %v3488 = vunpack.c.l.b16 %v3383
      %v3489 = vunpack.c.l.b16 %v3384
      %v3490 = vunpack.c.l.b16 %v3385
      %v3491 = vunpack.c.l.b16 %v3386
      %v3492 = vunpack.c.l.b16 %v3387
      %v3493 = vunpack.c.l.b16 %v3388
      %v3494 = vunpack.c.l.b16 %v3389
      %v3495 = vunpack.c.l.b16 %v3390
      %v3496 = vunpack.c.l.b16 %v3391
      %v3497 = vunpack.c.l.b16 %v3392
      %v3498 = vunpack.c.l.b16 %v3393
      %v3499 = vunpack.c.l.b16 %v3394
      %v3500 = vunpack.c.l.b16 %v3395
      %v3501 = vunpack.c.l.b16 %v3396
      %v3502 = vunpack.c.l.b16 %v3397
      %v3503 = vunpack.c.l.b16 %v3398
      %v3504 = vunpack.c.l.b16 %v3399
      %v3505 = vunpack.c.l.b16 %v3400
      %v3506 = vunpack.c.l.b16 %v3401
      %v3507 = vunpack.c.l.b16 %v3402
      %v3508 = vunpack.c.l.b16 %v3403
      %v3509 = vunpack.c.l.b16 %v3404
      %v3510 = vunpack.c.l.b16 %v3405
      %v3511 = vunpack.c.l.b16 %v3406
      %v3512 = vunpack.c.l.b16 %v3407
      %v3513 = vunpack.c.l.b16 %v3408
      %v3514 = vunpack.c.l.b16 %v3409
      %v3515 = vunpack.c.l.b16 %v3410
      %v3516 = vunpack.c.l.b16 %v3411
      %v3517 = vunpack.c.l.b16 %v3412
      %v3518 = vunpack.c.l.b16 %v3413
      %v3519 = vunpack.c.l.b16 %v3414
      %v3520 = vunpack.c.l.b16 %v3415
      %v3521 = vunpack.c.l.b16 %v3416
      %v3522 = vunpack.c.l.b16 %v3417
      %v3523 = vunpack.c.l.b16 %v3418
      %v3524 = vunpack.c.l.b16 %v3419
      %v3525 = vunpack.c.l.b16 %v3420
      %v3526 = vunpack.c.l.b16 %v3421
      %v3527 = vunpack.c.l.b16 %v3422
      %v3528 = vunpack.c.l.b16 %v3423
      %v3529 = vunpack.c.l.b16 %v3424
      %v3530 = vunpack.c.l.b16 %v3425
      %v3531 = vunpack.c.l.b16 %v3426
      %v3532 = vunpack.c.l.b16 %v3427
      %v3533 = vunpack.c.l.b16 %v3428
      %v3534 = vpack.c.b16 %v3487, %v3486
      %v3535 = vpack.c.b16 %v3489, %v3488
      %v3536 = vpack.c.b16 %v3491, %v3490
      %v3537 = vpack.c.b16 %v3493, %v3492
      %v3538 = vpack.c.b16 %v3495, %v3494
      %v3539 = vpack.c.b16 %v3497, %v3496
      %v3540 = vpack.c.b16 %v3499, %v3498
      %v3541 = vpack.c.b16 %v3501, %v3500
      %v3542 = vpack.c.b16 %v3503, %v3502
      %v3543 = vpack.c.b16 %v3505, %v3504
      %v3544 = vpack.c.b16 %v3507, %v3506
      %v3545 = vpack.c.b16 %v3509, %v3508
      %v3546 = vpack.c.b16 %v3511, %v3510
      %v3547 = vpack.c.b16 %v3513, %v3512
      %v3548 = vpack.c.b16 %v3515, %v3514
      %v3549 = vpack.c.b16 %v3517, %v3516
      %v3550 = vpack.c.b16 %v3519, %v3518
      %v3551 = vpack.c.b16 %v3521, %v3520
      %v3552 = vpack.c.b16 %v3523, %v3522
      %v3553 = vpack.c.b16 %v3525, %v3524
      %v3554 = vpack.c.b16 %v3527, %v3526
      %v3555 = vpack.c.b16 %v3529, %v3528
      %v3556 = vpack.c.b16 %v3531, %v3530
      %v3557 = vpack.c.b16 %v3533, %v3532
      %3582 = vmatprep.subr.bf16.mxu0 0
      %3583 = vmatpush1.bf16.msra.mxu0 %v3541
      %3584 = vmatprep.subr.bf16.mxu0 0
      %3585 = vmatpush1.bf16.msra.mxu0 %v3540
      %3586 = vmatprep.subr.bf16.mxu0 0
      %3587 = vmatpush1.bf16.msra.mxu0 %v3539
      %3588 = vmatprep.subr.bf16.mxu0 0
      %3589 = vmatpush1.bf16.msra.mxu0 %v3538
      %3590 = vmatprep.subr.bf16.mxu0 0
      %3591 = vmatpush1.bf16.msra.mxu0 %v3537
      %3592 = vmatprep.subr.bf16.mxu0 0
      %3593 = vmatpush1.bf16.msra.mxu0 %v3536
      %3594 = vmatprep.subr.bf16.mxu0 0
      %3595 = vmatpush1.bf16.msra.mxu0 %v3535
      %3596 = vmatprep.subr.bf16.mxu0 0
      %3597 = vmatpush1.bf16.msra.mxu0 %v3534
      %3598 = vmatprep.subr.bf16.mxu0 0
      %3599 = vmatpush2.bf16.msra.mxu0 %v3549
      %3600 = vmatprep.subr.bf16.mxu0 0
      %3601 = vmatpush2.bf16.msra.mxu0 %v3548
      %3602 = vmatprep.subr.bf16.mxu0 0
      %3603 = vmatpush2.bf16.msra.mxu0 %v3547
      %3604 = vmatprep.subr.bf16.mxu0 0
      %3605 = vmatpush2.bf16.msra.mxu0 %v3546
      %3606 = vmatprep.subr.bf16.mxu0 0
      %3607 = vmatpush2.bf16.msra.mxu0 %v3545
      %3608 = vmatprep.subr.bf16.mxu0 0
      %3609 = vmatpush2.bf16.msra.mxu0 %v3544
      %3610 = vmatprep.subr.bf16.mxu0 0
      %3611 = vmatpush2.bf16.msra.mxu0 %v3543
      %3612 = vmatprep.subr.bf16.mxu0 0
      %3613 = vmatpush2.bf16.msra.mxu0 %v3542
      %3614 = vmatprep.mubr.bf16.mxu0 %v3075
      %3615 = vmatmul.mubr.bf16.gmra.mxu0 %v3074
      %v3616 = vpop.f32.mrf.mxu0
      %v3617 = vadd.f32 0.0, %v3616
      %v3618 = vpop.f32.mrf.mxu0
      %v3619 = vpop.f32.mrf.mxu0
      %v3620 = vadd.f32 0.0, %v3619
      %v3621 = vpop.f32.mrf.mxu0
      %3622 = vmatprep.mubr.bf16.mxu0 %v3433
      %3623 = vmatmul.mubr.bf16.gmra.mxu0 %v3432
      %v3624 = vpop.f32.mrf.mxu0
      %v3625 = vadd.f32 0.0, %v3624
      %v3626 = vpop.f32.mrf.mxu0
      %v3627 = vpop.f32.mrf.mxu0
      %v3628 = vadd.f32 0.0, %v3627
      %v3629 = vpop.f32.mrf.mxu0
      %3630 = vdwg.mxu0
      %3631 = vmatprep.subr.bf16.mxu0 0
      %3632 = vmatpush1.bf16.msra.mxu0 %v3557
      %3633 = vmatprep.subr.bf16.mxu0 0
      %3634 = vmatpush1.bf16.msra.mxu0 %v3556
      %3635 = vmatprep.subr.bf16.mxu0 0
      %3636 = vmatpush1.bf16.msra.mxu0 %v3555
      %3637 = vmatprep.subr.bf16.mxu0 0
      %3638 = vmatpush1.bf16.msra.mxu0 %v3554
      %3639 = vmatprep.subr.bf16.mxu0 0
      %3640 = vmatpush1.bf16.msra.mxu0 %v3553
      %3641 = vmatprep.subr.bf16.mxu0 0
      %3642 = vmatpush1.bf16.msra.mxu0 %v3552
      %3643 = vmatprep.subr.bf16.mxu0 0
      %3644 = vmatpush1.bf16.msra.mxu0 %v3551
      %3645 = vmatprep.subr.bf16.mxu0 0
      %3646 = vmatpush1.bf16.msra.mxu0 %v3550
      %3647 = vmatprep.subr.bf16.mxu0 0
      %3648 = vmatpush2.bf16.msra.mxu0 0
      %3649 = vmatprep.subr.bf16.mxu0 0
      %3650 = vmatpush2.bf16.msra.mxu0 0
      %3651 = vmatprep.subr.bf16.mxu0 0
      %3652 = vmatpush2.bf16.msra.mxu0 0
      %3653 = vmatprep.subr.bf16.mxu0 0
      %3654 = vmatpush2.bf16.msra.mxu0 0
      %3655 = vmatprep.subr.bf16.mxu0 0
      %3656 = vmatpush2.bf16.msra.mxu0 0
      %3657 = vmatprep.subr.bf16.mxu0 0
      %3658 = vmatpush2.bf16.msra.mxu0 0
      %3659 = vmatprep.subr.bf16.mxu0 0
      %3660 = vmatpush2.bf16.msra.mxu0 0
      %3661 = vmatprep.subr.bf16.mxu0 0
      %3662 = vmatpush2.bf16.msra.mxu0 0
      %3663 = vmatprep.mubr.bf16.mxu0 0
      %3664 = vmatmul.mubr.bf16.gmra.mxu0 %v3076
      %v3665 = vpop.f32.mrf.mxu0
      %v3666 = vadd.f32 %v3617, %v3665
      %v3667 = vpop.f32.mrf.mxu0
      %v3668 = vpop.f32.mrf.mxu0
      %v3669 = vadd.f32 %v3620, %v3668
      %v3670 = vpop.f32.mrf.mxu0
      %3671 = vmatprep.mubr.bf16.mxu0 0
      %3672 = vmatmul.mubr.bf16.gmra.mxu0 %v3434
      %v3673 = vpop.f32.mrf.mxu0
      %v3674 = vadd.f32 %v3625, %v3673
      %v3675 = vpop.f32.mrf.mxu0
      %v3676 = vpop.f32.mrf.mxu0
      %v3677 = vadd.f32 %v3628, %v3676
      %v3678 = vpop.f32.mrf.mxu0
      %3679 = vdwg.mxu0
      %v3680 = vadd.f32 %v3311, %v3666
      %v3681 = vadd.f32 %v3314, %v3669
      %v3682 = vadd.f32 %v3319, %v3674
      %v3683 = vadd.f32 %v3322, %v3677
      %v3684 = vld [vmem:[%s6] sm:$0x1]
      %v3686 = vlaneseq
      %v3687 = vshrl.u32 %v3686, 7
      %v3688 = vsub.s32 0, %v3687
      %v3689 = vrot.slane %v3684, %v3688
      %v3691 = vmul.f32 %v3680, %v3689
      %v3692 = vmul.f32 %v3681, %v3689
      %v3693 = vmul.f32 %v3682, %v3689
      %v3694 = vmul.f32 %v3683, %v3689
      %v3695 = vld [vmem:[%s7] sm:$0x1]
      %v3697 = vlaneseq
      %v3698 = vshrl.u32 %v3697, 7
      %v3699 = vsub.s32 0, %v3698
      %v3700 = vrot.slane %v3695, %v3699
      %v3702 = vadd.f32 %v3691, %v3700
      %v3703 = vadd.f32 %v3692, %v3700
      %v3704 = vadd.f32 %v3693, %v3700
      %v3705 = vadd.f32 %v3694, %v3700
      %vm3706 = vsmask.f32 1280
      %vm3707 = vsmask.f32 5392
      %vm3708 = vmor %vm3706, %vm3707
      %v3709 = vrot.slane %v824, 6
      %v3710 = vrot.slane %v827, 7
      %v3711 = vor.u32 %v3709, %v3710
      %v3712 = vrot.slane %v3711, 4
      %v3713 = vrot.slane %v837, 6
      %v3714 = vrot.slane %v833, 7
      %v3715 = vor.u32 %v3713, %v3714
      %v3716 = vsel %vm3708, %v3712, %v3715
      %v3717 = vrot.slane %v848, 6
      %v3718 = vrot.slane %v851, 7
      %v3719 = vor.u32 %v3717, %v3718
      %v3720 = vrot.slane %v3719, 4
      %v3721 = vrot.slane %v861, 6
      %v3722 = vrot.slane %v857, 7
      %v3723 = vor.u32 %v3721, %v3722
      %v3724 = vsel %vm3708, %v3720, %v3723
      %v3725 = vrot.slane %v872, 6
      %v3726 = vrot.slane %v875, 7
      %v3727 = vor.u32 %v3725, %v3726
      %v3728 = vrot.slane %v3727, 4
      %v3729 = vrot.slane %v885, 6
      %v3730 = vrot.slane %v881, 7
      %v3731 = vor.u32 %v3729, %v3730
      %v3732 = vsel %vm3708, %v3728, %v3731
      %v3733 = vrot.slane %v896, 6
      %v3734 = vrot.slane %v899, 7
      %v3735 = vor.u32 %v3733, %v3734
      %v3736 = vrot.slane %v3735, 4
      %v3737 = vrot.slane %v909, 6
      %v3738 = vrot.slane %v905, 7
      %v3739 = vor.u32 %v3737, %v3738
      %v3740 = vsel %vm3708, %v3736, %v3739
      %v3741 = vld [vmem:[%s8] sm:$0xf]
      %v3742 = vld [vmem:[%s8 + $0x4] sm:$0xf]
      %v3743 = vld [vmem:[%s8 + $0x8] sm:$0xf]
      %v3744 = vld [vmem:[%s8 + $0xc] sm:$0xf]
      %v3745 = vld [vmem:[%s8 + $0x10] sm:$0xf]
      %v3746 = vld [vmem:[%s8 + $0x14] sm:$0xf]
      %v3747 = vld [vmem:[%s8 + $0x18] sm:$0xf]
      %v3748 = vld [vmem:[%s8 + $0x1c] sm:$0xf]
      %v3749 = vunpack.c.l.b16 %v3716
      %v3750 = vunpack.c.l.b16 %v3724
      %v3751 = vunpack.c.l.b16 %v3732
      %v3752 = vunpack.c.l.b16 %v3740
      %v3753 = vpack.c.b16 %v3750, %v3749
      %v3754 = vpack.c.b16 %v3752, %v3751
      %v3763 = vunpack.c.l.b16 %v3741
      %v3764 = vunpack.c.l.b16 %v3742
      %v3765 = vunpack.c.l.b16 %v3743
      %v3766 = vunpack.c.l.b16 %v3744
      %v3767 = vunpack.c.l.b16 %v3745
      %v3768 = vunpack.c.l.b16 %v3746
      %v3769 = vunpack.c.l.b16 %v3747
      %v3770 = vunpack.c.l.b16 %v3748
      %v3771 = vpack.c.b16 %v3764, %v3763
      %v3772 = vpack.c.b16 %v3766, %v3765
      %v3773 = vpack.c.b16 %v3768, %v3767
      %v3774 = vpack.c.b16 %v3770, %v3769
      %v3780 = vsel %vm969, %v3753, 0
      %v3783 = vsel %vm969, %v3754, 0
      %3785 = vmatprep.subr.bf16.mxu0 0
      %3786 = vmatpush1.bf16.msra.mxu0 0
      %3787 = vmatprep.subr.bf16.mxu0 0
      %3788 = vmatpush1.bf16.msra.mxu0 0
      %3789 = vmatprep.subr.bf16.mxu0 0
      %3790 = vmatpush1.bf16.msra.mxu0 0
      %3791 = vmatprep.subr.bf16.mxu0 0
      %3792 = vmatpush1.bf16.msra.mxu0 0
      %3793 = vmatprep.subr.bf16.mxu0 0
      %3794 = vmatpush1.bf16.msra.mxu0 %v3774
      %3795 = vmatprep.subr.bf16.mxu0 0
      %3796 = vmatpush1.bf16.msra.mxu0 %v3773
      %3797 = vmatprep.subr.bf16.mxu0 0
      %3798 = vmatpush1.bf16.msra.mxu0 %v3772
      %3799 = vmatprep.subr.bf16.mxu0 0
      %3800 = vmatpush1.bf16.msra.mxu0 %v3771
      %3801 = vmatprep.subr.bf16.mxu0 0
      %3802 = vmatpush2.bf16.msra.mxu0 0
      %3803 = vmatprep.subr.bf16.mxu0 0
      %3804 = vmatpush2.bf16.msra.mxu0 0
      %3805 = vmatprep.subr.bf16.mxu0 0
      %3806 = vmatpush2.bf16.msra.mxu0 0
      %3807 = vmatprep.subr.bf16.mxu0 0
      %3808 = vmatpush2.bf16.msra.mxu0 0
      %3809 = vmatprep.subr.bf16.mxu0 0
      %3810 = vmatpush2.bf16.msra.mxu0 0
      %3811 = vmatprep.subr.bf16.mxu0 0
      %3812 = vmatpush2.bf16.msra.mxu0 0
      %3813 = vmatprep.subr.bf16.mxu0 0
      %3814 = vmatpush2.bf16.msra.mxu0 0
      %3815 = vmatprep.subr.bf16.mxu0 0
      %3816 = vmatpush2.bf16.msra.mxu0 0
      %3817 = vmatprep.mubr.bf16.mxu0 0
      %3818 = vmatmul.mubr.bf16.gmra.mxu0 %v3780
      %v3819 = vpop.f32.mrf.mxu0
      %v3820 = vadd.f32 0.0, %v3819
      %v3821 = vpop.f32.mrf.mxu0
      %v3822 = vpop.f32.mrf.mxu0
      %v3823 = vadd.f32 0.0, %v3822
      %v3824 = vpop.f32.mrf.mxu0
      %3825 = vmatprep.mubr.bf16.mxu0 0
      %3826 = vmatmul.mubr.bf16.gmra.mxu0 %v3783
      %v3827 = vpop.f32.mrf.mxu0
      %v3828 = vadd.f32 0.0, %v3827
      %v3829 = vpop.f32.mrf.mxu0
      %v3830 = vpop.f32.mrf.mxu0
      %v3831 = vadd.f32 0.0, %v3830
      %v3832 = vpop.f32.mrf.mxu0
      %3833 = vdwg.mxu0
      %v3834 = vadd.f32 %v3702, %v3820
      %v3835 = vadd.f32 %v3703, %v3823
      %v3836 = vadd.f32 %v3704, %v3828
      %v3837 = vadd.f32 %v3705, %v3831
      %v3838 = vld [vmem:[%s9] sm:$0x1]
      %v3840 = vlaneseq
      %v3841 = vshrl.u32 %v3840, 7
      %v3842 = vsub.s32 0, %v3841
      %v3843 = vrot.slane %v3838, %v3842
      %v3845 = vadd.f32 %v3834, %v3843
      %v3846 = vadd.f32 %v3835, %v3843
      %v3847 = vadd.f32 %v3836, %v3843
      %v3848 = vadd.f32 %v3837, %v3843
      %v3849 = vmax.f32 %v3845, 0.0
      %v3850 = vmax.f32 %v3846, 0.0
      %v3851 = vmax.f32 %v3847, 0.0
      %v3852 = vmax.f32 %v3848, 0.0
      %3853 = vst [vmem:[%s463] sm:$0xff] %v3849
      %3854 = vst [vmem:[%s463 + $0x8] sm:$0xff] %v3850
      %3855 = vst [vmem:[%s463 + $0x10] sm:$0xff] %v3851
      %3856 = vst [vmem:[%s463 + $0x18] sm:$0xff] %v3852
      %p3857 = scmp.lt.s32.totalorder %s21, 3
      %s3858 = scalar_select %p3857, %s21, 3
      %s3859 = smul.addr %s3858, 4
      %s3860 = smul.addr %s3859, 8
      %s3861 = scalar_lea.vmem %s10, %s3860
      // Predicated region
      $region61: #{down_res_forward.1} parent=59 // pred_check
        %p3862 = pneg %p283
      $region62: #{down_res_forward.1} parent=59 // pred_check_branch
        %3864 = sbr.rel (%p3862) target = $region64
      $region63: #{down_res_forward.1} parent=59 // pred_region
        _
      $region64: #{down_res_forward.1} parent=59 // pred_fallthru
        _
    $region60: #{down_res_forward.1} parent=5 // pred_fallthru
      _
    %p3865 = scmp.le.s32.totalorder 2, %s16
    // Predicated region
    $region65: #{down_res_forward.1} parent=5 // pred_check
      %p3866 = pneg %p3865
    $region66: #{down_res_forward.1} parent=5 // pred_check_branch
      %3868 = sbr.rel (%p3866) target = $region68
    $region67: #{down_res_forward.1} parent=5 // pred_region
      %s3869 = ssub.s32 %s16, 2
      // Predicated region
      $region69: #{down_res_forward.1} parent=67 // pred_check
        %p3870 = pneg %p289
      $region70: #{down_res_forward.1} parent=67 // pred_check_branch
        %3872 = sbr.rel (%p3870) target = $region72
      $region71: #{down_res_forward.1} parent=67 // pred_region
        %p3873 = scmp.lt.s32.totalorder %s22, 3
        %s3874 = scalar_select %p3873, %s22, 3
        %s3875 = smul.addr %s3874, 4
        %s3876 = smul.addr %s3875, 8
        %s3877 = scalar_lea.vmem %s10, %s3876
      $region72: #{down_res_forward.1} parent=67 // pred_fallthru
        _
    $region68: #{down_res_forward.1} parent=5 // pred_fallthru
      _
  $region6: #{down_res_forward.1} parent=0 // loop_footer
    %s20 = sadd.s32 1, %s16
  $region7: #{down_res_forward.1} parent=0 // loop_footer_branch
    %15 = sbr.rel target = $region3
  $region8: #{down_res_forward.1} parent=0 // loop_exit
    _

</llo_original>
